<compile_context>
chip_gen: v6e
topology: v6e:2x2x1
jax: 0.10.0
libtpu: 0.0.40
codegen_flags: <defaults>
</compile_context>

<pallas_src>
import functools

import jax
import jax.numpy as jnp
from jax.experimental import pallas as pl
from jax.experimental.pallas import tpu as pltpu


def _layernorm(x, gamma, beta, eps):
    mu = jnp.mean(x, axis=-1, keepdims=True)
    var = jnp.mean((x - mu) ** 2, axis=-1, keepdims=True)
    return (x - mu) * jax.lax.rsqrt(var + eps) * gamma + beta


def cma_kernel(Bt, T, S, num_heads, head_dim, eps,
               q_ref, k_ref, v_ref, maskb_ref,
               wq_ref, bq_ref, wk_ref, bk_ref, wv_ref, bv_ref,
               wo_ref, bo_ref,
               g1_ref, be1_ref,
               w1_ref, b1_ref, w2_ref, b2_ref,
               g2_ref, be2_ref,
               out_ref):
    D = num_heads * head_dim
    bf16 = jnp.bfloat16
    f32 = jnp.float32

    # 2-D packed slabs straight from the BlockSpec -- no in-kernel reshape.
    q_in = q_ref[...]          # (Bt*T, D) f32 (kept f32 for the residual path)
    k_in = k_ref[...]          # (Bt*S, D)
    v_in = v_ref[...]          # (Bt*S, D)

    # --- In-projections: bf16 MXU operands, f32 accumulation.  wq/bq already
    # carry the 1/sqrt(head_dim) scale (folded in prepare_params). ---
    Q = jnp.dot(q_in.astype(bf16), wq_ref[...],
                preferred_element_type=f32) + bq_ref[...]
    K = jnp.dot(k_in.astype(bf16), wk_ref[...],
                preferred_element_type=f32) + bk_ref[...]
    V = jnp.dot(v_in.astype(bf16), wv_ref[...],
                preferred_element_type=f32) + bv_ref[...]
    Qb, Kb, Vb = Q.astype(bf16), K.astype(bf16), V.astype(bf16)

    # --- Attention: per batch element (mask differs per batch).  Head outputs
    # are concatenated back to (T, D) so W_o runs as a SINGLE full-depth
    # matmul over all Bt*T packed rows below.
    # NOTE: static Python loops are fine at demo Bt*num_heads; for large
    # Bt*num_heads convert to lax.fori_loop writing into a VMEM head-output
    # buffer to bound vreg live ranges. ---
    per_bt = []
    for bt in range(Bt):
        mask_bias = maskb_ref[bt]            # (1, S): 0 keep, -1e9 padded
        r0, r1 = bt * T, (bt + 1) * T
        s0, s1 = bt * S, (bt + 1) * S
        heads = []
        for h in range(num_heads):
            c0, c1 = h * head_dim, (h + 1) * head_dim
            Qh = Qb[r0:r1, c0:c1]
            Kh = Kb[s0:s1, c0:c1]
            Vh = Vb[s0:s1, c0:c1]
            # (T, S) scores: contract head_dim, no explicit transpose; f32 acc.
            scores = jax.lax.dot_general(
                Qh, Kh, (((1,), (1,)), ((), ())),
                preferred_element_type=f32) + mask_bias
            m = jnp.max(scores, axis=-1, keepdims=True)
            p = jnp.exp(scores - m)                                    # f32
            inv = pl.reciprocal(jnp.sum(p, axis=-1, keepdims=True),
                                approx=True)                           # EUP slot
            p = p * inv
            heads.append(jnp.dot(p.astype(bf16), Vh,
                                 preferred_element_type=f32))          # (T, Dh)
        per_bt.append(jnp.concatenate(heads, axis=-1))                 # (T, D)
    head_out = per_bt[0] if Bt == 1 else jnp.concatenate(per_bt, axis=0)

    # --- Single full-depth output projection + residual (dropout1=identity) ---
    attn = jnp.dot(head_out.astype(bf16), wo_ref[...],
                   preferred_element_type=f32) + bo_ref[...] + q_in    # (Bt*T, D)

    # --- norm1 (f32) ---
    src = _layernorm(attn, g1_ref[...], be1_ref[...], eps)

    # --- feed-forward over the packed rows (dropout = identity) ---
    h1 = jnp.dot(src.astype(bf16), w1_ref[...],
                 preferred_element_type=f32) + b1_ref[...]
    h1 = jnp.maximum(h1, 0.0)                                          # ReLU, f32
    src2 = jnp.dot(h1.astype(bf16), w2_ref[...],
                   preferred_element_type=f32) + b2_ref[...]

    # --- residual + norm2 (dropout2 = identity); lane-dense unmasked store ---
    out_ref[...] = _layernorm(src + src2, g2_ref[...], be2_ref[...], eps)


def prepare_params(params, num_heads):
    """One-time parameter prep (do NOT call per forward):
       * matmul weights cast to bf16 (halves their DMA/VMEM footprint),
       * 1/sqrt(head_dim) folded into wq/bq so no per-head score scaling."""
    d_model = params["wq"].shape[0]
    scale = 1.0 / ((d_model // num_heads) ** 0.5)
    prepped = dict(params)
    prepped["wq"] = (params["wq"] * scale).astype(jnp.bfloat16)
    prepped["bq"] = (params["bq"] * scale).astype(jnp.float32)
    for name in ("wk", "wv", "wo", "w1", "w2"):
        prepped[name] = params[name].astype(jnp.bfloat16)
    return prepped


def _choose_block_b(B, T, S, target_rows=256):
    """Largest useful batch-pack factor: aim for >=target_rows packed rows for
    the projection/FFN matmuls, keep >=2 grid steps when possible (v7x dual
    TC + pipelining), and keep the 2-D slabs sublane (8) aligned."""
    divisors = [d for d in range(1, B + 1) if B % d == 0]
    cands = [d for d in divisors if B // d >= 2] or divisors
    cands = [d for d in cands
             if d == B or ((d * T) % 8 == 0 and (d * S) % 8 == 0)] or [B]
    reaching = [d for d in cands if d * T >= target_rows]
    return min(reaching) if reaching else max(cands)


def _vmem_limit_bytes(Bt, T, S, D, F):
    f32, bf16 = 4, 2
    io_blocks = 2 * (Bt * T * D + 2 * Bt * S * D + Bt * S + Bt * T * D) * f32
    weights = (4 * D * D + 2 * D * F) * bf16 + (9 * D + F) * f32
    live = (Bt * T + 2 * Bt * S) * D * (3 * f32 + bf16) \
        + Bt * T * (S + F) * f32 + 3 * Bt * T * D * f32
    est = io_blocks + weights + live + (4 << 20)       # +4 MiB headroom
    return int(min(max(est, 32 << 20), 96 << 20))


def cross_modality_attention(t_query, s_key, s_value, s_padding_mask, params,
                             num_heads, eps=1e-5, block_b=None):
    """params must come from prepare_params() (bf16 weights, scale folded)."""
    B, T, D = t_query.shape
    _, S, _ = s_key.shape
    F = params["w1"].shape[1]
    head_dim = D // num_heads

    Bt = _choose_block_b(B, T, S) if block_b is None else block_b
    assert B % Bt == 0, "block_b must divide batch size"
    assert Bt == B or ((Bt * T) % 8 == 0 and (Bt * S) % 8 == 0), \
        "packed row blocks must be sublane (8) aligned (or Bt == B)"

    # 2-D activation slabs: blocks map directly onto (8,128) tiles, the kernel
    # does no reshapes, and the output store is lane dense.
    q2 = t_query.reshape(B * T, D)
    k2 = s_key.reshape(B * S, D)
    v2 = s_value.reshape(B * S, D)

    # additive mask bias: True (padded) -> -1e9
    mask_bias = jnp.where(s_padding_mask, -1e9, 0.0).astype(jnp.float32)
    mask_bias = mask_bias.reshape(B, 1, S)

    kern = functools.partial(cma_kernel, Bt, T, S, num_heads, head_dim, eps)

    def row_spec(rows_per_b):
        return pl.BlockSpec((Bt * rows_per_b, D), lambda b: (b, 0))

    def weight_spec(shape):
        # Constant index_map -> resident weight; single buffer saves VMEM.
        n = len(shape)
        return pl.BlockSpec(shape, lambda b: (0,) * n,
                            pipeline_mode=pl.Buffered(1))

    in_specs = [
        row_spec(T),                                      # t_query slab
        row_spec(S),                                      # s_key slab
        row_spec(S),                                      # s_value slab
        pl.BlockSpec((Bt, 1, S), lambda b: (b, 0, 0)),    # mask bias
        weight_spec((D, D)), weight_spec((1, D)),         # wq, bq (pre-scaled)
        weight_spec((D, D)), weight_spec((1, D)),         # wk, bk
        weight_spec((D, D)), weight_spec((1, D)),         # wv, bv
        weight_spec((D, D)), weight_spec((1, D)),         # wo, bo
        weight_spec((1, D)), weight_spec((1, D)),         # ln1 gamma, beta
        weight_spec((D, F)), weight_spec((1, F)),         # w1, b1
        weight_spec((F, D)), weight_spec((1, D)),         # w2, b2
        weight_spec((1, D)), weight_spec((1, D)),         # ln2 gamma, beta
    ]

    out2 = pl.pallas_call(
        kern,
        out_shape=jax.ShapeDtypeStruct((B * T, D), jnp.float32),
        grid=(B // Bt,),
        in_specs=in_specs,
        out_specs=pl.BlockSpec((Bt * T, D), lambda b: (b, 0)),
        compiler_params=pltpu.CompilerParams(
            dimension_semantics=("parallel",),
            vmem_limit_bytes=_vmem_limit_bytes(Bt, T, S, D, F)),
    )(
        q2, k2, v2, mask_bias,
        params["wq"], params["bq"], params["wk"], params["bk"],
        params["wv"], params["bv"], params["wo"], params["bo"],
        params["g1"], params["be1"],
        params["w1"], params["b1"], params["w2"], params["b2"],
        params["g2"], params["be2"],
    )
    return out2.reshape(B, T, D)


def reference(t_query, s_key, s_value, s_padding_mask, params, num_heads, eps=1e-5):
    """Pure-JAX f32 reference matching the PyTorch forward (eval mode)."""
    B, T, D = t_query.shape
    S = s_key.shape[1]
    Dh = D // num_heads
    Q = t_query @ params["wq"] + params["bq"]
    K = s_key @ params["wk"] + params["bk"]
    V = s_value @ params["wv"] + params["bv"]
    Q = Q.reshape(B, T, num_heads, Dh).transpose(0, 2, 1, 3)
    K = K.reshape(B, S, num_heads, Dh).transpose(0, 2, 1, 3)
    V = V.reshape(B, S, num_heads, Dh).transpose(0, 2, 1, 3)
    scores = jnp.einsum("bhtd,bhsd->bhts", Q, K) / jnp.sqrt(Dh)
    bias = jnp.where(s_padding_mask, -1e9, 0.0)[:, None, None, :]
    p = jax.nn.softmax(scores + bias, axis=-1)
    attn = jnp.einsum("bhts,bhsd->bhtd", p, V).transpose(0, 2, 1, 3).reshape(B, T, D)
    attn = attn @ params["wo"] + params["bo"]

    def ln(x, g, b):
        mu = x.mean(-1, keepdims=True)
        var = ((x - mu) ** 2).mean(-1, keepdims=True)
        return (x - mu) / jnp.sqrt(var + eps) * g + b

    src = ln(t_query + attn, params["g1"], params["be1"])
    src2 = jnp.maximum(src @ params["w1"] + params["b1"], 0.0) @ params["w2"] + params["b2"]
    return ln(src + src2, params["g2"], params["be2"])


def init_params(key, d_model, num_heads, dim_feedforward):
    ks = jax.random.split(key, 8)
    s = 0.02
    return {
        "wq": jax.random.normal(ks[0], (d_model, d_model), jnp.float32) * s,
        "wk": jax.random.normal(ks[1], (d_model, d_model), jnp.float32) * s,
        "wv": jax.random.normal(ks[2], (d_model, d_model), jnp.float32) * s,
        "wo": jax.random.normal(ks[3], (d_model, d_model), jnp.float32) * s,
        "bq": jax.random.normal(ks[4], (1, d_model), jnp.float32) * s,
        "bk": jnp.zeros((1, d_model), jnp.float32),
        "bv": jnp.zeros((1, d_model), jnp.float32),
        "bo": jnp.zeros((1, d_model), jnp.float32),
        "w1": jax.random.normal(ks[5], (d_model, dim_feedforward), jnp.float32) * s,
        "b1": jax.random.normal(ks[6], (1, dim_feedforward), jnp.float32) * s,
        "w2": jax.random.normal(ks[7], (dim_feedforward, d_model), jnp.float32) * s,
        "b2": jnp.zeros((1, d_model), jnp.float32),
        "g1": jnp.ones((1, d_model), jnp.float32),
        "be1": jnp.zeros((1, d_model), jnp.float32),
        "g2": jnp.ones((1, d_model), jnp.float32),
        "be2": jnp.zeros((1, d_model), jnp.float32),
    }


if __name__ == "__main__":
    # Lane/sublane-friendly small demo: D is a full 128-lane tile, T/S
    # multiples of 8; B=4 so the chooser packs Bt=2 and keeps a grid of 2
    # (exercises batch packing, single-buffered weights and megacore sharding).
    B, T, S, D = 4, 16, 32, 128
    NUM_HEADS = 4
    DIM_FF = 256

    key = jax.random.PRNGKey(0)
    k_q, k_k, k_v, k_p = jax.random.split(key, 4)

    t_query = jax.random.normal(k_q, (B, T, D), jnp.float32)
    s_key = jax.random.normal(k_k, (B, S, D), jnp.float32)
    s_value = jax.random.normal(k_v, (B, S, D), jnp.float32)
    # pad the last 8 key positions of batch 1 and the last 4 of batch 3
    s_padding_mask = (jnp.zeros((B, S), dtype=bool)
                      .at[1, S - 8:].set(True)
                      .at[3, S - 4:].set(True))

    params = init_params(k_p, D, NUM_HEADS, DIM_FF)
    prepped = prepare_params(params, NUM_HEADS)   # one-time: bf16 + scale fold

    out = cross_modality_attention(t_query, s_key, s_value, s_padding_mask,
                                   prepped, NUM_HEADS)
    out = jax.block_until_ready(out)

    ref = reference(t_query, s_key, s_value, s_padding_mask, params, NUM_HEADS)
    assert out.shape == (B, T, D)
    # bf16 MXU operands (f32 accumulation) + approx reciprocal -> looser
    # tolerance vs the f32 reference.
    assert jnp.allclose(out, ref, atol=3e-2, rtol=3e-2), "mismatch vs JAX reference"

    print("KERNEL_OK")
</pallas_src>

<mosaic_0001>
module attributes {stable_mosaic.version = 11 : i64} {
  func.func @cma_kernel(%arg0: i32, %arg1: memref<32x128xf32, #tpu.memory_space<vmem>>, %arg2: memref<64x128xf32, #tpu.memory_space<vmem>>, %arg3: memref<64x128xf32, #tpu.memory_space<vmem>>, %arg4: memref<2x1x32xf32, #tpu.memory_space<vmem>>, %arg5: memref<128x128xbf16, #tpu.memory_space<vmem>>, %arg6: memref<1x128xf32, #tpu.memory_space<vmem>>, %arg7: memref<128x128xbf16, #tpu.memory_space<vmem>>, %arg8: memref<1x128xf32, #tpu.memory_space<vmem>>, %arg9: memref<128x128xbf16, #tpu.memory_space<vmem>>, %arg10: memref<1x128xf32, #tpu.memory_space<vmem>>, %arg11: memref<128x128xbf16, #tpu.memory_space<vmem>>, %arg12: memref<1x128xf32, #tpu.memory_space<vmem>>, %arg13: memref<1x128xf32, #tpu.memory_space<vmem>>, %arg14: memref<1x128xf32, #tpu.memory_space<vmem>>, %arg15: memref<128x256xbf16, #tpu.memory_space<vmem>>, %arg16: memref<1x256xf32, #tpu.memory_space<vmem>>, %arg17: memref<256x128xbf16, #tpu.memory_space<vmem>>, %arg18: memref<1x128xf32, #tpu.memory_space<vmem>>, %arg19: memref<1x128xf32, #tpu.memory_space<vmem>>, %arg20: memref<1x128xf32, #tpu.memory_space<vmem>>, %arg21: memref<32x128xf32, #tpu.memory_space<vmem>>) attributes {dimension_semantics = [#tpu.dimension_semantics<parallel>], iteration_bounds = array<i64: 2>, scalar_prefetch = 0 : i64, scratch_operands = 0 : i64, tpu.core_type = #tpu.core_type<tc>, window_params = [{transform_indices = @transform_0, window_bounds = array<i64: 32, 128>}, {transform_indices = @transform_1, window_bounds = array<i64: 64, 128>}, {transform_indices = @transform_2, window_bounds = array<i64: 64, 128>}, {transform_indices = @transform_3, window_bounds = array<i64: 2, 1, 32>}, {pipeline_mode = #tpu.pipeline_mode<synchronous>, transform_indices = @transform_4, window_bounds = array<i64: 128, 128>}, {pipeline_mode = #tpu.pipeline_mode<synchronous>, transform_indices = @transform_5, window_bounds = array<i64: 1, 128>}, {pipeline_mode = #tpu.pipeline_mode<synchronous>, transform_indices = @transform_6, window_bounds = array<i64: 128, 128>}, {pipeline_mode = #tpu.pipeline_mode<synchronous>, transform_indices = @transform_7, window_bounds = array<i64: 1, 128>}, {pipeline_mode = #tpu.pipeline_mode<synchronous>, transform_indices = @transform_8, window_bounds = array<i64: 128, 128>}, {pipeline_mode = #tpu.pipeline_mode<synchronous>, transform_indices = @transform_9, window_bounds = array<i64: 1, 128>}, {pipeline_mode = #tpu.pipeline_mode<synchronous>, transform_indices = @transform_10, window_bounds = array<i64: 128, 128>}, {pipeline_mode = #tpu.pipeline_mode<synchronous>, transform_indices = @transform_11, window_bounds = array<i64: 1, 128>}, {pipeline_mode = #tpu.pipeline_mode<synchronous>, transform_indices = @transform_12, window_bounds = array<i64: 1, 128>}, {pipeline_mode = #tpu.pipeline_mode<synchronous>, transform_indices = @transform_13, window_bounds = array<i64: 1, 128>}, {pipeline_mode = #tpu.pipeline_mode<synchronous>, transform_indices = @transform_14, window_bounds = array<i64: 128, 256>}, {pipeline_mode = #tpu.pipeline_mode<synchronous>, transform_indices = @transform_15, window_bounds = array<i64: 1, 256>}, {pipeline_mode = #tpu.pipeline_mode<synchronous>, transform_indices = @transform_16, window_bounds = array<i64: 256, 128>}, {pipeline_mode = #tpu.pipeline_mode<synchronous>, transform_indices = @transform_17, window_bounds = array<i64: 1, 128>}, {pipeline_mode = #tpu.pipeline_mode<synchronous>, transform_indices = @transform_18, window_bounds = array<i64: 1, 128>}, {pipeline_mode = #tpu.pipeline_mode<synchronous>, transform_indices = @transform_19, window_bounds = array<i64: 1, 128>}, {transform_indices = @transform_20, window_bounds = array<i64: 32, 128>}]} {
    %c0 = arith.constant 0 : index
    %c0_0 = arith.constant 0 : index
    %0 = vector.load %arg1[%c0, %c0_0] : memref<32x128xf32, #tpu.memory_space<vmem>>, vector<32x128xf32>
    %c0_1 = arith.constant 0 : index
    %c0_2 = arith.constant 0 : index
    %1 = vector.load %arg2[%c0_1, %c0_2] : memref<64x128xf32, #tpu.memory_space<vmem>>, vector<64x128xf32>
    %c0_3 = arith.constant 0 : index
    %c0_4 = arith.constant 0 : index
    %2 = vector.load %arg3[%c0_3, %c0_4] : memref<64x128xf32, #tpu.memory_space<vmem>>, vector<64x128xf32>
    %3 = arith.truncf %0 : vector<32x128xf32> to vector<32x128xbf16>
    %c0_5 = arith.constant 0 : index
    %c0_6 = arith.constant 0 : index
    %4 = vector.load %arg5[%c0_5, %c0_6] : memref<128x128xbf16, #tpu.memory_space<vmem>>, vector<128x128xbf16>
    %cst = arith.constant dense<0.000000e+00> : vector<32x128xf32>
    %5 = tpu.matmul %3, %4, %cst {dimension_numbers = #tpu.dot_dimension_numbers<[1], [0], [0], [1], [0, 0, 1, 1], [], []>} : vector<32x128xbf16>, vector<128x128xbf16>, vector<32x128xf32> -> vector<32x128xf32>
    %c0_7 = arith.constant 0 : index
    %c0_8 = arith.constant 0 : index
    %6 = vector.load %arg6[%c0_7, %c0_8] : memref<1x128xf32, #tpu.memory_space<vmem>>, vector<1x128xf32>
    %7 = vector.broadcast %6 : vector<1x128xf32> to vector<32x128xf32>
    %8 = arith.addf %5, %7 : vector<32x128xf32>
    %9 = arith.truncf %1 : vector<64x128xf32> to vector<64x128xbf16>
    %c0_9 = arith.constant 0 : index
    %c0_10 = arith.constant 0 : index
    %10 = vector.load %arg7[%c0_9, %c0_10] : memref<128x128xbf16, #tpu.memory_space<vmem>>, vector<128x128xbf16>
    %cst_11 = arith.constant dense<0.000000e+00> : vector<64x128xf32>
    %11 = tpu.matmul %9, %10, %cst_11 {dimension_numbers = #tpu.dot_dimension_numbers<[1], [0], [0], [1], [0, 0, 1, 1], [], []>} : vector<64x128xbf16>, vector<128x128xbf16>, vector<64x128xf32> -> vector<64x128xf32>
    %c0_12 = arith.constant 0 : index
    %c0_13 = arith.constant 0 : index
    %12 = vector.load %arg8[%c0_12, %c0_13] : memref<1x128xf32, #tpu.memory_space<vmem>>, vector<1x128xf32>
    %13 = vector.broadcast %12 : vector<1x128xf32> to vector<64x128xf32>
    %14 = arith.addf %11, %13 : vector<64x128xf32>
    %15 = arith.truncf %2 : vector<64x128xf32> to vector<64x128xbf16>
    %c0_14 = arith.constant 0 : index
    %c0_15 = arith.constant 0 : index
    %16 = vector.load %arg9[%c0_14, %c0_15] : memref<128x128xbf16, #tpu.memory_space<vmem>>, vector<128x128xbf16>
    %cst_16 = arith.constant dense<0.000000e+00> : vector<64x128xf32>
    %17 = tpu.matmul %15, %16, %cst_16 {dimension_numbers = #tpu.dot_dimension_numbers<[1], [0], [0], [1], [0, 0, 1, 1], [], []>} : vector<64x128xbf16>, vector<128x128xbf16>, vector<64x128xf32> -> vector<64x128xf32>
    %c0_17 = arith.constant 0 : index
    %c0_18 = arith.constant 0 : index
    %18 = vector.load %arg10[%c0_17, %c0_18] : memref<1x128xf32, #tpu.memory_space<vmem>>, vector<1x128xf32>
    %19 = vector.broadcast %18 : vector<1x128xf32> to vector<64x128xf32>
    %20 = arith.addf %17, %19 : vector<64x128xf32>
    %21 = arith.truncf %8 : vector<32x128xf32> to vector<32x128xbf16>
    %22 = arith.truncf %14 : vector<64x128xf32> to vector<64x128xbf16>
    %23 = arith.truncf %20 : vector<64x128xf32> to vector<64x128xbf16>
    %c0_19 = arith.constant 0 : index
    %c0_20 = arith.constant 0 : index
    %c0_21 = arith.constant 0 : index
    %24 = vector.load %arg4[%c0_19, %c0_20, %c0_21] : memref<2x1x32xf32, #tpu.memory_space<vmem>>, vector<1x1x32xf32>
    %25 = vector.shape_cast %24 : vector<1x1x32xf32> to vector<1x32xf32>
    %26 = vector.extract_strided_slice %21 {offsets = [0, 0], sizes = [16, 32], strides = [1, 1]} : vector<32x128xbf16> to vector<16x32xbf16>
    %27 = vector.extract_strided_slice %22 {offsets = [0, 0], sizes = [32, 32], strides = [1, 1]} : vector<64x128xbf16> to vector<32x32xbf16>
    %28 = vector.extract_strided_slice %23 {offsets = [0, 0], sizes = [32, 32], strides = [1, 1]} : vector<64x128xbf16> to vector<32x32xbf16>
    %cst_22 = arith.constant dense<0.000000e+00> : vector<16x32xf32>
    %29 = tpu.matmul %26, %27, %cst_22 {dimension_numbers = #tpu.dot_dimension_numbers<[1], [1], [0], [0], [0, 0, 1, 0], [], []>} : vector<16x32xbf16>, vector<32x32xbf16>, vector<16x32xf32> -> vector<16x32xf32>
    %30 = vector.broadcast %25 : vector<1x32xf32> to vector<16x32xf32>
    %31 = arith.addf %29, %30 : vector<16x32xf32>
    %cst_23 = arith.constant dense<0xFF800000> : vector<16xf32>
    %32 = vector.multi_reduction <maximumf>, %31, %cst_23 [1] : vector<16x32xf32> to vector<16xf32>
    %33 = vector.shape_cast %32 : vector<16xf32> to vector<16x1xf32>
    %34 = vector.broadcast %33 : vector<16x1xf32> to vector<16x32xf32>
    %35 = arith.subf %31, %34 : vector<16x32xf32>
    %36 = math.exp %35 : vector<16x32xf32>
    %cst_24 = arith.constant dense<0.000000e+00> : vector<16xf32>
    %37 = vector.multi_reduction <add>, %36, %cst_24 [1] : vector<16x32xf32> to vector<16xf32>
    %38 = vector.shape_cast %37 : vector<16xf32> to vector<16x1xf32>
    %39 = tpu.reciprocal %38 {approx = true} : vector<16x1xf32> -> vector<16x1xf32>
    %40 = vector.broadcast %39 : vector<16x1xf32> to vector<16x32xf32>
    %41 = arith.mulf %36, %40 : vector<16x32xf32>
    %42 = arith.truncf %41 : vector<16x32xf32> to vector<16x32xbf16>
    %cst_25 = arith.constant dense<0.000000e+00> : vector<16x32xf32>
    %43 = tpu.matmul %42, %28, %cst_25 {dimension_numbers = #tpu.dot_dimension_numbers<[1], [0], [0], [1], [0, 0, 1, 1], [], []>} : vector<16x32xbf16>, vector<32x32xbf16>, vector<16x32xf32> -> vector<16x32xf32>
    %44 = vector.extract_strided_slice %21 {offsets = [0, 32], sizes = [16, 32], strides = [1, 1]} : vector<32x128xbf16> to vector<16x32xbf16>
    %45 = vector.extract_strided_slice %22 {offsets = [0, 32], sizes = [32, 32], strides = [1, 1]} : vector<64x128xbf16> to vector<32x32xbf16>
    %46 = vector.extract_strided_slice %23 {offsets = [0, 32], sizes = [32, 32], strides = [1, 1]} : vector<64x128xbf16> to vector<32x32xbf16>
    %cst_26 = arith.constant dense<0.000000e+00> : vector<16x32xf32>
    %47 = tpu.matmul %44, %45, %cst_26 {dimension_numbers = #tpu.dot_dimension_numbers<[1], [1], [0], [0], [0, 0, 1, 0], [], []>} : vector<16x32xbf16>, vector<32x32xbf16>, vector<16x32xf32> -> vector<16x32xf32>
    %48 = vector.broadcast %25 : vector<1x32xf32> to vector<16x32xf32>
    %49 = arith.addf %47, %48 : vector<16x32xf32>
    %cst_27 = arith.constant dense<0xFF800000> : vector<16xf32>
    %50 = vector.multi_reduction <maximumf>, %49, %cst_27 [1] : vector<16x32xf32> to vector<16xf32>
    %51 = vector.shape_cast %50 : vector<16xf32> to vector<16x1xf32>
    %52 = vector.broadcast %51 : vector<16x1xf32> to vector<16x32xf32>
    %53 = arith.subf %49, %52 : vector<16x32xf32>
    %54 = math.exp %53 : vector<16x32xf32>
    %cst_28 = arith.constant dense<0.000000e+00> : vector<16xf32>
    %55 = vector.multi_reduction <add>, %54, %cst_28 [1] : vector<16x32xf32> to vector<16xf32>
    %56 = vector.shape_cast %55 : vector<16xf32> to vector<16x1xf32>
    %57 = tpu.reciprocal %56 {approx = true} : vector<16x1xf32> -> vector<16x1xf32>
    %58 = vector.broadcast %57 : vector<16x1xf32> to vector<16x32xf32>
    %59 = arith.mulf %54, %58 : vector<16x32xf32>
    %60 = arith.truncf %59 : vector<16x32xf32> to vector<16x32xbf16>
    %cst_29 = arith.constant dense<0.000000e+00> : vector<16x32xf32>
    %61 = tpu.matmul %60, %46, %cst_29 {dimension_numbers = #tpu.dot_dimension_numbers<[1], [0], [0], [1], [0, 0, 1, 1], [], []>} : vector<16x32xbf16>, vector<32x32xbf16>, vector<16x32xf32> -> vector<16x32xf32>
    %62 = vector.extract_strided_slice %21 {offsets = [0, 64], sizes = [16, 32], strides = [1, 1]} : vector<32x128xbf16> to vector<16x32xbf16>
    %63 = vector.extract_strided_slice %22 {offsets = [0, 64], sizes = [32, 32], strides = [1, 1]} : vector<64x128xbf16> to vector<32x32xbf16>
    %64 = vector.extract_strided_slice %23 {offsets = [0, 64], sizes = [32, 32], strides = [1, 1]} : vector<64x128xbf16> to vector<32x32xbf16>
    %cst_30 = arith.constant dense<0.000000e+00> : vector<16x32xf32>
    %65 = tpu.matmul %62, %63, %cst_30 {dimension_numbers = #tpu.dot_dimension_numbers<[1], [1], [0], [0], [0, 0, 1, 0], [], []>} : vector<16x32xbf16>, vector<32x32xbf16>, vector<16x32xf32> -> vector<16x32xf32>
    %66 = vector.broadcast %25 : vector<1x32xf32> to vector<16x32xf32>
    %67 = arith.addf %65, %66 : vector<16x32xf32>
    %cst_31 = arith.constant dense<0xFF800000> : vector<16xf32>
    %68 = vector.multi_reduction <maximumf>, %67, %cst_31 [1] : vector<16x32xf32> to vector<16xf32>
    %69 = vector.shape_cast %68 : vector<16xf32> to vector<16x1xf32>
    %70 = vector.broadcast %69 : vector<16x1xf32> to vector<16x32xf32>
    %71 = arith.subf %67, %70 : vector<16x32xf32>
    %72 = math.exp %71 : vector<16x32xf32>
    %cst_32 = arith.constant dense<0.000000e+00> : vector<16xf32>
    %73 = vector.multi_reduction <add>, %72, %cst_32 [1] : vector<16x32xf32> to vector<16xf32>
    %74 = vector.shape_cast %73 : vector<16xf32> to vector<16x1xf32>
    %75 = tpu.reciprocal %74 {approx = true} : vector<16x1xf32> -> vector<16x1xf32>
    %76 = vector.broadcast %75 : vector<16x1xf32> to vector<16x32xf32>
    %77 = arith.mulf %72, %76 : vector<16x32xf32>
    %78 = arith.truncf %77 : vector<16x32xf32> to vector<16x32xbf16>
    %cst_33 = arith.constant dense<0.000000e+00> : vector<16x32xf32>
    %79 = tpu.matmul %78, %64, %cst_33 {dimension_numbers = #tpu.dot_dimension_numbers<[1], [0], [0], [1], [0, 0, 1, 1], [], []>} : vector<16x32xbf16>, vector<32x32xbf16>, vector<16x32xf32> -> vector<16x32xf32>
    %80 = vector.extract_strided_slice %21 {offsets = [0, 96], sizes = [16, 32], strides = [1, 1]} : vector<32x128xbf16> to vector<16x32xbf16>
    %81 = vector.extract_strided_slice %22 {offsets = [0, 96], sizes = [32, 32], strides = [1, 1]} : vector<64x128xbf16> to vector<32x32xbf16>
    %82 = vector.extract_strided_slice %23 {offsets = [0, 96], sizes = [32, 32], strides = [1, 1]} : vector<64x128xbf16> to vector<32x32xbf16>
    %cst_34 = arith.constant dense<0.000000e+00> : vector<16x32xf32>
    %83 = tpu.matmul %80, %81, %cst_34 {dimension_numbers = #tpu.dot_dimension_numbers<[1], [1], [0], [0], [0, 0, 1, 0], [], []>} : vector<16x32xbf16>, vector<32x32xbf16>, vector<16x32xf32> -> vector<16x32xf32>
    %84 = vector.broadcast %25 : vector<1x32xf32> to vector<16x32xf32>
    %85 = arith.addf %83, %84 : vector<16x32xf32>
    %cst_35 = arith.constant dense<0xFF800000> : vector<16xf32>
    %86 = vector.multi_reduction <maximumf>, %85, %cst_35 [1] : vector<16x32xf32> to vector<16xf32>
    %87 = vector.shape_cast %86 : vector<16xf32> to vector<16x1xf32>
    %88 = vector.broadcast %87 : vector<16x1xf32> to vector<16x32xf32>
    %89 = arith.subf %85, %88 : vector<16x32xf32>
    %90 = math.exp %89 : vector<16x32xf32>
    %cst_36 = arith.constant dense<0.000000e+00> : vector<16xf32>
    %91 = vector.multi_reduction <add>, %90, %cst_36 [1] : vector<16x32xf32> to vector<16xf32>
    %92 = vector.shape_cast %91 : vector<16xf32> to vector<16x1xf32>
    %93 = tpu.reciprocal %92 {approx = true} : vector<16x1xf32> -> vector<16x1xf32>
    %94 = vector.broadcast %93 : vector<16x1xf32> to vector<16x32xf32>
    %95 = arith.mulf %90, %94 : vector<16x32xf32>
    %96 = arith.truncf %95 : vector<16x32xf32> to vector<16x32xbf16>
    %cst_37 = arith.constant dense<0.000000e+00> : vector<16x32xf32>
    %97 = tpu.matmul %96, %82, %cst_37 {dimension_numbers = #tpu.dot_dimension_numbers<[1], [0], [0], [1], [0, 0, 1, 1], [], []>} : vector<16x32xbf16>, vector<32x32xbf16>, vector<16x32xf32> -> vector<16x32xf32>
    %98 = tpu.concatenate %43, %61, %79, %97 in 1 : vector<16x32xf32>, vector<16x32xf32>, vector<16x32xf32>, vector<16x32xf32> -> vector<16x128xf32>
    %c1 = arith.constant 1 : index
    %c0_38 = arith.constant 0 : index
    %c0_39 = arith.constant 0 : index
    %99 = vector.load %arg4[%c1, %c0_38, %c0_39] : memref<2x1x32xf32, #tpu.memory_space<vmem>>, vector<1x1x32xf32>
    %100 = vector.shape_cast %99 : vector<1x1x32xf32> to vector<1x32xf32>
    %101 = vector.extract_strided_slice %21 {offsets = [16, 0], sizes = [16, 32], strides = [1, 1]} : vector<32x128xbf16> to vector<16x32xbf16>
    %102 = vector.extract_strided_slice %22 {offsets = [32, 0], sizes = [32, 32], strides = [1, 1]} : vector<64x128xbf16> to vector<32x32xbf16>
    %103 = vector.extract_strided_slice %23 {offsets = [32, 0], sizes = [32, 32], strides = [1, 1]} : vector<64x128xbf16> to vector<32x32xbf16>
    %cst_40 = arith.constant dense<0.000000e+00> : vector<16x32xf32>
    %104 = tpu.matmul %101, %102, %cst_40 {dimension_numbers = #tpu.dot_dimension_numbers<[1], [1], [0], [0], [0, 0, 1, 0], [], []>} : vector<16x32xbf16>, vector<32x32xbf16>, vector<16x32xf32> -> vector<16x32xf32>
    %105 = vector.broadcast %100 : vector<1x32xf32> to vector<16x32xf32>
    %106 = arith.addf %104, %105 : vector<16x32xf32>
    %cst_41 = arith.constant dense<0xFF800000> : vector<16xf32>
    %107 = vector.multi_reduction <maximumf>, %106, %cst_41 [1] : vector<16x32xf32> to vector<16xf32>
    %108 = vector.shape_cast %107 : vector<16xf32> to vector<16x1xf32>
    %109 = vector.broadcast %108 : vector<16x1xf32> to vector<16x32xf32>
    %110 = arith.subf %106, %109 : vector<16x32xf32>
    %111 = math.exp %110 : vector<16x32xf32>
    %cst_42 = arith.constant dense<0.000000e+00> : vector<16xf32>
    %112 = vector.multi_reduction <add>, %111, %cst_42 [1] : vector<16x32xf32> to vector<16xf32>
    %113 = vector.shape_cast %112 : vector<16xf32> to vector<16x1xf32>
    %114 = tpu.reciprocal %113 {approx = true} : vector<16x1xf32> -> vector<16x1xf32>
    %115 = vector.broadcast %114 : vector<16x1xf32> to vector<16x32xf32>
    %116 = arith.mulf %111, %115 : vector<16x32xf32>
    %117 = arith.truncf %116 : vector<16x32xf32> to vector<16x32xbf16>
    %cst_43 = arith.constant dense<0.000000e+00> : vector<16x32xf32>
    %118 = tpu.matmul %117, %103, %cst_43 {dimension_numbers = #tpu.dot_dimension_numbers<[1], [0], [0], [1], [0, 0, 1, 1], [], []>} : vector<16x32xbf16>, vector<32x32xbf16>, vector<16x32xf32> -> vector<16x32xf32>
    %119 = vector.extract_strided_slice %21 {offsets = [16, 32], sizes = [16, 32], strides = [1, 1]} : vector<32x128xbf16> to vector<16x32xbf16>
    %120 = vector.extract_strided_slice %22 {offsets = [32, 32], sizes = [32, 32], strides = [1, 1]} : vector<64x128xbf16> to vector<32x32xbf16>
    %121 = vector.extract_strided_slice %23 {offsets = [32, 32], sizes = [32, 32], strides = [1, 1]} : vector<64x128xbf16> to vector<32x32xbf16>
    %cst_44 = arith.constant dense<0.000000e+00> : vector<16x32xf32>
    %122 = tpu.matmul %119, %120, %cst_44 {dimension_numbers = #tpu.dot_dimension_numbers<[1], [1], [0], [0], [0, 0, 1, 0], [], []>} : vector<16x32xbf16>, vector<32x32xbf16>, vector<16x32xf32> -> vector<16x32xf32>
    %123 = vector.broadcast %100 : vector<1x32xf32> to vector<16x32xf32>
    %124 = arith.addf %122, %123 : vector<16x32xf32>
    %cst_45 = arith.constant dense<0xFF800000> : vector<16xf32>
    %125 = vector.multi_reduction <maximumf>, %124, %cst_45 [1] : vector<16x32xf32> to vector<16xf32>
    %126 = vector.shape_cast %125 : vector<16xf32> to vector<16x1xf32>
    %127 = vector.broadcast %126 : vector<16x1xf32> to vector<16x32xf32>
    %128 = arith.subf %124, %127 : vector<16x32xf32>
    %129 = math.exp %128 : vector<16x32xf32>
    %cst_46 = arith.constant dense<0.000000e+00> : vector<16xf32>
    %130 = vector.multi_reduction <add>, %129, %cst_46 [1] : vector<16x32xf32> to vector<16xf32>
    %131 = vector.shape_cast %130 : vector<16xf32> to vector<16x1xf32>
    %132 = tpu.reciprocal %131 {approx = true} : vector<16x1xf32> -> vector<16x1xf32>
    %133 = vector.broadcast %132 : vector<16x1xf32> to vector<16x32xf32>
    %134 = arith.mulf %129, %133 : vector<16x32xf32>
    %135 = arith.truncf %134 : vector<16x32xf32> to vector<16x32xbf16>
    %cst_47 = arith.constant dense<0.000000e+00> : vector<16x32xf32>
    %136 = tpu.matmul %135, %121, %cst_47 {dimension_numbers = #tpu.dot_dimension_numbers<[1], [0], [0], [1], [0, 0, 1, 1], [], []>} : vector<16x32xbf16>, vector<32x32xbf16>, vector<16x32xf32> -> vector<16x32xf32>
    %137 = vector.extract_strided_slice %21 {offsets = [16, 64], sizes = [16, 32], strides = [1, 1]} : vector<32x128xbf16> to vector<16x32xbf16>
    %138 = vector.extract_strided_slice %22 {offsets = [32, 64], sizes = [32, 32], strides = [1, 1]} : vector<64x128xbf16> to vector<32x32xbf16>
    %139 = vector.extract_strided_slice %23 {offsets = [32, 64], sizes = [32, 32], strides = [1, 1]} : vector<64x128xbf16> to vector<32x32xbf16>
    %cst_48 = arith.constant dense<0.000000e+00> : vector<16x32xf32>
    %140 = tpu.matmul %137, %138, %cst_48 {dimension_numbers = #tpu.dot_dimension_numbers<[1], [1], [0], [0], [0, 0, 1, 0], [], []>} : vector<16x32xbf16>, vector<32x32xbf16>, vector<16x32xf32> -> vector<16x32xf32>
    %141 = vector.broadcast %100 : vector<1x32xf32> to vector<16x32xf32>
    %142 = arith.addf %140, %141 : vector<16x32xf32>
    %cst_49 = arith.constant dense<0xFF800000> : vector<16xf32>
    %143 = vector.multi_reduction <maximumf>, %142, %cst_49 [1] : vector<16x32xf32> to vector<16xf32>
    %144 = vector.shape_cast %143 : vector<16xf32> to vector<16x1xf32>
    %145 = vector.broadcast %144 : vector<16x1xf32> to vector<16x32xf32>
    %146 = arith.subf %142, %145 : vector<16x32xf32>
    %147 = math.exp %146 : vector<16x32xf32>
    %cst_50 = arith.constant dense<0.000000e+00> : vector<16xf32>
    %148 = vector.multi_reduction <add>, %147, %cst_50 [1] : vector<16x32xf32> to vector<16xf32>
    %149 = vector.shape_cast %148 : vector<16xf32> to vector<16x1xf32>
    %150 = tpu.reciprocal %149 {approx = true} : vector<16x1xf32> -> vector<16x1xf32>
    %151 = vector.broadcast %150 : vector<16x1xf32> to vector<16x32xf32>
    %152 = arith.mulf %147, %151 : vector<16x32xf32>
    %153 = arith.truncf %152 : vector<16x32xf32> to vector<16x32xbf16>
    %cst_51 = arith.constant dense<0.000000e+00> : vector<16x32xf32>
    %154 = tpu.matmul %153, %139, %cst_51 {dimension_numbers = #tpu.dot_dimension_numbers<[1], [0], [0], [1], [0, 0, 1, 1], [], []>} : vector<16x32xbf16>, vector<32x32xbf16>, vector<16x32xf32> -> vector<16x32xf32>
    %155 = vector.extract_strided_slice %21 {offsets = [16, 96], sizes = [16, 32], strides = [1, 1]} : vector<32x128xbf16> to vector<16x32xbf16>
    %156 = vector.extract_strided_slice %22 {offsets = [32, 96], sizes = [32, 32], strides = [1, 1]} : vector<64x128xbf16> to vector<32x32xbf16>
    %157 = vector.extract_strided_slice %23 {offsets = [32, 96], sizes = [32, 32], strides = [1, 1]} : vector<64x128xbf16> to vector<32x32xbf16>
    %cst_52 = arith.constant dense<0.000000e+00> : vector<16x32xf32>
    %158 = tpu.matmul %155, %156, %cst_52 {dimension_numbers = #tpu.dot_dimension_numbers<[1], [1], [0], [0], [0, 0, 1, 0], [], []>} : vector<16x32xbf16>, vector<32x32xbf16>, vector<16x32xf32> -> vector<16x32xf32>
    %159 = vector.broadcast %100 : vector<1x32xf32> to vector<16x32xf32>
    %160 = arith.addf %158, %159 : vector<16x32xf32>
    %cst_53 = arith.constant dense<0xFF800000> : vector<16xf32>
    %161 = vector.multi_reduction <maximumf>, %160, %cst_53 [1] : vector<16x32xf32> to vector<16xf32>
    %162 = vector.shape_cast %161 : vector<16xf32> to vector<16x1xf32>
    %163 = vector.broadcast %162 : vector<16x1xf32> to vector<16x32xf32>
    %164 = arith.subf %160, %163 : vector<16x32xf32>
    %165 = math.exp %164 : vector<16x32xf32>
    %cst_54 = arith.constant dense<0.000000e+00> : vector<16xf32>
    %166 = vector.multi_reduction <add>, %165, %cst_54 [1] : vector<16x32xf32> to vector<16xf32>
    %167 = vector.shape_cast %166 : vector<16xf32> to vector<16x1xf32>
    %168 = tpu.reciprocal %167 {approx = true} : vector<16x1xf32> -> vector<16x1xf32>
    %169 = vector.broadcast %168 : vector<16x1xf32> to vector<16x32xf32>
    %170 = arith.mulf %165, %169 : vector<16x32xf32>
    %171 = arith.truncf %170 : vector<16x32xf32> to vector<16x32xbf16>
    %cst_55 = arith.constant dense<0.000000e+00> : vector<16x32xf32>
    %172 = tpu.matmul %171, %157, %cst_55 {dimension_numbers = #tpu.dot_dimension_numbers<[1], [0], [0], [1], [0, 0, 1, 1], [], []>} : vector<16x32xbf16>, vector<32x32xbf16>, vector<16x32xf32> -> vector<16x32xf32>
    %173 = tpu.concatenate %118, %136, %154, %172 in 1 : vector<16x32xf32>, vector<16x32xf32>, vector<16x32xf32>, vector<16x32xf32> -> vector<16x128xf32>
    %174 = tpu.concatenate %98, %173 in 0 : vector<16x128xf32>, vector<16x128xf32> -> vector<32x128xf32>
    %175 = arith.truncf %174 : vector<32x128xf32> to vector<32x128xbf16>
    %c0_56 = arith.constant 0 : index
    %c0_57 = arith.constant 0 : index
    %176 = vector.load %arg11[%c0_56, %c0_57] : memref<128x128xbf16, #tpu.memory_space<vmem>>, vector<128x128xbf16>
    %cst_58 = arith.constant dense<0.000000e+00> : vector<32x128xf32>
    %177 = tpu.matmul %175, %176, %cst_58 {dimension_numbers = #tpu.dot_dimension_numbers<[1], [0], [0], [1], [0, 0, 1, 1], [], []>} : vector<32x128xbf16>, vector<128x128xbf16>, vector<32x128xf32> -> vector<32x128xf32>
    %c0_59 = arith.constant 0 : index
    %c0_60 = arith.constant 0 : index
    %178 = vector.load %arg12[%c0_59, %c0_60] : memref<1x128xf32, #tpu.memory_space<vmem>>, vector<1x128xf32>
    %179 = vector.broadcast %178 : vector<1x128xf32> to vector<32x128xf32>
    %180 = arith.addf %177, %179 : vector<32x128xf32>
    %181 = arith.addf %180, %0 : vector<32x128xf32>
    %c0_61 = arith.constant 0 : index
    %c0_62 = arith.constant 0 : index
    %182 = vector.load %arg13[%c0_61, %c0_62] : memref<1x128xf32, #tpu.memory_space<vmem>>, vector<1x128xf32>
    %c0_63 = arith.constant 0 : index
    %c0_64 = arith.constant 0 : index
    %183 = vector.load %arg14[%c0_63, %c0_64] : memref<1x128xf32, #tpu.memory_space<vmem>>, vector<1x128xf32>
    %cst_65 = arith.constant dense<0.000000e+00> : vector<32xf32>
    %184 = vector.multi_reduction <add>, %181, %cst_65 [1] : vector<32x128xf32> to vector<32xf32>
    %185 = vector.shape_cast %184 : vector<32xf32> to vector<32x1xf32>
    %cst_66 = arith.constant 1.280000e+02 : f32
    %186 = vector.broadcast %cst_66 : f32 to vector<32x1xf32>
    %187 = arith.divf %185, %186 : vector<32x1xf32>
    %188 = vector.broadcast %187 : vector<32x1xf32> to vector<32x128xf32>
    %189 = arith.subf %181, %188 : vector<32x128xf32>
    %190 = arith.mulf %189, %189 : vector<32x128xf32>
    %cst_67 = arith.constant dense<0.000000e+00> : vector<32xf32>
    %191 = vector.multi_reduction <add>, %190, %cst_67 [1] : vector<32x128xf32> to vector<32xf32>
    %192 = vector.shape_cast %191 : vector<32xf32> to vector<32x1xf32>
    %cst_68 = arith.constant 1.280000e+02 : f32
    %193 = vector.broadcast %cst_68 : f32 to vector<32x1xf32>
    %194 = arith.divf %192, %193 : vector<32x1xf32>
    %195 = vector.broadcast %187 : vector<32x1xf32> to vector<32x128xf32>
    %196 = arith.subf %181, %195 : vector<32x128xf32>
    %cst_69 = arith.constant 9.99999974E-6 : f32
    %197 = vector.broadcast %cst_69 : f32 to vector<32x1xf32>
    %198 = arith.addf %194, %197 : vector<32x1xf32>
    %199 = math.rsqrt %198 : vector<32x1xf32>
    %200 = vector.broadcast %199 : vector<32x1xf32> to vector<32x128xf32>
    %201 = arith.mulf %196, %200 : vector<32x128xf32>
    %202 = vector.broadcast %182 : vector<1x128xf32> to vector<32x128xf32>
    %203 = arith.mulf %201, %202 : vector<32x128xf32>
    %204 = vector.broadcast %183 : vector<1x128xf32> to vector<32x128xf32>
    %205 = arith.addf %203, %204 : vector<32x128xf32>
    %206 = arith.truncf %205 : vector<32x128xf32> to vector<32x128xbf16>
    %c0_70 = arith.constant 0 : index
    %c0_71 = arith.constant 0 : index
    %207 = vector.load %arg15[%c0_70, %c0_71] : memref<128x256xbf16, #tpu.memory_space<vmem>>, vector<128x256xbf16>
    %cst_72 = arith.constant dense<0.000000e+00> : vector<32x256xf32>
    %208 = tpu.matmul %206, %207, %cst_72 {dimension_numbers = #tpu.dot_dimension_numbers<[1], [0], [0], [1], [0, 0, 1, 1], [], []>} : vector<32x128xbf16>, vector<128x256xbf16>, vector<32x256xf32> -> vector<32x256xf32>
    %c0_73 = arith.constant 0 : index
    %c0_74 = arith.constant 0 : index
    %209 = vector.load %arg16[%c0_73, %c0_74] : memref<1x256xf32, #tpu.memory_space<vmem>>, vector<1x256xf32>
    %210 = vector.broadcast %209 : vector<1x256xf32> to vector<32x256xf32>
    %211 = arith.addf %208, %210 : vector<32x256xf32>
    %cst_75 = arith.constant 0.000000e+00 : f32
    %212 = vector.broadcast %cst_75 : f32 to vector<32x256xf32>
    %213 = arith.maximumf %211, %212 : vector<32x256xf32>
    %214 = arith.truncf %213 : vector<32x256xf32> to vector<32x256xbf16>
    %c0_76 = arith.constant 0 : index
    %c0_77 = arith.constant 0 : index
    %215 = vector.load %arg17[%c0_76, %c0_77] : memref<256x128xbf16, #tpu.memory_space<vmem>>, vector<256x128xbf16>
    %cst_78 = arith.constant dense<0.000000e+00> : vector<32x128xf32>
    %216 = tpu.matmul %214, %215, %cst_78 {dimension_numbers = #tpu.dot_dimension_numbers<[1], [0], [0], [1], [0, 0, 1, 1], [], []>} : vector<32x256xbf16>, vector<256x128xbf16>, vector<32x128xf32> -> vector<32x128xf32>
    %c0_79 = arith.constant 0 : index
    %c0_80 = arith.constant 0 : index
    %217 = vector.load %arg18[%c0_79, %c0_80] : memref<1x128xf32, #tpu.memory_space<vmem>>, vector<1x128xf32>
    %218 = vector.broadcast %217 : vector<1x128xf32> to vector<32x128xf32>
    %219 = arith.addf %216, %218 : vector<32x128xf32>
    %220 = arith.addf %205, %219 : vector<32x128xf32>
    %c0_81 = arith.constant 0 : index
    %c0_82 = arith.constant 0 : index
    %221 = vector.load %arg19[%c0_81, %c0_82] : memref<1x128xf32, #tpu.memory_space<vmem>>, vector<1x128xf32>
    %c0_83 = arith.constant 0 : index
    %c0_84 = arith.constant 0 : index
    %222 = vector.load %arg20[%c0_83, %c0_84] : memref<1x128xf32, #tpu.memory_space<vmem>>, vector<1x128xf32>
    %cst_85 = arith.constant dense<0.000000e+00> : vector<32xf32>
    %223 = vector.multi_reduction <add>, %220, %cst_85 [1] : vector<32x128xf32> to vector<32xf32>
    %224 = vector.shape_cast %223 : vector<32xf32> to vector<32x1xf32>
    %cst_86 = arith.constant 1.280000e+02 : f32
    %225 = vector.broadcast %cst_86 : f32 to vector<32x1xf32>
    %226 = arith.divf %224, %225 : vector<32x1xf32>
    %227 = vector.broadcast %226 : vector<32x1xf32> to vector<32x128xf32>
    %228 = arith.subf %220, %227 : vector<32x128xf32>
    %229 = arith.mulf %228, %228 : vector<32x128xf32>
    %cst_87 = arith.constant dense<0.000000e+00> : vector<32xf32>
    %230 = vector.multi_reduction <add>, %229, %cst_87 [1] : vector<32x128xf32> to vector<32xf32>
    %231 = vector.shape_cast %230 : vector<32xf32> to vector<32x1xf32>
    %cst_88 = arith.constant 1.280000e+02 : f32
    %232 = vector.broadcast %cst_88 : f32 to vector<32x1xf32>
    %233 = arith.divf %231, %232 : vector<32x1xf32>
    %234 = vector.broadcast %226 : vector<32x1xf32> to vector<32x128xf32>
    %235 = arith.subf %220, %234 : vector<32x128xf32>
    %cst_89 = arith.constant 9.99999974E-6 : f32
    %236 = vector.broadcast %cst_89 : f32 to vector<32x1xf32>
    %237 = arith.addf %233, %236 : vector<32x1xf32>
    %238 = math.rsqrt %237 : vector<32x1xf32>
    %239 = vector.broadcast %238 : vector<32x1xf32> to vector<32x128xf32>
    %240 = arith.mulf %235, %239 : vector<32x128xf32>
    %241 = vector.broadcast %221 : vector<1x128xf32> to vector<32x128xf32>
    %242 = arith.mulf %240, %241 : vector<32x128xf32>
    %243 = vector.broadcast %222 : vector<1x128xf32> to vector<32x128xf32>
    %244 = arith.addf %242, %243 : vector<32x128xf32>
    %c0_90 = arith.constant 0 : index
    %c0_91 = arith.constant 0 : index
    %245 = vector.load %arg21[%c0_90, %c0_91] : memref<32x128xf32, #tpu.memory_space<vmem>>, vector<32x128xf32>
    tpu.vector_store %arg21[%c0_90, %c0_91], %244 {strides = array<i32>} : memref<32x128xf32, #tpu.memory_space<vmem>>, vector<32x128xf32>,
    return
  }
  func.func @transform_0(%arg0: i32) -> (i32, i32) {
    %c0_i32 = arith.constant 0 : i32
    %c0_i32_0 = arith.constant 0 : i32
    return %arg0, %c0_i32 : i32, i32
  }
  func.func @transform_1(%arg0: i32) -> (i32, i32) {
    %c0_i32 = arith.constant 0 : i32
    %c0_i32_0 = arith.constant 0 : i32
    return %arg0, %c0_i32 : i32, i32
  }
  func.func @transform_2(%arg0: i32) -> (i32, i32) {
    %c0_i32 = arith.constant 0 : i32
    %c0_i32_0 = arith.constant 0 : i32
    return %arg0, %c0_i32 : i32, i32
  }
  func.func @transform_3(%arg0: i32) -> (i32, i32, i32) {
    %c0_i32 = arith.constant 0 : i32
    %c0_i32_0 = arith.constant 0 : i32
    %c0_i32_1 = arith.constant 0 : i32
    return %arg0, %c0_i32, %c0_i32_0 : i32, i32, i32
  }
  func.func @transform_4(%arg0: i32) -> (i32, i32) {
    %c0_i32 = arith.constant 0 : i32
    %c0_i32_0 = arith.constant 0 : i32
    %c0_i32_1 = arith.constant 0 : i32
    return %c0_i32, %c0_i32_0 : i32, i32
  }
  func.func @transform_5(%arg0: i32) -> (i32, i32) {
    %c0_i32 = arith.constant 0 : i32
    %c0_i32_0 = arith.constant 0 : i32
    %c0_i32_1 = arith.constant 0 : i32
    return %c0_i32, %c0_i32_0 : i32, i32
  }
  func.func @transform_6(%arg0: i32) -> (i32, i32) {
    %c0_i32 = arith.constant 0 : i32
    %c0_i32_0 = arith.constant 0 : i32
    %c0_i32_1 = arith.constant 0 : i32
    return %c0_i32, %c0_i32_0 : i32, i32
  }
  func.func @transform_7(%arg0: i32) -> (i32, i32) {
    %c0_i32 = arith.constant 0 : i32
    %c0_i32_0 = arith.constant 0 : i32
    %c0_i32_1 = arith.constant 0 : i32
    return %c0_i32, %c0_i32_0 : i32, i32
  }
  func.func @transform_8(%arg0: i32) -> (i32, i32) {
    %c0_i32 = arith.constant 0 : i32
    %c0_i32_0 = arith.constant 0 : i32
    %c0_i32_1 = arith.constant 0 : i32
    return %c0_i32, %c0_i32_0 : i32, i32
  }
  func.func @transform_9(%arg0: i32) -> (i32, i32) {
    %c0_i32 = arith.constant 0 : i32
    %c0_i32_0 = arith.constant 0 : i32
    %c0_i32_1 = arith.constant 0 : i32
    return %c0_i32, %c0_i32_0 : i32, i32
  }
  func.func @transform_10(%arg0: i32) -> (i32, i32) {
    %c0_i32 = arith.constant 0 : i32
    %c0_i32_0 = arith.constant 0 : i32
    %c0_i32_1 = arith.constant 0 : i32
    return %c0_i32, %c0_i32_0 : i32, i32
  }
  func.func @transform_11(%arg0: i32) -> (i32, i32) {
    %c0_i32 = arith.constant 0 : i32
    %c0_i32_0 = arith.constant 0 : i32
    %c0_i32_1 = arith.constant 0 : i32
    return %c0_i32, %c0_i32_0 : i32, i32
  }
  func.func @transform_12(%arg0: i32) -> (i32, i32) {
    %c0_i32 = arith.constant 0 : i32
    %c0_i32_0 = arith.constant 0 : i32
    %c0_i32_1 = arith.constant 0 : i32
    return %c0_i32, %c0_i32_0 : i32, i32
  }
  func.func @transform_13(%arg0: i32) -> (i32, i32) {
    %c0_i32 = arith.constant 0 : i32
    %c0_i32_0 = arith.constant 0 : i32
    %c0_i32_1 = arith.constant 0 : i32
    return %c0_i32, %c0_i32_0 : i32, i32
  }
  func.func @transform_14(%arg0: i32) -> (i32, i32) {
    %c0_i32 = arith.constant 0 : i32
    %c0_i32_0 = arith.constant 0 : i32
    %c0_i32_1 = arith.constant 0 : i32
    return %c0_i32, %c0_i32_0 : i32, i32
  }
  func.func @transform_15(%arg0: i32) -> (i32, i32) {
    %c0_i32 = arith.constant 0 : i32
    %c0_i32_0 = arith.constant 0 : i32
    %c0_i32_1 = arith.constant 0 : i32
    return %c0_i32, %c0_i32_0 : i32, i32
  }
  func.func @transform_16(%arg0: i32) -> (i32, i32) {
    %c0_i32 = arith.constant 0 : i32
    %c0_i32_0 = arith.constant 0 : i32
    %c0_i32_1 = arith.constant 0 : i32
    return %c0_i32, %c0_i32_0 : i32, i32
  }
  func.func @transform_17(%arg0: i32) -> (i32, i32) {
    %c0_i32 = arith.constant 0 : i32
    %c0_i32_0 = arith.constant 0 : i32
    %c0_i32_1 = arith.constant 0 : i32
    return %c0_i32, %c0_i32_0 : i32, i32
  }
  func.func @transform_18(%arg0: i32) -> (i32, i32) {
    %c0_i32 = arith.constant 0 : i32
    %c0_i32_0 = arith.constant 0 : i32
    %c0_i32_1 = arith.constant 0 : i32
    return %c0_i32, %c0_i32_0 : i32, i32
  }
  func.func @transform_19(%arg0: i32) -> (i32, i32) {
    %c0_i32 = arith.constant 0 : i32
    %c0_i32_0 = arith.constant 0 : i32
    %c0_i32_1 = arith.constant 0 : i32
    return %c0_i32, %c0_i32_0 : i32, i32
  }
  func.func @transform_20(%arg0: i32) -> (i32, i32) {
    %c0_i32 = arith.constant 0 : i32
    %c0_i32_0 = arith.constant 0 : i32
    return %arg0, %c0_i32 : i32, i32
  }
}

</mosaic_0001>

<llo_original>
// kernel: tpu_custom_call.1
$region0: #{tpu_custom_call.1}
  #allocation0 [shape = 'u32[]', space=smem, size = 0x4, offset = 0x4, fixed_abs, tag = 'smem constant byte address 0x4 - core index']
  #allocation1 [shape = 'u32[144,128]{1,0:T(1,128)}', space=vmem, size = 0x12000, scoped, tag = 'internal scratch']
  %s0 = inlined_call_operand.hbm [shape: f32[64,128], index: 0, kind: input, shape index: {}]
  %s1 = inlined_call_operand.hbm [shape: f32[128,128], index: 1, kind: input, shape index: {}]
  %s2 = inlined_call_operand.hbm [shape: f32[128,128], index: 2, kind: input, shape index: {}]
  %s3 = inlined_call_operand.vmem [shape: f32[4,1,32], index: 3, kind: input, shape index: {}]
  %s4 = inlined_call_operand.hbm [shape: bf16[128,128], index: 4, kind: input, shape index: {}]
  %s5 = inlined_call_operand.vmem [shape: f32[1,128], index: 5, kind: input, shape index: {}]
  %s6 = inlined_call_operand.hbm [shape: bf16[128,128], index: 6, kind: input, shape index: {}]
  %s7 = inlined_call_operand.vmem [shape: f32[1,128], index: 7, kind: input, shape index: {}]
  %s8 = inlined_call_operand.hbm [shape: bf16[128,128], index: 8, kind: input, shape index: {}]
  %s9 = inlined_call_operand.vmem [shape: f32[1,128], index: 9, kind: input, shape index: {}]
  %s10 = inlined_call_operand.hbm [shape: bf16[128,128], index: 10, kind: input, shape index: {}]
  %s11 = inlined_call_operand.vmem [shape: f32[1,128], index: 11, kind: input, shape index: {}]
  %s12 = inlined_call_operand.vmem [shape: f32[1,128], index: 12, kind: input, shape index: {}]
  %s13 = inlined_call_operand.vmem [shape: f32[1,128], index: 13, kind: input, shape index: {}]
  %s14 = inlined_call_operand.hbm [shape: bf16[128,256], index: 14, kind: input, shape index: {}]
  %s15 = inlined_call_operand.vmem [shape: f32[1,256], index: 15, kind: input, shape index: {}]
  %s16 = inlined_call_operand.hbm [shape: bf16[256,128], index: 16, kind: input, shape index: {}]
  %s17 = inlined_call_operand.vmem [shape: f32[1,128], index: 17, kind: input, shape index: {}]
  %s18 = inlined_call_operand.vmem [shape: f32[1,128], index: 18, kind: input, shape index: {}]
  %s19 = inlined_call_operand.vmem [shape: f32[1,128], index: 19, kind: input, shape index: {}]
  %s20 = inlined_call_operand.hbm [shape: f32[64,128], index: 20, kind: output, shape index: {}]
  %s21 = sld [smem:[#allocation0]]
  $region149: #{tpu_custom_call.1} parent=0
    _
  %s23 = ssub.s32 1, %s21
  %s24 = scalar_select 0, %s23, %s21
  $region1: #{tpu_custom_call.1} parent=0
    #allocation2 [shape = 'u8[32768]{0}', space=vmem, size = 0x8000, scoped, tag = 'input window, operand 0']
    #allocation3 [shape = 's32[2]{0}', space=sflag, size = 0x8, scoped, tag = 'scoped memory for tpu_custom_call.1']
    #allocation4 [shape = 's32[2]{0}', space=sflag, size = 0x8, scoped, tag = 'scoped memory for tpu_custom_call.1']
    #allocation5 [shape = 'u8[65536]{0}', space=vmem, size = 0x10000, scoped, tag = 'input window, operand 1']
    #allocation6 [shape = 's32[2]{0}', space=sflag, size = 0x8, scoped, tag = 'scoped memory for tpu_custom_call.1']
    #allocation7 [shape = 'u8[65536]{0}', space=vmem, size = 0x10000, scoped, tag = 'input window, operand 2']
    #allocation8 [shape = 'u8[32768]{0}', space=vmem, size = 0x8000, scoped, tag = 'input window, operand 4, single buffered']
    #allocation9 [shape = 's32[1]{0}', space=sflag, size = 0x4, scoped, tag = 'scoped memory for tpu_custom_call.1']
    #allocation10 [shape = 'u8[32768]{0}', space=vmem, size = 0x8000, scoped, tag = 'input window, operand 6, single buffered']
    #allocation11 [shape = 'u8[32768]{0}', space=vmem, size = 0x8000, scoped, tag = 'input window, operand 8, single buffered']
    #allocation12 [shape = 's32[1]{0}', space=sflag, size = 0x4, scoped, tag = 'scoped memory for tpu_custom_call.1']
    #allocation13 [shape = 'u8[32768]{0}', space=vmem, size = 0x8000, scoped, tag = 'input window, operand 10, single buffered']
    #allocation14 [shape = 'u8[65536]{0}', space=vmem, size = 0x10000, scoped, tag = 'input window, operand 14, single buffered']
    #allocation15 [shape = 's32[1]{0}', space=sflag, size = 0x4, scoped, tag = 'scoped memory for tpu_custom_call.1']
    #allocation16 [shape = 'u8[65536]{0}', space=vmem, size = 0x10000, scoped, tag = 'input window, operand 16, single buffered']
    #allocation17 [shape = 'u8[32768]{0}', space=vmem, size = 0x8000, scoped, tag = 'output window, operand 0']
    %25 = vsyncpa [#allocation3], 0
    %s26 = scalar_lea.sflag [#allocation3], 1
    %27 = vsyncpa %s26, 0
    %28 = vsyncpa [#allocation6], 0
    %s29 = scalar_lea.sflag [#allocation6], 1
    %30 = vsyncpa %s29, 0
    %31 = vsyncpa [#allocation9], 0
    %32 = vsyncpa [#allocation12], 0
    %33 = vsyncpa [#allocation15], 0
    %34 = vsyncpa [#allocation4], 0
    %s35 = scalar_lea.sflag [#allocation4], 1
    %36 = vsyncpa %s35, 0
    loop: start=0, step=1, limit=4
    $region2: #{tpu_custom_call.1} parent=1 // loop_pre_header
      _
    $region3: #{tpu_custom_call.1} parent=1 // loop_header
      %s38 = sphi 0, %s42
      %p39 = scmp.ge.s32.totalorder %s38, 4
      %s48 = sphi 0, %s50
      %s51 = sphi 0, %s48
      %s52 = sphi 0, %s51
      %s68 = sphi 0, %s52
      %s74 = sphi 0, %s76
      %s77 = sphi 0, %s74
      %s78 = sphi 0, %s77
      %s94 = sphi 0, %s78
      %s100 = sphi 0, %s102
      %s103 = sphi 0, %s100
      %s104 = sphi 0, %s103
      %s120 = sphi 0, %s104
      %s126 = sphi 0, %s128
      %s129 = sphi 0, %s126
      %s130 = sphi 0, %s129
      %s146 = sphi 0, %s130
      %s150 = sphi 0, %s150
      %s152 = sphi 0, %s150
      %s153 = sphi 0, %s152
      %s167 = sphi 0, %s153
      %s171 = sphi 0, %s171
      %s173 = sphi 0, %s171
      %s174 = sphi 0, %s173
      %s188 = sphi 0, %s174
      %s192 = sphi 0, %s192
      %s194 = sphi 0, %s192
      %s195 = sphi 0, %s194
      %s209 = sphi 0, %s195
      %s213 = sphi 0, %s213
      %s215 = sphi 0, %s213
      %s216 = sphi 0, %s215
      %s230 = sphi 0, %s216
      %s234 = sphi 0, %s234
      %s236 = sphi 0, %s234
      %s237 = sphi 0, %s236
      %s251 = sphi 0, %s237
      %s255 = sphi 0, %s255
      %s257 = sphi 0, %s255
      %s258 = sphi 0, %s257
      %s272 = sphi 0, %s258
      %s276 = sphi 0, %s276
      %s278 = sphi 0, %s276
      %s279 = sphi 0, %s278
      %s293 = sphi 0, %s279
      %s297 = sphi 0, %s297
      %s299 = sphi 0, %s297
      %s300 = sphi 0, %s299
      %s314 = sphi 0, %s300
      %s318 = sphi 0, %s318
      %s320 = sphi 0, %s318
      %s321 = sphi 0, %s320
      %s335 = sphi 0, %s321
      %s339 = sphi 0, %s339
      %s341 = sphi 0, %s339
      %s342 = sphi 0, %s341
      %s356 = sphi 0, %s342
      %s360 = sphi 0, %s360
      %s362 = sphi 0, %s360
      %s363 = sphi 0, %s362
      %s377 = sphi 0, %s363
      %s381 = sphi 0, %s381
      %s383 = sphi 0, %s381
      %s384 = sphi 0, %s383
      %s398 = sphi 0, %s384
      %s402 = sphi 0, %s402
      %s404 = sphi 0, %s402
      %s405 = sphi 0, %s404
      %s419 = sphi 0, %s405
      %s423 = sphi 0, %s423
      %s425 = sphi 0, %s423
      %s426 = sphi 0, %s425
      %s440 = sphi 0, %s426
      %s444 = sphi 0, %s444
      %s446 = sphi 0, %s444
      %s447 = sphi 0, %s446
      %s461 = sphi 0, %s447
      %s465 = sphi 0, %s465
      %s467 = sphi 0, %s465
      %s468 = sphi 0, %s467
      %s482 = sphi 0, %s468
      %s488 = sphi 0, %s490
      %s491 = sphi 0, %s488
      %s492 = sphi 0, %s491
      %s508 = sphi 0, %s492
    $region4: #{tpu_custom_call.1} parent=1 // loop_header_branch
      %41 = sbr.rel (%p39) target = $region8
    $region5: #{tpu_custom_call.1} parent=1 // loop_body
      %s43 = ssub.s32 %s38, 1
      %s44 = ssub.s32 %s38, 2
      %s45 = sadd.s32 %s38, 1
      %s46 = ssub.s32 %s38, %s45
      %p47 = scmp.eq.s32.totalorder %s46, 0
      %s49 = sadd.s32 %s48, 1
      %s50 = scalar_select %p47, %s48, %s49
      %p53 = pneg %p47
      %p54 = scmp.eq.s32.totalorder %s38, 1
      %p55 = por %p53, %p54
      %p56 = scmp.ne.s32.totalorder %s48, %s51
      %p57 = scmp.eq.s32.totalorder %s38, 0
      %p58 = por %p56, %p57
      %p59 = scmp.ne.s32.totalorder %s48, %s51
      %p60 = scmp.eq.s32.totalorder %s43, 1
      %p61 = por %p59, %p60
      %p62 = scmp.ne.s32.totalorder %s51, %s52
      %p63 = scmp.eq.s32.totalorder %s43, 0
      %p64 = por %p62, %p63
      %p65 = scmp.ne.s32.totalorder %s51, %s52
      %p66 = scmp.eq.s32.totalorder %s44, 1
      %p67 = por %p65, %p66
      %p69 = scmp.ne.s32.totalorder %s52, %s68
      %p70 = scmp.eq.s32.totalorder %s44, 0
      %p71 = por %p69, %p70
      %s72 = ssub.s32 %s38, %s45
      %p73 = scmp.eq.s32.totalorder %s72, 0
      %s75 = sadd.s32 %s74, 1
      %s76 = scalar_select %p73, %s74, %s75
      %p79 = pneg %p73
      %p80 = scmp.eq.s32.totalorder %s38, 1
      %p81 = por %p79, %p80
      %p82 = scmp.ne.s32.totalorder %s74, %s77
      %p83 = scmp.eq.s32.totalorder %s38, 0
      %p84 = por %p82, %p83
      %p85 = scmp.ne.s32.totalorder %s74, %s77
      %p86 = scmp.eq.s32.totalorder %s43, 1
      %p87 = por %p85, %p86
      %p88 = scmp.ne.s32.totalorder %s77, %s78
      %p89 = scmp.eq.s32.totalorder %s43, 0
      %p90 = por %p88, %p89
      %p91 = scmp.ne.s32.totalorder %s77, %s78
      %p92 = scmp.eq.s32.totalorder %s44, 1
      %p93 = por %p91, %p92
      %p95 = scmp.ne.s32.totalorder %s78, %s94
      %p96 = scmp.eq.s32.totalorder %s44, 0
      %p97 = por %p95, %p96
      %s98 = ssub.s32 %s38, %s45
      %p99 = scmp.eq.s32.totalorder %s98, 0
      %s101 = sadd.s32 %s100, 1
      %s102 = scalar_select %p99, %s100, %s101
      %p105 = pneg %p99
      %p106 = scmp.eq.s32.totalorder %s38, 1
      %p107 = por %p105, %p106
      %p108 = scmp.ne.s32.totalorder %s100, %s103
      %p109 = scmp.eq.s32.totalorder %s38, 0
      %p110 = por %p108, %p109
      %p111 = scmp.ne.s32.totalorder %s100, %s103
      %p112 = scmp.eq.s32.totalorder %s43, 1
      %p113 = por %p111, %p112
      %p114 = scmp.ne.s32.totalorder %s103, %s104
      %p115 = scmp.eq.s32.totalorder %s43, 0
      %p116 = por %p114, %p115
      %p117 = scmp.ne.s32.totalorder %s103, %s104
      %p118 = scmp.eq.s32.totalorder %s44, 1
      %p119 = por %p117, %p118
      %p121 = scmp.ne.s32.totalorder %s104, %s120
      %p122 = scmp.eq.s32.totalorder %s44, 0
      %p123 = por %p121, %p122
      %s124 = ssub.s32 %s38, %s45
      %p125 = scmp.eq.s32.totalorder %s124, 0
      %s127 = sadd.s32 %s126, 1
      %s128 = scalar_select %p125, %s126, %s127
      %p131 = pneg %p125
      %p132 = scmp.eq.s32.totalorder %s38, 1
      %p133 = por %p131, %p132
      %p134 = scmp.ne.s32.totalorder %s126, %s129
      %p135 = scmp.eq.s32.totalorder %s38, 0
      %p136 = por %p134, %p135
      %p137 = scmp.ne.s32.totalorder %s126, %s129
      %p138 = scmp.eq.s32.totalorder %s43, 1
      %p139 = por %p137, %p138
      %p140 = scmp.ne.s32.totalorder %s129, %s130
      %p141 = scmp.eq.s32.totalorder %s43, 0
      %p142 = por %p140, %p141
      %p143 = scmp.ne.s32.totalorder %s129, %s130
      %p144 = scmp.eq.s32.totalorder %s44, 1
      %p145 = por %p143, %p144
      %p147 = scmp.ne.s32.totalorder %s130, %s146
      %p148 = scmp.eq.s32.totalorder %s44, 0
      %p149 = por %p147, %p148
      %s151 = sadd.s32 %s150, 1
      %p154 = scmp.eq.s32.totalorder %s38, 1
      %p155 = scmp.ne.s32.totalorder %s150, %s152
      %p156 = scmp.eq.s32.totalorder %s38, 0
      %p157 = por %p155, %p156
      %p158 = scmp.ne.s32.totalorder %s150, %s152
      %p159 = scmp.eq.s32.totalorder %s43, 1
      %p160 = por %p158, %p159
      %p161 = scmp.ne.s32.totalorder %s152, %s153
      %p162 = scmp.eq.s32.totalorder %s43, 0
      %p163 = por %p161, %p162
      %p164 = scmp.ne.s32.totalorder %s152, %s153
      %p165 = scmp.eq.s32.totalorder %s44, 1
      %p166 = por %p164, %p165
      %p168 = scmp.ne.s32.totalorder %s153, %s167
      %p169 = scmp.eq.s32.totalorder %s44, 0
      %p170 = por %p168, %p169
      %s172 = sadd.s32 %s171, 1
      %p175 = scmp.eq.s32.totalorder %s38, 1
      %p176 = scmp.ne.s32.totalorder %s171, %s173
      %p177 = scmp.eq.s32.totalorder %s38, 0
      %p178 = por %p176, %p177
      %p179 = scmp.ne.s32.totalorder %s171, %s173
      %p180 = scmp.eq.s32.totalorder %s43, 1
      %p181 = por %p179, %p180
      %p182 = scmp.ne.s32.totalorder %s173, %s174
      %p183 = scmp.eq.s32.totalorder %s43, 0
      %p184 = por %p182, %p183
      %p185 = scmp.ne.s32.totalorder %s173, %s174
      %p186 = scmp.eq.s32.totalorder %s44, 1
      %p187 = por %p185, %p186
      %p189 = scmp.ne.s32.totalorder %s174, %s188
      %p190 = scmp.eq.s32.totalorder %s44, 0
      %p191 = por %p189, %p190
      %s193 = sadd.s32 %s192, 1
      %p196 = scmp.eq.s32.totalorder %s38, 1
      %p197 = scmp.ne.s32.totalorder %s192, %s194
      %p198 = scmp.eq.s32.totalorder %s38, 0
      %p199 = por %p197, %p198
      %p200 = scmp.ne.s32.totalorder %s192, %s194
      %p201 = scmp.eq.s32.totalorder %s43, 1
      %p202 = por %p200, %p201
      %p203 = scmp.ne.s32.totalorder %s194, %s195
      %p204 = scmp.eq.s32.totalorder %s43, 0
      %p205 = por %p203, %p204
      %p206 = scmp.ne.s32.totalorder %s194, %s195
      %p207 = scmp.eq.s32.totalorder %s44, 1
      %p208 = por %p206, %p207
      %p210 = scmp.ne.s32.totalorder %s195, %s209
      %p211 = scmp.eq.s32.totalorder %s44, 0
      %p212 = por %p210, %p211
      %s214 = sadd.s32 %s213, 1
      %p217 = scmp.eq.s32.totalorder %s38, 1
      %p218 = scmp.ne.s32.totalorder %s213, %s215
      %p219 = scmp.eq.s32.totalorder %s38, 0
      %p220 = por %p218, %p219
      %p221 = scmp.ne.s32.totalorder %s213, %s215
      %p222 = scmp.eq.s32.totalorder %s43, 1
      %p223 = por %p221, %p222
      %p224 = scmp.ne.s32.totalorder %s215, %s216
      %p225 = scmp.eq.s32.totalorder %s43, 0
      %p226 = por %p224, %p225
      %p227 = scmp.ne.s32.totalorder %s215, %s216
      %p228 = scmp.eq.s32.totalorder %s44, 1
      %p229 = por %p227, %p228
      %p231 = scmp.ne.s32.totalorder %s216, %s230
      %p232 = scmp.eq.s32.totalorder %s44, 0
      %p233 = por %p231, %p232
      %s235 = sadd.s32 %s234, 1
      %p238 = scmp.eq.s32.totalorder %s38, 1
      %p239 = scmp.ne.s32.totalorder %s234, %s236
      %p240 = scmp.eq.s32.totalorder %s38, 0
      %p241 = por %p239, %p240
      %p242 = scmp.ne.s32.totalorder %s234, %s236
      %p243 = scmp.eq.s32.totalorder %s43, 1
      %p244 = por %p242, %p243
      %p245 = scmp.ne.s32.totalorder %s236, %s237
      %p246 = scmp.eq.s32.totalorder %s43, 0
      %p247 = por %p245, %p246
      %p248 = scmp.ne.s32.totalorder %s236, %s237
      %p249 = scmp.eq.s32.totalorder %s44, 1
      %p250 = por %p248, %p249
      %p252 = scmp.ne.s32.totalorder %s237, %s251
      %p253 = scmp.eq.s32.totalorder %s44, 0
      %p254 = por %p252, %p253
      %s256 = sadd.s32 %s255, 1
      %p259 = scmp.eq.s32.totalorder %s38, 1
      %p260 = scmp.ne.s32.totalorder %s255, %s257
      %p261 = scmp.eq.s32.totalorder %s38, 0
      %p262 = por %p260, %p261
      %p263 = scmp.ne.s32.totalorder %s255, %s257
      %p264 = scmp.eq.s32.totalorder %s43, 1
      %p265 = por %p263, %p264
      %p266 = scmp.ne.s32.totalorder %s257, %s258
      %p267 = scmp.eq.s32.totalorder %s43, 0
      %p268 = por %p266, %p267
      %p269 = scmp.ne.s32.totalorder %s257, %s258
      %p270 = scmp.eq.s32.totalorder %s44, 1
      %p271 = por %p269, %p270
      %p273 = scmp.ne.s32.totalorder %s258, %s272
      %p274 = scmp.eq.s32.totalorder %s44, 0
      %p275 = por %p273, %p274
      %s277 = sadd.s32 %s276, 1
      %p280 = scmp.eq.s32.totalorder %s38, 1
      %p281 = scmp.ne.s32.totalorder %s276, %s278
      %p282 = scmp.eq.s32.totalorder %s38, 0
      %p283 = por %p281, %p282
      %p284 = scmp.ne.s32.totalorder %s276, %s278
      %p285 = scmp.eq.s32.totalorder %s43, 1
      %p286 = por %p284, %p285
      %p287 = scmp.ne.s32.totalorder %s278, %s279
      %p288 = scmp.eq.s32.totalorder %s43, 0
      %p289 = por %p287, %p288
      %p290 = scmp.ne.s32.totalorder %s278, %s279
      %p291 = scmp.eq.s32.totalorder %s44, 1
      %p292 = por %p290, %p291
      %p294 = scmp.ne.s32.totalorder %s279, %s293
      %p295 = scmp.eq.s32.totalorder %s44, 0
      %p296 = por %p294, %p295
      %s298 = sadd.s32 %s297, 1
      %p301 = scmp.eq.s32.totalorder %s38, 1
      %p302 = scmp.ne.s32.totalorder %s297, %s299
      %p303 = scmp.eq.s32.totalorder %s38, 0
      %p304 = por %p302, %p303
      %p305 = scmp.ne.s32.totalorder %s297, %s299
      %p306 = scmp.eq.s32.totalorder %s43, 1
      %p307 = por %p305, %p306
      %p308 = scmp.ne.s32.totalorder %s299, %s300
      %p309 = scmp.eq.s32.totalorder %s43, 0
      %p310 = por %p308, %p309
      %p311 = scmp.ne.s32.totalorder %s299, %s300
      %p312 = scmp.eq.s32.totalorder %s44, 1
      %p313 = por %p311, %p312
      %p315 = scmp.ne.s32.totalorder %s300, %s314
      %p316 = scmp.eq.s32.totalorder %s44, 0
      %p317 = por %p315, %p316
      %s319 = sadd.s32 %s318, 1
      %p322 = scmp.eq.s32.totalorder %s38, 1
      %p323 = scmp.ne.s32.totalorder %s318, %s320
      %p324 = scmp.eq.s32.totalorder %s38, 0
      %p325 = por %p323, %p324
      %p326 = scmp.ne.s32.totalorder %s318, %s320
      %p327 = scmp.eq.s32.totalorder %s43, 1
      %p328 = por %p326, %p327
      %p329 = scmp.ne.s32.totalorder %s320, %s321
      %p330 = scmp.eq.s32.totalorder %s43, 0
      %p331 = por %p329, %p330
      %p332 = scmp.ne.s32.totalorder %s320, %s321
      %p333 = scmp.eq.s32.totalorder %s44, 1
      %p334 = por %p332, %p333
      %p336 = scmp.ne.s32.totalorder %s321, %s335
      %p337 = scmp.eq.s32.totalorder %s44, 0
      %p338 = por %p336, %p337
      %s340 = sadd.s32 %s339, 1
      %p343 = scmp.eq.s32.totalorder %s38, 1
      %p344 = scmp.ne.s32.totalorder %s339, %s341
      %p345 = scmp.eq.s32.totalorder %s38, 0
      %p346 = por %p344, %p345
      %p347 = scmp.ne.s32.totalorder %s339, %s341
      %p348 = scmp.eq.s32.totalorder %s43, 1
      %p349 = por %p347, %p348
      %p350 = scmp.ne.s32.totalorder %s341, %s342
      %p351 = scmp.eq.s32.totalorder %s43, 0
      %p352 = por %p350, %p351
      %p353 = scmp.ne.s32.totalorder %s341, %s342
      %p354 = scmp.eq.s32.totalorder %s44, 1
      %p355 = por %p353, %p354
      %p357 = scmp.ne.s32.totalorder %s342, %s356
      %p358 = scmp.eq.s32.totalorder %s44, 0
      %p359 = por %p357, %p358
      %s361 = sadd.s32 %s360, 1
      %p364 = scmp.eq.s32.totalorder %s38, 1
      %p365 = scmp.ne.s32.totalorder %s360, %s362
      %p366 = scmp.eq.s32.totalorder %s38, 0
      %p367 = por %p365, %p366
      %p368 = scmp.ne.s32.totalorder %s360, %s362
      %p369 = scmp.eq.s32.totalorder %s43, 1
      %p370 = por %p368, %p369
      %p371 = scmp.ne.s32.totalorder %s362, %s363
      %p372 = scmp.eq.s32.totalorder %s43, 0
      %p373 = por %p371, %p372
      %p374 = scmp.ne.s32.totalorder %s362, %s363
      %p375 = scmp.eq.s32.totalorder %s44, 1
      %p376 = por %p374, %p375
      %p378 = scmp.ne.s32.totalorder %s363, %s377
      %p379 = scmp.eq.s32.totalorder %s44, 0
      %p380 = por %p378, %p379
      %s382 = sadd.s32 %s381, 1
      %p385 = scmp.eq.s32.totalorder %s38, 1
      %p386 = scmp.ne.s32.totalorder %s381, %s383
      %p387 = scmp.eq.s32.totalorder %s38, 0
      %p388 = por %p386, %p387
      %p389 = scmp.ne.s32.totalorder %s381, %s383
      %p390 = scmp.eq.s32.totalorder %s43, 1
      %p391 = por %p389, %p390
      %p392 = scmp.ne.s32.totalorder %s383, %s384
      %p393 = scmp.eq.s32.totalorder %s43, 0
      %p394 = por %p392, %p393
      %p395 = scmp.ne.s32.totalorder %s383, %s384
      %p396 = scmp.eq.s32.totalorder %s44, 1
      %p397 = por %p395, %p396
      %p399 = scmp.ne.s32.totalorder %s384, %s398
      %p400 = scmp.eq.s32.totalorder %s44, 0
      %p401 = por %p399, %p400
      %s403 = sadd.s32 %s402, 1
      %p406 = scmp.eq.s32.totalorder %s38, 1
      %p407 = scmp.ne.s32.totalorder %s402, %s404
      %p408 = scmp.eq.s32.totalorder %s38, 0
      %p409 = por %p407, %p408
      %p410 = scmp.ne.s32.totalorder %s402, %s404
      %p411 = scmp.eq.s32.totalorder %s43, 1
      %p412 = por %p410, %p411
      %p413 = scmp.ne.s32.totalorder %s404, %s405
      %p414 = scmp.eq.s32.totalorder %s43, 0
      %p415 = por %p413, %p414
      %p416 = scmp.ne.s32.totalorder %s404, %s405
      %p417 = scmp.eq.s32.totalorder %s44, 1
      %p418 = por %p416, %p417
      %p420 = scmp.ne.s32.totalorder %s405, %s419
      %p421 = scmp.eq.s32.totalorder %s44, 0
      %p422 = por %p420, %p421
      %s424 = sadd.s32 %s423, 1
      %p427 = scmp.eq.s32.totalorder %s38, 1
      %p428 = scmp.ne.s32.totalorder %s423, %s425
      %p429 = scmp.eq.s32.totalorder %s38, 0
      %p430 = por %p428, %p429
      %p431 = scmp.ne.s32.totalorder %s423, %s425
      %p432 = scmp.eq.s32.totalorder %s43, 1
      %p433 = por %p431, %p432
      %p434 = scmp.ne.s32.totalorder %s425, %s426
      %p435 = scmp.eq.s32.totalorder %s43, 0
      %p436 = por %p434, %p435
      %p437 = scmp.ne.s32.totalorder %s425, %s426
      %p438 = scmp.eq.s32.totalorder %s44, 1
      %p439 = por %p437, %p438
      %p441 = scmp.ne.s32.totalorder %s426, %s440
      %p442 = scmp.eq.s32.totalorder %s44, 0
      %p443 = por %p441, %p442
      %s445 = sadd.s32 %s444, 1
      %p448 = scmp.eq.s32.totalorder %s38, 1
      %p449 = scmp.ne.s32.totalorder %s444, %s446
      %p450 = scmp.eq.s32.totalorder %s38, 0
      %p451 = por %p449, %p450
      %p452 = scmp.ne.s32.totalorder %s444, %s446
      %p453 = scmp.eq.s32.totalorder %s43, 1
      %p454 = por %p452, %p453
      %p455 = scmp.ne.s32.totalorder %s446, %s447
      %p456 = scmp.eq.s32.totalorder %s43, 0
      %p457 = por %p455, %p456
      %p458 = scmp.ne.s32.totalorder %s446, %s447
      %p459 = scmp.eq.s32.totalorder %s44, 1
      %p460 = por %p458, %p459
      %p462 = scmp.ne.s32.totalorder %s447, %s461
      %p463 = scmp.eq.s32.totalorder %s44, 0
      %p464 = por %p462, %p463
      %s466 = sadd.s32 %s465, 1
      %p469 = scmp.eq.s32.totalorder %s38, 1
      %p470 = scmp.ne.s32.totalorder %s465, %s467
      %p471 = scmp.eq.s32.totalorder %s38, 0
      %p472 = por %p470, %p471
      %p473 = scmp.ne.s32.totalorder %s465, %s467
      %p474 = scmp.eq.s32.totalorder %s43, 1
      %p475 = por %p473, %p474
      %p476 = scmp.ne.s32.totalorder %s467, %s468
      %p477 = scmp.eq.s32.totalorder %s43, 0
      %p478 = por %p476, %p477
      %p479 = scmp.ne.s32.totalorder %s467, %s468
      %p480 = scmp.eq.s32.totalorder %s44, 1
      %p481 = por %p479, %p480
      %p483 = scmp.ne.s32.totalorder %s468, %s482
      %p484 = scmp.eq.s32.totalorder %s44, 0
      %p485 = por %p483, %p484
      %s486 = ssub.s32 %s38, %s45
      %p487 = scmp.eq.s32.totalorder %s486, 0
      %s489 = sadd.s32 %s488, 1
      %s490 = scalar_select %p487, %s488, %s489
      %p493 = pneg %p487
      %p494 = scmp.eq.s32.totalorder %s38, 1
      %p495 = por %p493, %p494
      %p496 = scmp.ne.s32.totalorder %s488, %s491
      %p497 = scmp.eq.s32.totalorder %s38, 0
      %p498 = por %p496, %p497
      %p499 = scmp.ne.s32.totalorder %s488, %s491
      %p500 = scmp.eq.s32.totalorder %s43, 1
      %p501 = por %p499, %p500
      %p502 = scmp.ne.s32.totalorder %s491, %s492
      %p503 = scmp.eq.s32.totalorder %s43, 0
      %p504 = por %p502, %p503
      %p505 = scmp.ne.s32.totalorder %s491, %s492
      %p506 = scmp.eq.s32.totalorder %s44, 1
      %p507 = por %p505, %p506
      %p509 = scmp.ne.s32.totalorder %s492, %s508
      %p510 = scmp.eq.s32.totalorder %s44, 0
      %p511 = por %p509, %p510
      %p512 = scmp.le.s32.totalorder 1, %s38
      %p513 = scmp.lt.s32.totalorder %s38, 3
      %p514 = pnand %p512, %p513
      %p515 = pneg %p514
      // Predicated region
      $region9: #{tpu_custom_call.1} parent=5 // pred_check
        _
      $region10: #{tpu_custom_call.1} parent=5 // pred_check_branch
        %517 = sbr.rel (%p514) target = $region12
      $region11: #{tpu_custom_call.1} parent=5 // pred_region
        %s518 = ssub.s32 %s38, 1
        // Predicated region
        $region13: #{tpu_custom_call.1} parent=11 // pred_check
          %p519 = pneg %p163
        $region14: #{tpu_custom_call.1} parent=11 // pred_check_branch
          %521 = sbr.rel (%p519) target = $region16
        $region15: #{tpu_custom_call.1} parent=11 // pred_region
          %s523 = ssub.s32 1024, 1024
          %524 = vsyncadd [#allocation9], %s523
          %s525 = sshll.u32 [#allocation8], 4
          %s526 = int_to_ptr.vmem [resolvable:$true] %s525
          %531 = dma.hbm_to_vmem [thread:$0]  %s4, 1024, %s526, [#allocation9], 64, 64, 4
        $region16: #{tpu_custom_call.1} parent=11 // pred_fallthru
          _
        // Predicated region
        $region17: #{tpu_custom_call.1} parent=11 // pred_check
          %p532 = pneg %p184
        $region18: #{tpu_custom_call.1} parent=11 // pred_check_branch
          %534 = sbr.rel (%p532) target = $region20
        $region19: #{tpu_custom_call.1} parent=11 // pred_region
          _
        $region20: #{tpu_custom_call.1} parent=11 // pred_fallthru
          _
        // Predicated region
        $region21: #{tpu_custom_call.1} parent=11 // pred_check
          %p535 = pneg %p205
        $region22: #{tpu_custom_call.1} parent=11 // pred_check_branch
          %537 = sbr.rel (%p535) target = $region24
        $region23: #{tpu_custom_call.1} parent=11 // pred_region
          %s539 = ssub.s32 1024, 1024
          %540 = vsyncadd [#allocation9], %s539
          %s541 = sshll.u32 [#allocation10], 4
          %s542 = int_to_ptr.vmem [resolvable:$true] %s541
          %547 = dma.hbm_to_vmem [thread:$0]  %s6, 1024, %s542, [#allocation9], 64, 64, 4
        $region24: #{tpu_custom_call.1} parent=11 // pred_fallthru
          _
        // Predicated region
        $region25: #{tpu_custom_call.1} parent=11 // pred_check
          %p548 = pneg %p226
        $region26: #{tpu_custom_call.1} parent=11 // pred_check_branch
          %550 = sbr.rel (%p548) target = $region28
        $region27: #{tpu_custom_call.1} parent=11 // pred_region
          _
        $region28: #{tpu_custom_call.1} parent=11 // pred_fallthru
          _
        // Predicated region
        $region29: #{tpu_custom_call.1} parent=11 // pred_check
          %p551 = pneg %p247
        $region30: #{tpu_custom_call.1} parent=11 // pred_check_branch
          %553 = sbr.rel (%p551) target = $region32
        $region31: #{tpu_custom_call.1} parent=11 // pred_region
          %s555 = ssub.s32 1024, 1024
          %556 = vsyncadd [#allocation12], %s555
          %s557 = sshll.u32 [#allocation11], 4
          %s558 = int_to_ptr.vmem [resolvable:$true] %s557
          %563 = dma.hbm_to_vmem [thread:$0]  %s8, 1024, %s558, [#allocation12], 64, 64, 4
        $region32: #{tpu_custom_call.1} parent=11 // pred_fallthru
          _
        // Predicated region
        $region33: #{tpu_custom_call.1} parent=11 // pred_check
          %p564 = pneg %p268
        $region34: #{tpu_custom_call.1} parent=11 // pred_check_branch
          %566 = sbr.rel (%p564) target = $region36
        $region35: #{tpu_custom_call.1} parent=11 // pred_region
          _
        $region36: #{tpu_custom_call.1} parent=11 // pred_fallthru
          _
        // Predicated region
        $region37: #{tpu_custom_call.1} parent=11 // pred_check
          %p567 = pneg %p289
        $region38: #{tpu_custom_call.1} parent=11 // pred_check_branch
          %569 = sbr.rel (%p567) target = $region40
        $region39: #{tpu_custom_call.1} parent=11 // pred_region
          %s571 = ssub.s32 1024, 1024
          %572 = vsyncadd [#allocation12], %s571
          %s573 = sshll.u32 [#allocation13], 4
          %s574 = int_to_ptr.vmem [resolvable:$true] %s573
          %579 = dma.hbm_to_vmem [thread:$0]  %s10, 1024, %s574, [#allocation12], 64, 64, 4
        $region40: #{tpu_custom_call.1} parent=11 // pred_fallthru
          _
        // Predicated region
        $region41: #{tpu_custom_call.1} parent=11 // pred_check
          %p580 = pneg %p310
        $region42: #{tpu_custom_call.1} parent=11 // pred_check_branch
          %582 = sbr.rel (%p580) target = $region44
        $region43: #{tpu_custom_call.1} parent=11 // pred_region
          _
        $region44: #{tpu_custom_call.1} parent=11 // pred_fallthru
          _
        // Predicated region
        $region45: #{tpu_custom_call.1} parent=11 // pred_check
          %p583 = pneg %p331
        $region46: #{tpu_custom_call.1} parent=11 // pred_check_branch
          %585 = sbr.rel (%p583) target = $region48
        $region47: #{tpu_custom_call.1} parent=11 // pred_region
          _
        $region48: #{tpu_custom_call.1} parent=11 // pred_fallthru
          _
        // Predicated region
        $region49: #{tpu_custom_call.1} parent=11 // pred_check
          %p586 = pneg %p352
        $region50: #{tpu_custom_call.1} parent=11 // pred_check_branch
          %588 = sbr.rel (%p586) target = $region52
        $region51: #{tpu_custom_call.1} parent=11 // pred_region
          _
        $region52: #{tpu_custom_call.1} parent=11 // pred_fallthru
          _
        // Predicated region
        $region53: #{tpu_custom_call.1} parent=11 // pred_check
          %p589 = pneg %p373
        $region54: #{tpu_custom_call.1} parent=11 // pred_check_branch
          %591 = sbr.rel (%p589) target = $region56
        $region55: #{tpu_custom_call.1} parent=11 // pred_region
          %s593 = ssub.s32 2048, 2048
          %594 = vsyncadd [#allocation15], %s593
          %s595 = sshll.u32 [#allocation14], 4
          %s596 = int_to_ptr.vmem [resolvable:$true] %s595
          %601 = dma.hbm_to_vmem [thread:$0]  %s14, 2048, %s596, [#allocation15], 128, 128, 8
        $region56: #{tpu_custom_call.1} parent=11 // pred_fallthru
          _
        // Predicated region
        $region57: #{tpu_custom_call.1} parent=11 // pred_check
          %p602 = pneg %p394
        $region58: #{tpu_custom_call.1} parent=11 // pred_check_branch
          %604 = sbr.rel (%p602) target = $region60
        $region59: #{tpu_custom_call.1} parent=11 // pred_region
          _
        $region60: #{tpu_custom_call.1} parent=11 // pred_fallthru
          _
        // Predicated region
        $region61: #{tpu_custom_call.1} parent=11 // pred_check
          %p605 = pneg %p415
        $region62: #{tpu_custom_call.1} parent=11 // pred_check_branch
          %607 = sbr.rel (%p605) target = $region64
        $region63: #{tpu_custom_call.1} parent=11 // pred_region
          %s609 = ssub.s32 2048, 2048
          %610 = vsyncadd [#allocation15], %s609
          %s611 = sshll.u32 [#allocation16], 4
          %s612 = int_to_ptr.vmem [resolvable:$true] %s611
          %617 = dma.hbm_to_vmem [thread:$0]  %s16, 2048, %s612, [#allocation15], 64, 64, 4
        $region64: #{tpu_custom_call.1} parent=11 // pred_fallthru
          _
        // Predicated region
        $region65: #{tpu_custom_call.1} parent=11 // pred_check
          %p618 = pneg %p436
        $region66: #{tpu_custom_call.1} parent=11 // pred_check_branch
          %620 = sbr.rel (%p618) target = $region68
        $region67: #{tpu_custom_call.1} parent=11 // pred_region
          _
        $region68: #{tpu_custom_call.1} parent=11 // pred_fallthru
          _
        // Predicated region
        $region69: #{tpu_custom_call.1} parent=11 // pred_check
          %p621 = pneg %p457
        $region70: #{tpu_custom_call.1} parent=11 // pred_check_branch
          %623 = sbr.rel (%p621) target = $region72
        $region71: #{tpu_custom_call.1} parent=11 // pred_region
          _
        $region72: #{tpu_custom_call.1} parent=11 // pred_fallthru
          _
        // Predicated region
        $region73: #{tpu_custom_call.1} parent=11 // pred_check
          %p624 = pneg %p478
        $region74: #{tpu_custom_call.1} parent=11 // pred_check_branch
          %626 = sbr.rel (%p624) target = $region76
        $region75: #{tpu_custom_call.1} parent=11 // pred_region
          _
        $region76: #{tpu_custom_call.1} parent=11 // pred_fallthru
          _
      $region12: #{tpu_custom_call.1} parent=5 // pred_fallthru
        _
      %p627 = scmp.lt.s32.totalorder %s38, 2
      // Predicated region
      $region77: #{tpu_custom_call.1} parent=5 // pred_check
        %p628 = pneg %p627
      $region78: #{tpu_custom_call.1} parent=5 // pred_check_branch
        %630 = sbr.rel (%p628) target = $region80
      $region79: #{tpu_custom_call.1} parent=5 // pred_region
        // Predicated region
        $region81: #{tpu_custom_call.1} parent=79 // pred_check
          %p631 = pneg %p58
        $region82: #{tpu_custom_call.1} parent=79 // pred_check_branch
          %633 = sbr.rel (%p631) target = $region84
        $region83: #{tpu_custom_call.1} parent=79 // pred_region
          %s634 = sand.u32 %s48, 1
          %s635 = scalar_lea.sflag [#allocation3], %s634
          %s636 = sand.u32 %s48, 1
          %s637 = smul.addr %s636, 32
          %s638 = scalar_lea.vmem [#allocation2], %s637
          %s639 = smul.u32 4, %s38
          %s641 = ssub.s32 512, 512
          %642 = vsyncadd %s635, %s641
          %s643 = smul.addr %s639, 128
          %s644 = scalar_lea.hbm %s0, %s643
          %s645 = sshll.u32 %s638, 4
          %s646 = int_to_ptr.vmem [resolvable:$true] %s645
          %651 = dma.hbm_to_vmem [thread:$0]  %s644, 512, %s646, %s635, 128, 128, 8
        $region84: #{tpu_custom_call.1} parent=79 // pred_fallthru
          _
        // Predicated region
        $region85: #{tpu_custom_call.1} parent=79 // pred_check
          %p652 = pneg %p84
        $region86: #{tpu_custom_call.1} parent=79 // pred_check_branch
          %654 = sbr.rel (%p652) target = $region88
        $region87: #{tpu_custom_call.1} parent=79 // pred_region
          %s655 = sand.u32 %s38, 1
          %s656 = scalar_lea.sflag [#allocation6], %s655
          %s657 = sand.u32 %s74, 1
          %s658 = smul.addr %s657, 64
          %s659 = scalar_lea.vmem [#allocation5], %s658
          %s660 = smul.u32 8, %s38
          %s662 = ssub.s32 1024, 1024
          %663 = vsyncadd %s656, %s662
          %s664 = smul.addr %s660, 128
          %s665 = scalar_lea.hbm %s1, %s664
          %s666 = sshll.u32 %s659, 4
          %s667 = int_to_ptr.vmem [resolvable:$true] %s666
          %672 = dma.hbm_to_vmem [thread:$0]  %s665, 1024, %s667, %s656, 128, 128, 8
        $region88: #{tpu_custom_call.1} parent=79 // pred_fallthru
          _
        // Predicated region
        $region89: #{tpu_custom_call.1} parent=79 // pred_check
          %p673 = pneg %p110
        $region90: #{tpu_custom_call.1} parent=79 // pred_check_branch
          %675 = sbr.rel (%p673) target = $region92
        $region91: #{tpu_custom_call.1} parent=79 // pred_region
          %s676 = sand.u32 %s38, 1
          %s677 = scalar_lea.sflag [#allocation6], %s676
          %s678 = sand.u32 %s100, 1
          %s679 = smul.addr %s678, 64
          %s680 = scalar_lea.vmem [#allocation7], %s679
          %s681 = smul.u32 8, %s38
          %s683 = ssub.s32 1024, 1024
          %684 = vsyncadd %s677, %s683
          %s685 = smul.addr %s681, 128
          %s686 = scalar_lea.hbm %s2, %s685
          %s687 = sshll.u32 %s680, 4
          %s688 = int_to_ptr.vmem [resolvable:$true] %s687
          %693 = dma.hbm_to_vmem [thread:$0]  %s686, 1024, %s688, %s677, 128, 128, 8
        $region92: #{tpu_custom_call.1} parent=79 // pred_fallthru
          _
        // Predicated region
        $region93: #{tpu_custom_call.1} parent=79 // pred_check
          %p694 = pneg %p136
        $region94: #{tpu_custom_call.1} parent=79 // pred_check_branch
          %696 = sbr.rel (%p694) target = $region96
        $region95: #{tpu_custom_call.1} parent=79 // pred_region
          %s697 = smul.u32 2, %s38
          %p698 = scmp.lt.s32.totalorder %s697, 3
          %s699 = scalar_select %p698, %s697, 3
          %s700 = scalar_lea.vmem %s3, %s699
          %s701 = smul.u32 2, %s38
        $region96: #{tpu_custom_call.1} parent=79 // pred_fallthru
          _
      $region80: #{tpu_custom_call.1} parent=5 // pred_fallthru
        _
      %p702 = scmp.le.s32.totalorder 1, %s38
      %p703 = scmp.lt.s32.totalorder %s38, 3
      %p704 = pnand %p702, %p703
      %p705 = pneg %p704
      // Predicated region
      $region97: #{tpu_custom_call.1} parent=5 // pred_check
        _
      $region98: #{tpu_custom_call.1} parent=5 // pred_check_branch
        %707 = sbr.rel (%p704) target = $region100
      $region99: #{tpu_custom_call.1} parent=5 // pred_region
        %s708 = ssub.s32 %s38, 1
        %s709 = sand.u32 %s51, 1
        %s710 = scalar_lea.sflag [#allocation3], %s709
        %s711 = sand.u32 %s51, 1
        %s712 = smul.addr %s711, 32
        %s713 = scalar_lea.vmem [#allocation2], %s712
        // Predicated region
        $region101: #{tpu_custom_call.1} parent=99 // pred_check
          %p714 = pneg %p64
        $region102: #{tpu_custom_call.1} parent=99 // pred_check_branch
          %716 = sbr.rel (%p714) target = $region104
        $region103: #{tpu_custom_call.1} parent=99 // pred_region
          %717 = dma.done %s710, 512
        $region104: #{tpu_custom_call.1} parent=99 // pred_fallthru
          _
        %s718 = sand.u32 %s43, 1
        %s719 = scalar_lea.sflag [#allocation6], %s718
        %s720 = sand.u32 %s77, 1
        %s721 = smul.addr %s720, 64
        %s722 = scalar_lea.vmem [#allocation5], %s721
        // Predicated region
        $region105: #{tpu_custom_call.1} parent=99 // pred_check
          %p723 = pneg %p90
        $region106: #{tpu_custom_call.1} parent=99 // pred_check_branch
          %725 = sbr.rel (%p723) target = $region108
        $region107: #{tpu_custom_call.1} parent=99 // pred_region
          %726 = dma.done %s719, 1024
        $region108: #{tpu_custom_call.1} parent=99 // pred_fallthru
          _
        %s727 = sand.u32 %s43, 1
        %s728 = scalar_lea.sflag [#allocation6], %s727
        %s729 = sand.u32 %s103, 1
        %s730 = smul.addr %s729, 64
        %s731 = scalar_lea.vmem [#allocation7], %s730
        // Predicated region
        $region109: #{tpu_custom_call.1} parent=99 // pred_check
          %p732 = pneg %p116
        $region110: #{tpu_custom_call.1} parent=99 // pred_check_branch
          %734 = sbr.rel (%p732) target = $region112
        $region111: #{tpu_custom_call.1} parent=99 // pred_region
          %735 = dma.done %s728, 1024
        $region112: #{tpu_custom_call.1} parent=99 // pred_fallthru
          _
        // Predicated region
        $region113: #{tpu_custom_call.1} parent=99 // pred_check
          %p736 = pneg %p163
        $region114: #{tpu_custom_call.1} parent=99 // pred_check_branch
          %738 = sbr.rel (%p736) target = $region116
        $region115: #{tpu_custom_call.1} parent=99 // pred_region
          %739 = dma.done [#allocation9], 1024
        $region116: #{tpu_custom_call.1} parent=99 // pred_fallthru
          _
        // Predicated region
        $region117: #{tpu_custom_call.1} parent=99 // pred_check
          %p740 = pneg %p205
        $region118: #{tpu_custom_call.1} parent=99 // pred_check_branch
          %742 = sbr.rel (%p740) target = $region120
        $region119: #{tpu_custom_call.1} parent=99 // pred_region
          %743 = dma.done [#allocation9], 1024
        $region120: #{tpu_custom_call.1} parent=99 // pred_fallthru
          _
        // Predicated region
        $region121: #{tpu_custom_call.1} parent=99 // pred_check
          %p744 = pneg %p247
        $region122: #{tpu_custom_call.1} parent=99 // pred_check_branch
          %746 = sbr.rel (%p744) target = $region124
        $region123: #{tpu_custom_call.1} parent=99 // pred_region
          %747 = dma.done [#allocation12], 1024
        $region124: #{tpu_custom_call.1} parent=99 // pred_fallthru
          _
        // Predicated region
        $region125: #{tpu_custom_call.1} parent=99 // pred_check
          %p748 = pneg %p289
        $region126: #{tpu_custom_call.1} parent=99 // pred_check_branch
          %750 = sbr.rel (%p748) target = $region128
        $region127: #{tpu_custom_call.1} parent=99 // pred_region
          %751 = dma.done [#allocation12], 1024
        $region128: #{tpu_custom_call.1} parent=99 // pred_fallthru
          _
        // Predicated region
        $region129: #{tpu_custom_call.1} parent=99 // pred_check
          %p752 = pneg %p373
        $region130: #{tpu_custom_call.1} parent=99 // pred_check_branch
          %754 = sbr.rel (%p752) target = $region132
        $region131: #{tpu_custom_call.1} parent=99 // pred_region
          %755 = dma.done [#allocation15], 2048
        $region132: #{tpu_custom_call.1} parent=99 // pred_fallthru
          _
        // Predicated region
        $region133: #{tpu_custom_call.1} parent=99 // pred_check
          %p756 = pneg %p415
        $region134: #{tpu_custom_call.1} parent=99 // pred_check_branch
          %758 = sbr.rel (%p756) target = $region136
        $region135: #{tpu_custom_call.1} parent=99 // pred_region
          %759 = dma.done [#allocation15], 2048
        $region136: #{tpu_custom_call.1} parent=99 // pred_fallthru
          _
        %s760 = sand.u32 %s51, 1
        %s761 = scalar_lea.sflag [#allocation3], %s760
        %s762 = sand.u32 %s51, 1
        %s763 = smul.addr %s762, 32
        %s764 = scalar_lea.vmem [#allocation2], %s763
        %p765 = pneg %p64
        %p766 = pneg %p61
        %s767 = sand.u32 %s43, 1
        %s768 = scalar_lea.sflag [#allocation6], %s767
        %s769 = sand.u32 %s77, 1
        %s770 = smul.addr %s769, 64
        %s771 = scalar_lea.vmem [#allocation5], %s770
        %p772 = pneg %p90
        %p773 = pneg %p87
        %s774 = sand.u32 %s43, 1
        %s775 = scalar_lea.sflag [#allocation6], %s774
        %s776 = sand.u32 %s103, 1
        %s777 = smul.addr %s776, 64
        %s778 = scalar_lea.vmem [#allocation7], %s777
        %p779 = pneg %p116
        %p780 = pneg %p113
        %s781 = smul.u32 2, %s43
        %p782 = scmp.lt.s32.totalorder %s781, 3
        %s783 = scalar_select %p782, %s781, 3
        %s784 = scalar_lea.vmem %s3, %s783
        %p785 = pneg %p142
        %p786 = pneg %p139
        %p787 = pneg %p163
        %p788 = pneg %p160
        %p789 = pneg %p184
        %p790 = pneg %p181
        %p791 = pneg %p205
        %p792 = pneg %p202
        %p793 = pneg %p226
        %p794 = pneg %p223
        %p795 = pneg %p247
        %p796 = pneg %p244
        %p797 = pneg %p268
        %p798 = pneg %p265
        %p799 = pneg %p289
        %p800 = pneg %p286
        %p801 = pneg %p310
        %p802 = pneg %p307
        %p803 = pneg %p331
        %p804 = pneg %p328
        %p805 = pneg %p352
        %p806 = pneg %p349
        %p807 = pneg %p373
        %p808 = pneg %p370
        %p809 = pneg %p394
        %p810 = pneg %p391
        %p811 = pneg %p415
        %p812 = pneg %p412
        %p813 = pneg %p436
        %p814 = pneg %p433
        %p815 = pneg %p457
        %p816 = pneg %p454
        %p817 = pneg %p478
        %p818 = pneg %p475
        %p819 = pneg %p504
        %p820 = pneg %p501
        %s821 = sand.u32 %s491, 1
        %s822 = scalar_lea.sflag [#allocation4], %s821
        %s823 = sand.u32 %s491, 1
        %s824 = smul.addr %s823, 32
        %s825 = scalar_lea.vmem [#allocation17], %s824
        %s826 = smul.u32 4, %s43
        %s827 = smul.u32 8, %s43
        %s828 = smul.u32 8, %s43
        %s829 = smul.u32 2, %s43
        %p830 = scmp.lt.s32.totalorder %s829, 3
        %s831 = scalar_select %p830, %s829, 3
        %s832 = scalar_lea.vmem %s3, %s831
        %s833 = smul.u32 2, %s43
        %s834 = smul.u32 4, %s43
        %v836 = vld [vmem:[%s713] sm:$0xff]
        %v837 = vld [vmem:[%s713 + $0x8] sm:$0xff]
        %v838 = vld [vmem:[%s713 + $0x10] sm:$0xff]
        %v839 = vld [vmem:[%s713 + $0x18] sm:$0xff]
        %v840 = vld [vmem:[%s722] sm:$0xff]
        %v841 = vld [vmem:[%s722 + $0x8] sm:$0xff]
        %v842 = vld [vmem:[%s722 + $0x10] sm:$0xff]
        %v843 = vld [vmem:[%s722 + $0x18] sm:$0xff]
        %v844 = vld [vmem:[%s722 + $0x20] sm:$0xff]
        %v845 = vld [vmem:[%s722 + $0x28] sm:$0xff]
        %v846 = vld [vmem:[%s722 + $0x30] sm:$0xff]
        %v847 = vld [vmem:[%s722 + $0x38] sm:$0xff]
        %v848 = vld [vmem:[%s731] sm:$0xff]
        %v849 = vld [vmem:[%s731 + $0x8] sm:$0xff]
        %v850 = vld [vmem:[%s731 + $0x10] sm:$0xff]
        %v851 = vld [vmem:[%s731 + $0x18] sm:$0xff]
        %v852 = vld [vmem:[%s731 + $0x20] sm:$0xff]
        %v853 = vld [vmem:[%s731 + $0x28] sm:$0xff]
        %v854 = vld [vmem:[%s731 + $0x30] sm:$0xff]
        %v855 = vld [vmem:[%s731 + $0x38] sm:$0xff]
        %v856 = vpack.c.bf16 %v837, %v836
        %v857 = vpack.c.bf16 %v839, %v838
        %v858 = vld [vmem:[#allocation8] sm:$0xf]
        %v859 = vld [vmem:[#allocation8 + $0x4] sm:$0xf]
        %v860 = vld [vmem:[#allocation8 + $0x8] sm:$0xf]
        %v861 = vld [vmem:[#allocation8 + $0xc] sm:$0xf]
        %v862 = vld [vmem:[#allocation8 + $0x10] sm:$0xf]
        %v863 = vld [vmem:[#allocation8 + $0x14] sm:$0xf]
        %v864 = vld [vmem:[#allocation8 + $0x18] sm:$0xf]
        %v865 = vld [vmem:[#allocation8 + $0x1c] sm:$0xf]
        %v866 = vld [vmem:[#allocation8 + $0x20] sm:$0xf]
        %v867 = vld [vmem:[#allocation8 + $0x24] sm:$0xf]
        %v868 = vld [vmem:[#allocation8 + $0x28] sm:$0xf]
        %v869 = vld [vmem:[#allocation8 + $0x2c] sm:$0xf]
        %v870 = vld [vmem:[#allocation8 + $0x30] sm:$0xf]
        %v871 = vld [vmem:[#allocation8 + $0x34] sm:$0xf]
        %v872 = vld [vmem:[#allocation8 + $0x38] sm:$0xf]
        %v873 = vld [vmem:[#allocation8 + $0x3c] sm:$0xf]
        %v874 = vld [vmem:[%s5] sm:$0x1]
        %v876 = vlaneseq
        %v877 = vshrl.u32 %v876, 7
        %v878 = vsub.s32 0, %v877
        %v879 = vrot.slane %v874, %v878
        %v897 = vunpack.c.l.b16 %v858
        %v898 = vunpack.c.l.b16 %v859
        %v899 = vunpack.c.l.b16 %v860
        %v900 = vunpack.c.l.b16 %v861
        %v901 = vunpack.c.l.b16 %v862
        %v902 = vunpack.c.l.b16 %v863
        %v903 = vunpack.c.l.b16 %v864
        %v904 = vunpack.c.l.b16 %v865
        %v905 = vunpack.c.l.b16 %v866
        %v906 = vunpack.c.l.b16 %v867
        %v907 = vunpack.c.l.b16 %v868
        %v908 = vunpack.c.l.b16 %v869
        %v909 = vunpack.c.l.b16 %v870
        %v910 = vunpack.c.l.b16 %v871
        %v911 = vunpack.c.l.b16 %v872
        %v912 = vunpack.c.l.b16 %v873
        %v913 = vpack.c.b16 %v898, %v897
        %v914 = vpack.c.b16 %v900, %v899
        %v915 = vpack.c.b16 %v902, %v901
        %v916 = vpack.c.b16 %v904, %v903
        %v917 = vpack.c.b16 %v906, %v905
        %v918 = vpack.c.b16 %v908, %v907
        %v919 = vpack.c.b16 %v910, %v909
        %v920 = vpack.c.b16 %v912, %v911
        %929 = vmatprep.subr.bf16.mxu0 0
        %930 = vmatpush1.bf16.msra.mxu0 %v920
        %931 = vmatprep.subr.bf16.mxu0 0
        %932 = vmatpush1.bf16.msra.mxu0 %v919
        %933 = vmatprep.subr.bf16.mxu0 0
        %934 = vmatpush1.bf16.msra.mxu0 %v918
        %935 = vmatprep.subr.bf16.mxu0 0
        %936 = vmatpush1.bf16.msra.mxu0 %v917
        %937 = vmatprep.subr.bf16.mxu0 0
        %938 = vmatpush1.bf16.msra.mxu0 %v916
        %939 = vmatprep.subr.bf16.mxu0 0
        %940 = vmatpush1.bf16.msra.mxu0 %v915
        %941 = vmatprep.subr.bf16.mxu0 0
        %942 = vmatpush1.bf16.msra.mxu0 %v914
        %943 = vmatprep.subr.bf16.mxu0 0
        %944 = vmatpush1.bf16.msra.mxu0 %v913
        %945 = vmatprep.subr.bf16.mxu0 0
        %946 = vmatpush2.bf16.msra.mxu0 0
        %947 = vmatprep.subr.bf16.mxu0 0
        %948 = vmatpush2.bf16.msra.mxu0 0
        %949 = vmatprep.subr.bf16.mxu0 0
        %950 = vmatpush2.bf16.msra.mxu0 0
        %951 = vmatprep.subr.bf16.mxu0 0
        %952 = vmatpush2.bf16.msra.mxu0 0
        %953 = vmatprep.subr.bf16.mxu0 0
        %954 = vmatpush2.bf16.msra.mxu0 0
        %955 = vmatprep.subr.bf16.mxu0 0
        %956 = vmatpush2.bf16.msra.mxu0 0
        %957 = vmatprep.subr.bf16.mxu0 0
        %958 = vmatpush2.bf16.msra.mxu0 0
        %959 = vmatprep.subr.bf16.mxu0 0
        %960 = vmatpush2.bf16.msra.mxu0 0
        %961 = vmatprep.mubr.bf16.mxu0 0
        %962 = vmatmul.mubr.bf16.gmra.mxu0 %v856
        %v963 = vpop.f32.mrf.mxu0
        %v964 = vadd.f32 %v879, %v963
        %v965 = vpop.f32.mrf.mxu0
        %v966 = vpop.f32.mrf.mxu0
        %v967 = vadd.f32 %v879, %v966
        %v968 = vpop.f32.mrf.mxu0
        %969 = vmatprep.mubr.bf16.mxu0 0
        %970 = vmatmul.mubr.bf16.gmra.mxu0 %v857
        %v971 = vpop.f32.mrf.mxu0
        %v972 = vadd.f32 %v879, %v971
        %v973 = vpop.f32.mrf.mxu0
        %v974 = vpop.f32.mrf.mxu0
        %v975 = vadd.f32 %v879, %v974
        %v976 = vpop.f32.mrf.mxu0
        %977 = vdwg.mxu0
        %v978 = vpack.c.bf16 %v841, %v840
        %v979 = vpack.c.bf16 %v843, %v842
        %v980 = vpack.c.bf16 %v845, %v844
        %v981 = vpack.c.bf16 %v847, %v846
        %v982 = vld [vmem:[#allocation10] sm:$0xf]
        %v983 = vld [vmem:[#allocation10 + $0x4] sm:$0xf]
        %v984 = vld [vmem:[#allocation10 + $0x8] sm:$0xf]
        %v985 = vld [vmem:[#allocation10 + $0xc] sm:$0xf]
        %v986 = vld [vmem:[#allocation10 + $0x10] sm:$0xf]
        %v987 = vld [vmem:[#allocation10 + $0x14] sm:$0xf]
        %v988 = vld [vmem:[#allocation10 + $0x18] sm:$0xf]
        %v989 = vld [vmem:[#allocation10 + $0x1c] sm:$0xf]
        %v990 = vld [vmem:[#allocation10 + $0x20] sm:$0xf]
        %v991 = vld [vmem:[#allocation10 + $0x24] sm:$0xf]
        %v992 = vld [vmem:[#allocation10 + $0x28] sm:$0xf]
        %v993 = vld [vmem:[#allocation10 + $0x2c] sm:$0xf]
        %v994 = vld [vmem:[#allocation10 + $0x30] sm:$0xf]
        %v995 = vld [vmem:[#allocation10 + $0x34] sm:$0xf]
        %v996 = vld [vmem:[#allocation10 + $0x38] sm:$0xf]
        %v997 = vld [vmem:[#allocation10 + $0x3c] sm:$0xf]
        %v998 = vld [vmem:[%s7] sm:$0x1]
        %v1000 = vlaneseq
        %v1001 = vshrl.u32 %v1000, 7
        %v1002 = vsub.s32 0, %v1001
        %v1003 = vrot.slane %v998, %v1002
        %v1021 = vunpack.c.l.b16 %v982
        %v1022 = vunpack.c.l.b16 %v983
        %v1023 = vunpack.c.l.b16 %v984
        %v1024 = vunpack.c.l.b16 %v985
        %v1025 = vunpack.c.l.b16 %v986
        %v1026 = vunpack.c.l.b16 %v987
        %v1027 = vunpack.c.l.b16 %v988
        %v1028 = vunpack.c.l.b16 %v989
        %v1029 = vunpack.c.l.b16 %v990
        %v1030 = vunpack.c.l.b16 %v991
        %v1031 = vunpack.c.l.b16 %v992
        %v1032 = vunpack.c.l.b16 %v993
        %v1033 = vunpack.c.l.b16 %v994
        %v1034 = vunpack.c.l.b16 %v995
        %v1035 = vunpack.c.l.b16 %v996
        %v1036 = vunpack.c.l.b16 %v997
        %v1037 = vpack.c.b16 %v1022, %v1021
        %v1038 = vpack.c.b16 %v1024, %v1023
        %v1039 = vpack.c.b16 %v1026, %v1025
        %v1040 = vpack.c.b16 %v1028, %v1027
        %v1041 = vpack.c.b16 %v1030, %v1029
        %v1042 = vpack.c.b16 %v1032, %v1031
        %v1043 = vpack.c.b16 %v1034, %v1033
        %v1044 = vpack.c.b16 %v1036, %v1035
        %1053 = vmatprep.subr.bf16.mxu0 0
        %1054 = vmatpush1.bf16.msra.mxu0 %v1044
        %1055 = vmatprep.subr.bf16.mxu0 0
        %1056 = vmatpush1.bf16.msra.mxu0 %v1043
        %1057 = vmatprep.subr.bf16.mxu0 0
        %1058 = vmatpush1.bf16.msra.mxu0 %v1042
        %1059 = vmatprep.subr.bf16.mxu0 0
        %1060 = vmatpush1.bf16.msra.mxu0 %v1041
        %1061 = vmatprep.subr.bf16.mxu0 0
        %1062 = vmatpush1.bf16.msra.mxu0 %v1040
        %1063 = vmatprep.subr.bf16.mxu0 0
        %1064 = vmatpush1.bf16.msra.mxu0 %v1039
        %1065 = vmatprep.subr.bf16.mxu0 0
        %1066 = vmatpush1.bf16.msra.mxu0 %v1038
        %1067 = vmatprep.subr.bf16.mxu0 0
        %1068 = vmatpush1.bf16.msra.mxu0 %v1037
        %1069 = vmatprep.subr.bf16.mxu0 0
        %1070 = vmatpush2.bf16.msra.mxu0 0
        %1071 = vmatprep.subr.bf16.mxu0 0
        %1072 = vmatpush2.bf16.msra.mxu0 0
        %1073 = vmatprep.subr.bf16.mxu0 0
        %1074 = vmatpush2.bf16.msra.mxu0 0
        %1075 = vmatprep.subr.bf16.mxu0 0
        %1076 = vmatpush2.bf16.msra.mxu0 0
        %1077 = vmatprep.subr.bf16.mxu0 0
        %1078 = vmatpush2.bf16.msra.mxu0 0
        %1079 = vmatprep.subr.bf16.mxu0 0
        %1080 = vmatpush2.bf16.msra.mxu0 0
        %1081 = vmatprep.subr.bf16.mxu0 0
        %1082 = vmatpush2.bf16.msra.mxu0 0
        %1083 = vmatprep.subr.bf16.mxu0 0
        %1084 = vmatpush2.bf16.msra.mxu0 0
        %1085 = vmatprep.mubr.bf16.mxu0 0
        %1086 = vmatmul.mubr.bf16.gmra.mxu0 %v978
        %v1087 = vpop.f32.mrf.mxu0
        %v1088 = vadd.f32 %v1003, %v1087
        %v1089 = vpop.f32.mrf.mxu0
        %v1090 = vpop.f32.mrf.mxu0
        %v1091 = vadd.f32 %v1003, %v1090
        %v1092 = vpop.f32.mrf.mxu0
        %1093 = vmatprep.mubr.bf16.mxu0 0
        %1094 = vmatmul.mubr.bf16.gmra.mxu0 %v979
        %v1095 = vpop.f32.mrf.mxu0
        %v1096 = vadd.f32 %v1003, %v1095
        %v1097 = vpop.f32.mrf.mxu0
        %v1098 = vpop.f32.mrf.mxu0
        %v1099 = vadd.f32 %v1003, %v1098
        %v1100 = vpop.f32.mrf.mxu0
        %1101 = vmatprep.mubr.bf16.mxu0 0
        %1102 = vmatmul.mubr.bf16.gmra.mxu0 %v980
        %v1103 = vpop.f32.mrf.mxu0
        %v1104 = vadd.f32 %v1003, %v1103
        %v1105 = vpop.f32.mrf.mxu0
        %v1106 = vpop.f32.mrf.mxu0
        %v1107 = vadd.f32 %v1003, %v1106
        %v1108 = vpop.f32.mrf.mxu0
        %1109 = vmatprep.mubr.bf16.mxu0 0
        %1110 = vmatmul.mubr.bf16.gmra.mxu0 %v981
        %v1111 = vpop.f32.mrf.mxu0
        %v1112 = vadd.f32 %v1003, %v1111
        %v1113 = vpop.f32.mrf.mxu0
        %v1114 = vpop.f32.mrf.mxu0
        %v1115 = vadd.f32 %v1003, %v1114
        %v1116 = vpop.f32.mrf.mxu0
        %1117 = vdwg.mxu0
        %v1118 = vpack.c.bf16 %v849, %v848
        %v1119 = vpack.c.bf16 %v851, %v850
        %v1120 = vpack.c.bf16 %v853, %v852
        %v1121 = vpack.c.bf16 %v855, %v854
        %v1122 = vld [vmem:[#allocation11] sm:$0xf]
        %v1123 = vld [vmem:[#allocation11 + $0x4] sm:$0xf]
        %v1124 = vld [vmem:[#allocation11 + $0x8] sm:$0xf]
        %v1125 = vld [vmem:[#allocation11 + $0xc] sm:$0xf]
        %v1126 = vld [vmem:[#allocation11 + $0x10] sm:$0xf]
        %v1127 = vld [vmem:[#allocation11 + $0x14] sm:$0xf]
        %v1128 = vld [vmem:[#allocation11 + $0x18] sm:$0xf]
        %v1129 = vld [vmem:[#allocation11 + $0x1c] sm:$0xf]
        %v1130 = vld [vmem:[#allocation11 + $0x20] sm:$0xf]
        %v1131 = vld [vmem:[#allocation11 + $0x24] sm:$0xf]
        %v1132 = vld [vmem:[#allocation11 + $0x28] sm:$0xf]
        %v1133 = vld [vmem:[#allocation11 + $0x2c] sm:$0xf]
        %v1134 = vld [vmem:[#allocation11 + $0x30] sm:$0xf]
        %v1135 = vld [vmem:[#allocation11 + $0x34] sm:$0xf]
        %v1136 = vld [vmem:[#allocation11 + $0x38] sm:$0xf]
        %v1137 = vld [vmem:[#allocation11 + $0x3c] sm:$0xf]
        %v1138 = vld [vmem:[%s9] sm:$0x1]
        %v1140 = vlaneseq
        %v1141 = vshrl.u32 %v1140, 7
        %v1142 = vsub.s32 0, %v1141
        %v1143 = vrot.slane %v1138, %v1142
        %v1161 = vunpack.c.l.b16 %v1122
        %v1162 = vunpack.c.l.b16 %v1123
        %v1163 = vunpack.c.l.b16 %v1124
        %v1164 = vunpack.c.l.b16 %v1125
        %v1165 = vunpack.c.l.b16 %v1126
        %v1166 = vunpack.c.l.b16 %v1127
        %v1167 = vunpack.c.l.b16 %v1128
        %v1168 = vunpack.c.l.b16 %v1129
        %v1169 = vunpack.c.l.b16 %v1130
        %v1170 = vunpack.c.l.b16 %v1131
        %v1171 = vunpack.c.l.b16 %v1132
        %v1172 = vunpack.c.l.b16 %v1133
        %v1173 = vunpack.c.l.b16 %v1134
        %v1174 = vunpack.c.l.b16 %v1135
        %v1175 = vunpack.c.l.b16 %v1136
        %v1176 = vunpack.c.l.b16 %v1137
        %v1177 = vpack.c.b16 %v1162, %v1161
        %v1178 = vpack.c.b16 %v1164, %v1163
        %v1179 = vpack.c.b16 %v1166, %v1165
        %v1180 = vpack.c.b16 %v1168, %v1167
        %v1181 = vpack.c.b16 %v1170, %v1169
        %v1182 = vpack.c.b16 %v1172, %v1171
        %v1183 = vpack.c.b16 %v1174, %v1173
        %v1184 = vpack.c.b16 %v1176, %v1175
        %1193 = vmatprep.subr.bf16.mxu0 0
        %1194 = vmatpush1.bf16.msra.mxu0 %v1184
        %1195 = vmatprep.subr.bf16.mxu0 0
        %1196 = vmatpush1.bf16.msra.mxu0 %v1183
        %1197 = vmatprep.subr.bf16.mxu0 0
        %1198 = vmatpush1.bf16.msra.mxu0 %v1182
        %1199 = vmatprep.subr.bf16.mxu0 0
        %1200 = vmatpush1.bf16.msra.mxu0 %v1181
        %1201 = vmatprep.subr.bf16.mxu0 0
        %1202 = vmatpush1.bf16.msra.mxu0 %v1180
        %1203 = vmatprep.subr.bf16.mxu0 0
        %1204 = vmatpush1.bf16.msra.mxu0 %v1179
        %1205 = vmatprep.subr.bf16.mxu0 0
        %1206 = vmatpush1.bf16.msra.mxu0 %v1178
        %1207 = vmatprep.subr.bf16.mxu0 0
        %1208 = vmatpush1.bf16.msra.mxu0 %v1177
        %1209 = vmatprep.subr.bf16.mxu0 0
        %1210 = vmatpush2.bf16.msra.mxu0 0
        %1211 = vmatprep.subr.bf16.mxu0 0
        %1212 = vmatpush2.bf16.msra.mxu0 0
        %1213 = vmatprep.subr.bf16.mxu0 0
        %1214 = vmatpush2.bf16.msra.mxu0 0
        %1215 = vmatprep.subr.bf16.mxu0 0
        %1216 = vmatpush2.bf16.msra.mxu0 0
        %1217 = vmatprep.subr.bf16.mxu0 0
        %1218 = vmatpush2.bf16.msra.mxu0 0
        %1219 = vmatprep.subr.bf16.mxu0 0
        %1220 = vmatpush2.bf16.msra.mxu0 0
        %1221 = vmatprep.subr.bf16.mxu0 0
        %1222 = vmatpush2.bf16.msra.mxu0 0
        %1223 = vmatprep.subr.bf16.mxu0 0
        %1224 = vmatpush2.bf16.msra.mxu0 0
        %1225 = vmatprep.mubr.bf16.mxu0 0
        %1226 = vmatmul.mubr.bf16.gmra.mxu0 %v1118
        %v1227 = vpop.f32.mrf.mxu0
        %v1228 = vadd.f32 %v1143, %v1227
        %v1229 = vpop.f32.mrf.mxu0
        %v1230 = vpop.f32.mrf.mxu0
        %v1231 = vadd.f32 %v1143, %v1230
        %v1232 = vpop.f32.mrf.mxu0
        %1233 = vmatprep.mubr.bf16.mxu0 0
        %1234 = vmatmul.mubr.bf16.gmra.mxu0 %v1119
        %v1235 = vpop.f32.mrf.mxu0
        %v1236 = vadd.f32 %v1143, %v1235
        %v1237 = vpop.f32.mrf.mxu0
        %v1238 = vpop.f32.mrf.mxu0
        %v1239 = vadd.f32 %v1143, %v1238
        %v1240 = vpop.f32.mrf.mxu0
        %1241 = vmatprep.mubr.bf16.mxu0 0
        %1242 = vmatmul.mubr.bf16.gmra.mxu0 %v1120
        %v1243 = vpop.f32.mrf.mxu0
        %v1244 = vadd.f32 %v1143, %v1243
        %v1245 = vpop.f32.mrf.mxu0
        %v1246 = vpop.f32.mrf.mxu0
        %v1247 = vadd.f32 %v1143, %v1246
        %v1248 = vpop.f32.mrf.mxu0
        %1249 = vmatprep.mubr.bf16.mxu0 0
        %1250 = vmatmul.mubr.bf16.gmra.mxu0 %v1121
        %v1251 = vpop.f32.mrf.mxu0
        %v1252 = vadd.f32 %v1143, %v1251
        %v1253 = vpop.f32.mrf.mxu0
        %v1254 = vpop.f32.mrf.mxu0
        %v1255 = vadd.f32 %v1143, %v1254
        %v1256 = vpop.f32.mrf.mxu0
        %1257 = vdwg.mxu0
        %v1258 = vpack.c.bf16 %v967, %v964
        %v1259 = vpack.c.bf16 %v975, %v972
        %v1260 = vpack.c.bf16 %v1091, %v1088
        %v1261 = vpack.c.bf16 %v1099, %v1096
        %v1262 = vpack.c.bf16 %v1107, %v1104
        %v1263 = vpack.c.bf16 %v1115, %v1112
        %v1264 = vpack.c.bf16 %v1231, %v1228
        %v1265 = vpack.c.bf16 %v1239, %v1236
        %v1266 = vpack.c.bf16 %v1247, %v1244
        %v1267 = vpack.c.bf16 %v1255, %v1252
        %v1268 = vld [vmem:[%s832] sm:$0x1]
        %v1270 = vlaneseq
        %v1271 = vshrl.u32 %v1270, 7
        %v1272 = vsub.s32 0, %v1271
        %v1273 = vrot.slane %v1268, %v1272
        %vm1275 = vcmask 261120
        %v1277 = vsel %vm1275, %v1258, 0
        %v1280 = vsel %vm1275, %v1260, 0
        %v1283 = vsel %vm1275, %v1261, 0
        %1285 = vmatprep.subr.bf16.mxu0 0
        %1286 = vmatpush1.bf16.xpose.msra.mxu0 0
        %1287 = vmatprep.subr.bf16.mxu0 0
        %1288 = vmatpush1.bf16.xpose.msra.mxu0 0
        %1289 = vmatprep.subr.bf16.mxu0 0
        %1290 = vmatpush1.bf16.xpose.msra.mxu0 0
        %1291 = vmatprep.subr.bf16.mxu0 0
        %1292 = vmatpush1.bf16.xpose.msra.mxu0 0
        %1293 = vmatprep.subr.bf16.mxu0 0
        %1294 = vmatpush1.bf16.xpose.msra.mxu0 0
        %1295 = vmatprep.subr.bf16.mxu0 0
        %1296 = vmatpush1.bf16.xpose.msra.mxu0 0
        %1297 = vmatprep.subr.bf16.mxu0 0
        %1298 = vmatpush1.bf16.xpose.msra.mxu0 %v1283
        %1299 = vmatprep.subr.bf16.mxu0 0
        %1300 = vmatpush1.bf16.xpose.msra.mxu0 %v1280
        %1301 = vmatprep.subr.bf16.mxu0 0
        %1302 = vmatpush2.bf16.xpose.msra.mxu0 0
        %1303 = vmatprep.subr.bf16.mxu0 0
        %1304 = vmatpush2.bf16.xpose.msra.mxu0 0
        %1305 = vmatprep.subr.bf16.mxu0 0
        %1306 = vmatpush2.bf16.xpose.msra.mxu0 0
        %1307 = vmatprep.subr.bf16.mxu0 0
        %1308 = vmatpush2.bf16.xpose.msra.mxu0 0
        %1309 = vmatprep.subr.bf16.mxu0 0
        %1310 = vmatpush2.bf16.xpose.msra.mxu0 0
        %1311 = vmatprep.subr.bf16.mxu0 0
        %1312 = vmatpush2.bf16.xpose.msra.mxu0 0
        %1313 = vmatprep.subr.bf16.mxu0 0
        %1314 = vmatpush2.bf16.xpose.msra.mxu0 0
        %1315 = vmatprep.subr.bf16.mxu0 0
        %1316 = vmatpush2.bf16.xpose.msra.mxu0 0
        %1317 = vmatprep.mubr.bf16.mxu0 0
        %1318 = vmatmul.mubr.bf16.gmra.mxu0 %v1277
        %v1319 = vpop.f32.mrf.mxu0
        %v1320 = vadd.f32 %v1273, %v1319
        %v1321 = vpop.f32.mrf.mxu0
        %v1322 = vpop.f32.mrf.mxu0
        %v1323 = vadd.f32 %v1273, %v1322
        %v1324 = vpop.f32.mrf.mxu0
        %1325 = vdwg.mxu0
        %v1326 = vsel %vm1275, %v1320, -inf
        %1327 = vmax.xlane.f32.xlu0 %v1326
        %v1328 = vpop.xlane.xlu0 %1327
        %v1329 = vsel %vm1275, %v1323, -inf
        %1330 = vmax.xlane.f32.xlu0 %v1329
        %v1331 = vpop.xlane.xlu0 %1330
        %v1332 = vsub.f32 %v1320, %v1328
        %v1333 = vsub.f32 %v1323, %v1331
        %v1334 = vmul.f32 %v1332, 1.442695
        %v1335 = vpow.pop %v1334
        %v1336 = vmul.f32 %v1333, 1.442695
        %v1337 = vpow.pop %v1336
        %v1338 = vsel %vm1275, %v1335, 0.0
        %1339 = vadd.xlane.f32.xlu0 %v1338
        %v1340 = vpop.xlane.xlu0 %1339
        %v1341 = vsel %vm1275, %v1337, 0.0
        %1342 = vadd.xlane.f32.xlu0 %v1341
        %v1343 = vpop.xlane.xlu0 %1342
        %v1344 = vrcp.pop %v1340
        %v1345 = vrcp.pop %v1343
        %v1346 = vmul.f32 %v1335, %v1344
        %v1347 = vmul.f32 %v1337, %v1345
        %v1348 = vpack.c.bf16 %v1347, %v1346
        %v1350 = vsel %vm1275, %v1348, 0
        %1352 = vmatprep.subr.bf16.mxu0 0
        %1353 = vmatpush1.bf16.msra.mxu0 0
        %1354 = vmatprep.subr.bf16.mxu0 0
        %1355 = vmatpush1.bf16.msra.mxu0 0
        %1356 = vmatprep.subr.bf16.mxu0 0
        %1357 = vmatpush1.bf16.msra.mxu0 0
        %1358 = vmatprep.subr.bf16.mxu0 0
        %1359 = vmatpush1.bf16.msra.mxu0 0
        %1360 = vmatprep.subr.bf16.mxu0 0
        %1361 = vmatpush1.bf16.msra.mxu0 0
        %1362 = vmatprep.subr.bf16.mxu0 0
        %1363 = vmatpush1.bf16.msra.mxu0 0
        %1364 = vmatprep.subr.bf16.mxu0 0
        %1365 = vmatpush1.bf16.msra.mxu0 %v1265
        %1366 = vmatprep.subr.bf16.mxu0 0
        %1367 = vmatpush1.bf16.msra.mxu0 %v1264
        %1368 = vmatprep.subr.bf16.mxu0 0
        %1369 = vmatpush2.bf16.msra.mxu0 0
        %1370 = vmatprep.subr.bf16.mxu0 0
        %1371 = vmatpush2.bf16.msra.mxu0 0
        %1372 = vmatprep.subr.bf16.mxu0 0
        %1373 = vmatpush2.bf16.msra.mxu0 0
        %1374 = vmatprep.subr.bf16.mxu0 0
        %1375 = vmatpush2.bf16.msra.mxu0 0
        %1376 = vmatprep.subr.bf16.mxu0 0
        %1377 = vmatpush2.bf16.msra.mxu0 0
        %1378 = vmatprep.subr.bf16.mxu0 0
        %1379 = vmatpush2.bf16.msra.mxu0 0
        %1380 = vmatprep.subr.bf16.mxu0 0
        %1381 = vmatpush2.bf16.msra.mxu0 0
        %1382 = vmatprep.subr.bf16.mxu0 0
        %1383 = vmatpush2.bf16.msra.mxu0 0
        %1384 = vmatprep.mubr.bf16.mxu0 0
        %1385 = vmatmul.mubr.bf16.gmra.mxu0 %v1350
        %v1386 = vpop.f32.mrf.mxu0
        %v1387 = vadd.f32 0.0, %v1386
        %v1388 = vpop.f32.mrf.mxu0
        %v1389 = vpop.f32.mrf.mxu0
        %v1390 = vadd.f32 0.0, %v1389
        %v1391 = vpop.f32.mrf.mxu0
        %1392 = vdwg.mxu0
        %1394 = vrot.lane.b32.xlu0 %v1258, 96
        %v1395 = vpop.permute.xlu0 %1394
        %1398 = vrot.lane.b32.xlu0 %v1260, 96
        %v1399 = vpop.permute.xlu0 %1398
        %1400 = vrot.lane.b32.xlu0 %v1261, 96
        %v1401 = vpop.permute.xlu0 %1400
        %v1403 = vsel %vm1275, %v1395, 0
        %v1406 = vsel %vm1275, %v1399, 0
        %v1409 = vsel %vm1275, %v1401, 0
        %1411 = vmatprep.subr.bf16.mxu0 0
        %1412 = vmatpush1.bf16.xpose.msra.mxu0 0
        %1413 = vmatprep.subr.bf16.mxu0 0
        %1414 = vmatpush1.bf16.xpose.msra.mxu0 0
        %1415 = vmatprep.subr.bf16.mxu0 0
        %1416 = vmatpush1.bf16.xpose.msra.mxu0 0
        %1417 = vmatprep.subr.bf16.mxu0 0
        %1418 = vmatpush1.bf16.xpose.msra.mxu0 0
        %1419 = vmatprep.subr.bf16.mxu0 0
        %1420 = vmatpush1.bf16.xpose.msra.mxu0 0
        %1421 = vmatprep.subr.bf16.mxu0 0
        %1422 = vmatpush1.bf16.xpose.msra.mxu0 0
        %1423 = vmatprep.subr.bf16.mxu0 0
        %1424 = vmatpush1.bf16.xpose.msra.mxu0 %v1409
        %1425 = vmatprep.subr.bf16.mxu0 0
        %1426 = vmatpush1.bf16.xpose.msra.mxu0 %v1406
        %1427 = vmatprep.subr.bf16.mxu0 0
        %1428 = vmatpush2.bf16.xpose.msra.mxu0 0
        %1429 = vmatprep.subr.bf16.mxu0 0
        %1430 = vmatpush2.bf16.xpose.msra.mxu0 0
        %1431 = vmatprep.subr.bf16.mxu0 0
        %1432 = vmatpush2.bf16.xpose.msra.mxu0 0
        %1433 = vmatprep.subr.bf16.mxu0 0
        %1434 = vmatpush2.bf16.xpose.msra.mxu0 0
        %1435 = vmatprep.subr.bf16.mxu0 0
        %1436 = vmatpush2.bf16.xpose.msra.mxu0 0
        %1437 = vmatprep.subr.bf16.mxu0 0
        %1438 = vmatpush2.bf16.xpose.msra.mxu0 0
        %1439 = vmatprep.subr.bf16.mxu0 0
        %1440 = vmatpush2.bf16.xpose.msra.mxu0 0
        %1441 = vmatprep.subr.bf16.mxu0 0
        %1442 = vmatpush2.bf16.xpose.msra.mxu0 0
        %1443 = vmatprep.mubr.bf16.mxu0 0
        %1444 = vmatmul.mubr.bf16.gmra.mxu0 %v1403
        %v1445 = vpop.f32.mrf.mxu0
        %v1446 = vadd.f32 %v1273, %v1445
        %v1447 = vpop.f32.mrf.mxu0
        %v1448 = vpop.f32.mrf.mxu0
        %v1449 = vadd.f32 %v1273, %v1448
        %v1450 = vpop.f32.mrf.mxu0
        %1451 = vdwg.mxu0
        %v1452 = vsel %vm1275, %v1446, -inf
        %1453 = vmax.xlane.f32.xlu0 %v1452
        %v1454 = vpop.xlane.xlu0 %1453
        %v1455 = vsel %vm1275, %v1449, -inf
        %1456 = vmax.xlane.f32.xlu0 %v1455
        %v1457 = vpop.xlane.xlu0 %1456
        %v1458 = vsub.f32 %v1446, %v1454
        %v1459 = vsub.f32 %v1449, %v1457
        %v1460 = vmul.f32 %v1458, 1.442695
        %v1461 = vpow.pop %v1460
        %v1462 = vmul.f32 %v1459, 1.442695
        %v1463 = vpow.pop %v1462
        %v1464 = vsel %vm1275, %v1461, 0.0
        %1465 = vadd.xlane.f32.xlu0 %v1464
        %v1466 = vpop.xlane.xlu0 %1465
        %v1467 = vsel %vm1275, %v1463, 0.0
        %1468 = vadd.xlane.f32.xlu0 %v1467
        %v1469 = vpop.xlane.xlu0 %1468
        %v1470 = vrcp.pop %v1466
        %v1471 = vrcp.pop %v1469
        %v1472 = vmul.f32 %v1461, %v1470
        %v1473 = vmul.f32 %v1463, %v1471
        %v1474 = vpack.c.bf16 %v1473, %v1472
        %1477 = vrot.lane.b32.xlu0 %v1264, 96
        %v1478 = vpop.permute.xlu0 %1477
        %1479 = vrot.lane.b32.xlu0 %v1265, 96
        %v1480 = vpop.permute.xlu0 %1479
        %v1484 = vsel %vm1275, %v1474, 0
        %1486 = vmatprep.subr.bf16.mxu0 0
        %1487 = vmatpush1.bf16.msra.mxu0 0
        %1488 = vmatprep.subr.bf16.mxu0 0
        %1489 = vmatpush1.bf16.msra.mxu0 0
        %1490 = vmatprep.subr.bf16.mxu0 0
        %1491 = vmatpush1.bf16.msra.mxu0 0
        %1492 = vmatprep.subr.bf16.mxu0 0
        %1493 = vmatpush1.bf16.msra.mxu0 0
        %1494 = vmatprep.subr.bf16.mxu0 0
        %1495 = vmatpush1.bf16.msra.mxu0 0
        %1496 = vmatprep.subr.bf16.mxu0 0
        %1497 = vmatpush1.bf16.msra.mxu0 0
        %1498 = vmatprep.subr.bf16.mxu0 0
        %1499 = vmatpush1.bf16.msra.mxu0 %v1480
        %1500 = vmatprep.subr.bf16.mxu0 0
        %1501 = vmatpush1.bf16.msra.mxu0 %v1478
        %1502 = vmatprep.subr.bf16.mxu0 0
        %1503 = vmatpush2.bf16.msra.mxu0 0
        %1504 = vmatprep.subr.bf16.mxu0 0
        %1505 = vmatpush2.bf16.msra.mxu0 0
        %1506 = vmatprep.subr.bf16.mxu0 0
        %1507 = vmatpush2.bf16.msra.mxu0 0
        %1508 = vmatprep.subr.bf16.mxu0 0
        %1509 = vmatpush2.bf16.msra.mxu0 0
        %1510 = vmatprep.subr.bf16.mxu0 0
        %1511 = vmatpush2.bf16.msra.mxu0 0
        %1512 = vmatprep.subr.bf16.mxu0 0
        %1513 = vmatpush2.bf16.msra.mxu0 0
        %1514 = vmatprep.subr.bf16.mxu0 0
        %1515 = vmatpush2.bf16.msra.mxu0 0
        %1516 = vmatprep.subr.bf16.mxu0 0
        %1517 = vmatpush2.bf16.msra.mxu0 0
        %1518 = vmatprep.mubr.bf16.mxu0 0
        %1519 = vmatmul.mubr.bf16.gmra.mxu0 %v1484
        %v1520 = vpop.f32.mrf.mxu0
        %v1521 = vadd.f32 0.0, %v1520
        %v1522 = vpop.f32.mrf.mxu0
        %v1523 = vpop.f32.mrf.mxu0
        %v1524 = vadd.f32 0.0, %v1523
        %v1525 = vpop.f32.mrf.mxu0
        %1526 = vdwg.mxu0
        %1527 = vrot.lane.b32.xlu0 %v1258, 64
        %v1528 = vpop.permute.xlu0 %1527
        %1529 = vrot.lane.b32.xlu0 %v1260, 64
        %v1530 = vpop.permute.xlu0 %1529
        %1531 = vrot.lane.b32.xlu0 %v1261, 64
        %v1532 = vpop.permute.xlu0 %1531
        %v1534 = vsel %vm1275, %v1528, 0
        %v1537 = vsel %vm1275, %v1530, 0
        %v1540 = vsel %vm1275, %v1532, 0
        %1542 = vmatprep.subr.bf16.mxu0 0
        %1543 = vmatpush1.bf16.xpose.msra.mxu0 0
        %1544 = vmatprep.subr.bf16.mxu0 0
        %1545 = vmatpush1.bf16.xpose.msra.mxu0 0
        %1546 = vmatprep.subr.bf16.mxu0 0
        %1547 = vmatpush1.bf16.xpose.msra.mxu0 0
        %1548 = vmatprep.subr.bf16.mxu0 0
        %1549 = vmatpush1.bf16.xpose.msra.mxu0 0
        %1550 = vmatprep.subr.bf16.mxu0 0
        %1551 = vmatpush1.bf16.xpose.msra.mxu0 0
        %1552 = vmatprep.subr.bf16.mxu0 0
        %1553 = vmatpush1.bf16.xpose.msra.mxu0 0
        %1554 = vmatprep.subr.bf16.mxu0 0
        %1555 = vmatpush1.bf16.xpose.msra.mxu0 %v1540
        %1556 = vmatprep.subr.bf16.mxu0 0
        %1557 = vmatpush1.bf16.xpose.msra.mxu0 %v1537
        %1558 = vmatprep.subr.bf16.mxu0 0
        %1559 = vmatpush2.bf16.xpose.msra.mxu0 0
        %1560 = vmatprep.subr.bf16.mxu0 0
        %1561 = vmatpush2.bf16.xpose.msra.mxu0 0
        %1562 = vmatprep.subr.bf16.mxu0 0
        %1563 = vmatpush2.bf16.xpose.msra.mxu0 0
        %1564 = vmatprep.subr.bf16.mxu0 0
        %1565 = vmatpush2.bf16.xpose.msra.mxu0 0
        %1566 = vmatprep.subr.bf16.mxu0 0
        %1567 = vmatpush2.bf16.xpose.msra.mxu0 0
        %1568 = vmatprep.subr.bf16.mxu0 0
        %1569 = vmatpush2.bf16.xpose.msra.mxu0 0
        %1570 = vmatprep.subr.bf16.mxu0 0
        %1571 = vmatpush2.bf16.xpose.msra.mxu0 0
        %1572 = vmatprep.subr.bf16.mxu0 0
        %1573 = vmatpush2.bf16.xpose.msra.mxu0 0
        %1574 = vmatprep.mubr.bf16.mxu0 0
        %1575 = vmatmul.mubr.bf16.gmra.mxu0 %v1534
        %v1576 = vpop.f32.mrf.mxu0
        %v1577 = vadd.f32 %v1273, %v1576
        %v1578 = vpop.f32.mrf.mxu0
        %v1579 = vpop.f32.mrf.mxu0
        %v1580 = vadd.f32 %v1273, %v1579
        %v1581 = vpop.f32.mrf.mxu0
        %1582 = vdwg.mxu0
        %v1583 = vsel %vm1275, %v1577, -inf
        %1584 = vmax.xlane.f32.xlu0 %v1583
        %v1585 = vpop.xlane.xlu0 %1584
        %v1586 = vsel %vm1275, %v1580, -inf
        %1587 = vmax.xlane.f32.xlu0 %v1586
        %v1588 = vpop.xlane.xlu0 %1587
        %v1589 = vsub.f32 %v1577, %v1585
        %v1590 = vsub.f32 %v1580, %v1588
        %v1591 = vmul.f32 %v1589, 1.442695
        %v1592 = vpow.pop %v1591
        %v1593 = vmul.f32 %v1590, 1.442695
        %v1594 = vpow.pop %v1593
        %v1595 = vsel %vm1275, %v1592, 0.0
        %1596 = vadd.xlane.f32.xlu0 %v1595
        %v1597 = vpop.xlane.xlu0 %1596
        %v1598 = vsel %vm1275, %v1594, 0.0
        %1599 = vadd.xlane.f32.xlu0 %v1598
        %v1600 = vpop.xlane.xlu0 %1599
        %v1601 = vrcp.pop %v1597
        %v1602 = vrcp.pop %v1600
        %v1603 = vmul.f32 %v1592, %v1601
        %v1604 = vmul.f32 %v1594, %v1602
        %v1605 = vpack.c.bf16 %v1604, %v1603
        %1606 = vrot.lane.b32.xlu0 %v1264, 64
        %v1607 = vpop.permute.xlu0 %1606
        %1608 = vrot.lane.b32.xlu0 %v1265, 64
        %v1609 = vpop.permute.xlu0 %1608
        %v1613 = vsel %vm1275, %v1605, 0
        %1615 = vmatprep.subr.bf16.mxu0 0
        %1616 = vmatpush1.bf16.msra.mxu0 0
        %1617 = vmatprep.subr.bf16.mxu0 0
        %1618 = vmatpush1.bf16.msra.mxu0 0
        %1619 = vmatprep.subr.bf16.mxu0 0
        %1620 = vmatpush1.bf16.msra.mxu0 0
        %1621 = vmatprep.subr.bf16.mxu0 0
        %1622 = vmatpush1.bf16.msra.mxu0 0
        %1623 = vmatprep.subr.bf16.mxu0 0
        %1624 = vmatpush1.bf16.msra.mxu0 0
        %1625 = vmatprep.subr.bf16.mxu0 0
        %1626 = vmatpush1.bf16.msra.mxu0 0
        %1627 = vmatprep.subr.bf16.mxu0 0
        %1628 = vmatpush1.bf16.msra.mxu0 %v1609
        %1629 = vmatprep.subr.bf16.mxu0 0
        %1630 = vmatpush1.bf16.msra.mxu0 %v1607
        %1631 = vmatprep.subr.bf16.mxu0 0
        %1632 = vmatpush2.bf16.msra.mxu0 0
        %1633 = vmatprep.subr.bf16.mxu0 0
        %1634 = vmatpush2.bf16.msra.mxu0 0
        %1635 = vmatprep.subr.bf16.mxu0 0
        %1636 = vmatpush2.bf16.msra.mxu0 0
        %1637 = vmatprep.subr.bf16.mxu0 0
        %1638 = vmatpush2.bf16.msra.mxu0 0
        %1639 = vmatprep.subr.bf16.mxu0 0
        %1640 = vmatpush2.bf16.msra.mxu0 0
        %1641 = vmatprep.subr.bf16.mxu0 0
        %1642 = vmatpush2.bf16.msra.mxu0 0
        %1643 = vmatprep.subr.bf16.mxu0 0
        %1644 = vmatpush2.bf16.msra.mxu0 0
        %1645 = vmatprep.subr.bf16.mxu0 0
        %1646 = vmatpush2.bf16.msra.mxu0 0
        %1647 = vmatprep.mubr.bf16.mxu0 0
        %1648 = vmatmul.mubr.bf16.gmra.mxu0 %v1613
        %v1649 = vpop.f32.mrf.mxu0
        %v1650 = vadd.f32 0.0, %v1649
        %v1651 = vpop.f32.mrf.mxu0
        %v1652 = vpop.f32.mrf.mxu0
        %v1653 = vadd.f32 0.0, %v1652
        %v1654 = vpop.f32.mrf.mxu0
        %1655 = vdwg.mxu0
        %1656 = vrot.lane.b32.xlu0 %v1258, 32
        %v1657 = vpop.permute.xlu0 %1656
        %1658 = vrot.lane.b32.xlu0 %v1260, 32
        %v1659 = vpop.permute.xlu0 %1658
        %1660 = vrot.lane.b32.xlu0 %v1261, 32
        %v1661 = vpop.permute.xlu0 %1660
        %v1663 = vsel %vm1275, %v1657, 0
        %v1666 = vsel %vm1275, %v1659, 0
        %v1669 = vsel %vm1275, %v1661, 0
        %1671 = vmatprep.subr.bf16.mxu0 0
        %1672 = vmatpush1.bf16.xpose.msra.mxu0 0
        %1673 = vmatprep.subr.bf16.mxu0 0
        %1674 = vmatpush1.bf16.xpose.msra.mxu0 0
        %1675 = vmatprep.subr.bf16.mxu0 0
        %1676 = vmatpush1.bf16.xpose.msra.mxu0 0
        %1677 = vmatprep.subr.bf16.mxu0 0
        %1678 = vmatpush1.bf16.xpose.msra.mxu0 0
        %1679 = vmatprep.subr.bf16.mxu0 0
        %1680 = vmatpush1.bf16.xpose.msra.mxu0 0
        %1681 = vmatprep.subr.bf16.mxu0 0
        %1682 = vmatpush1.bf16.xpose.msra.mxu0 0
        %1683 = vmatprep.subr.bf16.mxu0 0
        %1684 = vmatpush1.bf16.xpose.msra.mxu0 %v1669
        %1685 = vmatprep.subr.bf16.mxu0 0
        %1686 = vmatpush1.bf16.xpose.msra.mxu0 %v1666
        %1687 = vmatprep.subr.bf16.mxu0 0
        %1688 = vmatpush2.bf16.xpose.msra.mxu0 0
        %1689 = vmatprep.subr.bf16.mxu0 0
        %1690 = vmatpush2.bf16.xpose.msra.mxu0 0
        %1691 = vmatprep.subr.bf16.mxu0 0
        %1692 = vmatpush2.bf16.xpose.msra.mxu0 0
        %1693 = vmatprep.subr.bf16.mxu0 0
        %1694 = vmatpush2.bf16.xpose.msra.mxu0 0
        %1695 = vmatprep.subr.bf16.mxu0 0
        %1696 = vmatpush2.bf16.xpose.msra.mxu0 0
        %1697 = vmatprep.subr.bf16.mxu0 0
        %1698 = vmatpush2.bf16.xpose.msra.mxu0 0
        %1699 = vmatprep.subr.bf16.mxu0 0
        %1700 = vmatpush2.bf16.xpose.msra.mxu0 0
        %1701 = vmatprep.subr.bf16.mxu0 0
        %1702 = vmatpush2.bf16.xpose.msra.mxu0 0
        %1703 = vmatprep.mubr.bf16.mxu0 0
        %1704 = vmatmul.mubr.bf16.gmra.mxu0 %v1663
        %v1705 = vpop.f32.mrf.mxu0
        %v1706 = vadd.f32 %v1273, %v1705
        %v1707 = vpop.f32.mrf.mxu0
        %v1708 = vpop.f32.mrf.mxu0
        %v1709 = vadd.f32 %v1273, %v1708
        %v1710 = vpop.f32.mrf.mxu0
        %1711 = vdwg.mxu0
        %v1712 = vsel %vm1275, %v1706, -inf
        %1713 = vmax.xlane.f32.xlu0 %v1712
        %v1714 = vpop.xlane.xlu0 %1713
        %v1715 = vsel %vm1275, %v1709, -inf
        %1716 = vmax.xlane.f32.xlu0 %v1715
        %v1717 = vpop.xlane.xlu0 %1716
        %v1718 = vsub.f32 %v1706, %v1714
        %v1719 = vsub.f32 %v1709, %v1717
        %v1720 = vmul.f32 %v1718, 1.442695
        %v1721 = vpow.pop %v1720
        %v1722 = vmul.f32 %v1719, 1.442695
        %v1723 = vpow.pop %v1722
        %v1724 = vsel %vm1275, %v1721, 0.0
        %1725 = vadd.xlane.f32.xlu0 %v1724
        %v1726 = vpop.xlane.xlu0 %1725
        %v1727 = vsel %vm1275, %v1723, 0.0
        %1728 = vadd.xlane.f32.xlu0 %v1727
        %v1729 = vpop.xlane.xlu0 %1728
        %v1730 = vrcp.pop %v1726
        %v1731 = vrcp.pop %v1729
        %v1732 = vmul.f32 %v1721, %v1730
        %v1733 = vmul.f32 %v1723, %v1731
        %v1734 = vpack.c.bf16 %v1733, %v1732
        %1735 = vrot.lane.b32.xlu0 %v1264, 32
        %v1736 = vpop.permute.xlu0 %1735
        %1737 = vrot.lane.b32.xlu0 %v1265, 32
        %v1738 = vpop.permute.xlu0 %1737
        %v1742 = vsel %vm1275, %v1734, 0
        %1744 = vmatprep.subr.bf16.mxu0 0
        %1745 = vmatpush1.bf16.msra.mxu0 0
        %1746 = vmatprep.subr.bf16.mxu0 0
        %1747 = vmatpush1.bf16.msra.mxu0 0
        %1748 = vmatprep.subr.bf16.mxu0 0
        %1749 = vmatpush1.bf16.msra.mxu0 0
        %1750 = vmatprep.subr.bf16.mxu0 0
        %1751 = vmatpush1.bf16.msra.mxu0 0
        %1752 = vmatprep.subr.bf16.mxu0 0
        %1753 = vmatpush1.bf16.msra.mxu0 0
        %1754 = vmatprep.subr.bf16.mxu0 0
        %1755 = vmatpush1.bf16.msra.mxu0 0
        %1756 = vmatprep.subr.bf16.mxu0 0
        %1757 = vmatpush1.bf16.msra.mxu0 %v1738
        %1758 = vmatprep.subr.bf16.mxu0 0
        %1759 = vmatpush1.bf16.msra.mxu0 %v1736
        %1760 = vmatprep.subr.bf16.mxu0 0
        %1761 = vmatpush2.bf16.msra.mxu0 0
        %1762 = vmatprep.subr.bf16.mxu0 0
        %1763 = vmatpush2.bf16.msra.mxu0 0
        %1764 = vmatprep.subr.bf16.mxu0 0
        %1765 = vmatpush2.bf16.msra.mxu0 0
        %1766 = vmatprep.subr.bf16.mxu0 0
        %1767 = vmatpush2.bf16.msra.mxu0 0
        %1768 = vmatprep.subr.bf16.mxu0 0
        %1769 = vmatpush2.bf16.msra.mxu0 0
        %1770 = vmatprep.subr.bf16.mxu0 0
        %1771 = vmatpush2.bf16.msra.mxu0 0
        %1772 = vmatprep.subr.bf16.mxu0 0
        %1773 = vmatpush2.bf16.msra.mxu0 0
        %1774 = vmatprep.subr.bf16.mxu0 0
        %1775 = vmatpush2.bf16.msra.mxu0 0
        %1776 = vmatprep.mubr.bf16.mxu0 0
        %1777 = vmatmul.mubr.bf16.gmra.mxu0 %v1742
        %v1778 = vpop.f32.mrf.mxu0
        %v1779 = vadd.f32 0.0, %v1778
        %v1780 = vpop.f32.mrf.mxu0
        %v1781 = vpop.f32.mrf.mxu0
        %v1782 = vadd.f32 0.0, %v1781
        %v1783 = vpop.f32.mrf.mxu0
        %1784 = vdwg.mxu0
        %1787 = vrot.lane.b32.xlu0 %v1521, 32
        %v1788 = vpop.permute.xlu0 %1787
        %1789 = vrot.lane.b32.xlu0 %v1524, 32
        %v1790 = vpop.permute.xlu0 %1789
        %1795 = vrot.lane.b32.xlu0 %v1650, 64
        %v1796 = vpop.permute.xlu0 %1795
        %1797 = vrot.lane.b32.xlu0 %v1653, 64
        %v1798 = vpop.permute.xlu0 %1797
        %1803 = vrot.lane.b32.xlu0 %v1779, 96
        %v1804 = vpop.permute.xlu0 %1803
        %1805 = vrot.lane.b32.xlu0 %v1782, 96
        %v1806 = vpop.permute.xlu0 %1805
        %v1809 = vsel %vm1275, %v1387, %v1788
        %v1810 = vsel %vm1275, %v1390, %v1790
        %vm1811 = vcmask 523264
        %v1812 = vsel %vm1811, %v1809, %v1796
        %v1813 = vsel %vm1811, %v1810, %v1798
        %vm1814 = vcmask 785408
        %v1815 = vsel %vm1814, %v1812, %v1804
        %v1816 = vsel %vm1814, %v1813, %v1806
        %s1817 = scalar_lea.vmem %s832, 1
        %v1818 = vld [vmem:[%s1817] sm:$0x1]
        %v1820 = vlaneseq
        %v1821 = vshrl.u32 %v1820, 7
        %v1822 = vsub.s32 0, %v1821
        %v1823 = vrot.slane %v1818, %v1822
        %v1826 = vsel %vm1275, %v1259, 0
        %v1829 = vsel %vm1275, %v1262, 0
        %v1832 = vsel %vm1275, %v1263, 0
        %1834 = vmatprep.subr.bf16.mxu0 0
        %1835 = vmatpush1.bf16.xpose.msra.mxu0 0
        %1836 = vmatprep.subr.bf16.mxu0 0
        %1837 = vmatpush1.bf16.xpose.msra.mxu0 0
        %1838 = vmatprep.subr.bf16.mxu0 0
        %1839 = vmatpush1.bf16.xpose.msra.mxu0 0
        %1840 = vmatprep.subr.bf16.mxu0 0
        %1841 = vmatpush1.bf16.xpose.msra.mxu0 0
        %1842 = vmatprep.subr.bf16.mxu0 0
        %1843 = vmatpush1.bf16.xpose.msra.mxu0 0
        %1844 = vmatprep.subr.bf16.mxu0 0
        %1845 = vmatpush1.bf16.xpose.msra.mxu0 0
        %1846 = vmatprep.subr.bf16.mxu0 0
        %1847 = vmatpush1.bf16.xpose.msra.mxu0 %v1832
        %1848 = vmatprep.subr.bf16.mxu0 0
        %1849 = vmatpush1.bf16.xpose.msra.mxu0 %v1829
        %1850 = vmatprep.subr.bf16.mxu0 0
        %1851 = vmatpush2.bf16.xpose.msra.mxu0 0
        %1852 = vmatprep.subr.bf16.mxu0 0
        %1853 = vmatpush2.bf16.xpose.msra.mxu0 0
        %1854 = vmatprep.subr.bf16.mxu0 0
        %1855 = vmatpush2.bf16.xpose.msra.mxu0 0
        %1856 = vmatprep.subr.bf16.mxu0 0
        %1857 = vmatpush2.bf16.xpose.msra.mxu0 0
        %1858 = vmatprep.subr.bf16.mxu0 0
        %1859 = vmatpush2.bf16.xpose.msra.mxu0 0
        %1860 = vmatprep.subr.bf16.mxu0 0
        %1861 = vmatpush2.bf16.xpose.msra.mxu0 0
        %1862 = vmatprep.subr.bf16.mxu0 0
        %1863 = vmatpush2.bf16.xpose.msra.mxu0 0
        %1864 = vmatprep.subr.bf16.mxu0 0
        %1865 = vmatpush2.bf16.xpose.msra.mxu0 0
        %1866 = vmatprep.mubr.bf16.mxu0 0
        %1867 = vmatmul.mubr.bf16.gmra.mxu0 %v1826
        %v1868 = vpop.f32.mrf.mxu0
        %v1869 = vadd.f32 %v1823, %v1868
        %v1870 = vpop.f32.mrf.mxu0
        %v1871 = vpop.f32.mrf.mxu0
        %v1872 = vadd.f32 %v1823, %v1871
        %v1873 = vpop.f32.mrf.mxu0
        %1874 = vdwg.mxu0
        %v1875 = vsel %vm1275, %v1869, -inf
        %1876 = vmax.xlane.f32.xlu0 %v1875
        %v1877 = vpop.xlane.xlu0 %1876
        %v1878 = vsel %vm1275, %v1872, -inf
        %1879 = vmax.xlane.f32.xlu0 %v1878
        %v1880 = vpop.xlane.xlu0 %1879
        %v1881 = vsub.f32 %v1869, %v1877
        %v1882 = vsub.f32 %v1872, %v1880
        %v1883 = vmul.f32 %v1881, 1.442695
        %v1884 = vpow.pop %v1883
        %v1885 = vmul.f32 %v1882, 1.442695
        %v1886 = vpow.pop %v1885
        %v1887 = vsel %vm1275, %v1884, 0.0
        %1888 = vadd.xlane.f32.xlu0 %v1887
        %v1889 = vpop.xlane.xlu0 %1888
        %v1890 = vsel %vm1275, %v1886, 0.0
        %1891 = vadd.xlane.f32.xlu0 %v1890
        %v1892 = vpop.xlane.xlu0 %1891
        %v1893 = vrcp.pop %v1889
        %v1894 = vrcp.pop %v1892
        %v1895 = vmul.f32 %v1884, %v1893
        %v1896 = vmul.f32 %v1886, %v1894
        %v1897 = vpack.c.bf16 %v1896, %v1895
        %v1899 = vsel %vm1275, %v1897, 0
        %1901 = vmatprep.subr.bf16.mxu0 0
        %1902 = vmatpush1.bf16.msra.mxu0 0
        %1903 = vmatprep.subr.bf16.mxu0 0
        %1904 = vmatpush1.bf16.msra.mxu0 0
        %1905 = vmatprep.subr.bf16.mxu0 0
        %1906 = vmatpush1.bf16.msra.mxu0 0
        %1907 = vmatprep.subr.bf16.mxu0 0
        %1908 = vmatpush1.bf16.msra.mxu0 0
        %1909 = vmatprep.subr.bf16.mxu0 0
        %1910 = vmatpush1.bf16.msra.mxu0 0
        %1911 = vmatprep.subr.bf16.mxu0 0
        %1912 = vmatpush1.bf16.msra.mxu0 0
        %1913 = vmatprep.subr.bf16.mxu0 0
        %1914 = vmatpush1.bf16.msra.mxu0 %v1267
        %1915 = vmatprep.subr.bf16.mxu0 0
        %1916 = vmatpush1.bf16.msra.mxu0 %v1266
        %1917 = vmatprep.subr.bf16.mxu0 0
        %1918 = vmatpush2.bf16.msra.mxu0 0
        %1919 = vmatprep.subr.bf16.mxu0 0
        %1920 = vmatpush2.bf16.msra.mxu0 0
        %1921 = vmatprep.subr.bf16.mxu0 0
        %1922 = vmatpush2.bf16.msra.mxu0 0
        %1923 = vmatprep.subr.bf16.mxu0 0
        %1924 = vmatpush2.bf16.msra.mxu0 0
        %1925 = vmatprep.subr.bf16.mxu0 0
        %1926 = vmatpush2.bf16.msra.mxu0 0
        %1927 = vmatprep.subr.bf16.mxu0 0
        %1928 = vmatpush2.bf16.msra.mxu0 0
        %1929 = vmatprep.subr.bf16.mxu0 0
        %1930 = vmatpush2.bf16.msra.mxu0 0
        %1931 = vmatprep.subr.bf16.mxu0 0
        %1932 = vmatpush2.bf16.msra.mxu0 0
        %1933 = vmatprep.mubr.bf16.mxu0 0
        %1934 = vmatmul.mubr.bf16.gmra.mxu0 %v1899
        %v1935 = vpop.f32.mrf.mxu0
        %v1936 = vadd.f32 0.0, %v1935
        %v1937 = vpop.f32.mrf.mxu0
        %v1938 = vpop.f32.mrf.mxu0
        %v1939 = vadd.f32 0.0, %v1938
        %v1940 = vpop.f32.mrf.mxu0
        %1941 = vdwg.mxu0
        %1943 = vrot.lane.b32.xlu0 %v1259, 96
        %v1944 = vpop.permute.xlu0 %1943
        %1947 = vrot.lane.b32.xlu0 %v1262, 96
        %v1948 = vpop.permute.xlu0 %1947
        %1949 = vrot.lane.b32.xlu0 %v1263, 96
        %v1950 = vpop.permute.xlu0 %1949
        %v1952 = vsel %vm1275, %v1944, 0
        %v1955 = vsel %vm1275, %v1948, 0
        %v1958 = vsel %vm1275, %v1950, 0
        %1960 = vmatprep.subr.bf16.mxu0 0
        %1961 = vmatpush1.bf16.xpose.msra.mxu0 0
        %1962 = vmatprep.subr.bf16.mxu0 0
        %1963 = vmatpush1.bf16.xpose.msra.mxu0 0
        %1964 = vmatprep.subr.bf16.mxu0 0
        %1965 = vmatpush1.bf16.xpose.msra.mxu0 0
        %1966 = vmatprep.subr.bf16.mxu0 0
        %1967 = vmatpush1.bf16.xpose.msra.mxu0 0
        %1968 = vmatprep.subr.bf16.mxu0 0
        %1969 = vmatpush1.bf16.xpose.msra.mxu0 0
        %1970 = vmatprep.subr.bf16.mxu0 0
        %1971 = vmatpush1.bf16.xpose.msra.mxu0 0
        %1972 = vmatprep.subr.bf16.mxu0 0
        %1973 = vmatpush1.bf16.xpose.msra.mxu0 %v1958
        %1974 = vmatprep.subr.bf16.mxu0 0
        %1975 = vmatpush1.bf16.xpose.msra.mxu0 %v1955
        %1976 = vmatprep.subr.bf16.mxu0 0
        %1977 = vmatpush2.bf16.xpose.msra.mxu0 0
        %1978 = vmatprep.subr.bf16.mxu0 0
        %1979 = vmatpush2.bf16.xpose.msra.mxu0 0
        %1980 = vmatprep.subr.bf16.mxu0 0
        %1981 = vmatpush2.bf16.xpose.msra.mxu0 0
        %1982 = vmatprep.subr.bf16.mxu0 0
        %1983 = vmatpush2.bf16.xpose.msra.mxu0 0
        %1984 = vmatprep.subr.bf16.mxu0 0
        %1985 = vmatpush2.bf16.xpose.msra.mxu0 0
        %1986 = vmatprep.subr.bf16.mxu0 0
        %1987 = vmatpush2.bf16.xpose.msra.mxu0 0
        %1988 = vmatprep.subr.bf16.mxu0 0
        %1989 = vmatpush2.bf16.xpose.msra.mxu0 0
        %1990 = vmatprep.subr.bf16.mxu0 0
        %1991 = vmatpush2.bf16.xpose.msra.mxu0 0
        %1992 = vmatprep.mubr.bf16.mxu0 0
        %1993 = vmatmul.mubr.bf16.gmra.mxu0 %v1952
        %v1994 = vpop.f32.mrf.mxu0
        %v1995 = vadd.f32 %v1823, %v1994
        %v1996 = vpop.f32.mrf.mxu0
        %v1997 = vpop.f32.mrf.mxu0
        %v1998 = vadd.f32 %v1823, %v1997
        %v1999 = vpop.f32.mrf.mxu0
        %2000 = vdwg.mxu0
        %v2001 = vsel %vm1275, %v1995, -inf
        %2002 = vmax.xlane.f32.xlu0 %v2001
        %v2003 = vpop.xlane.xlu0 %2002
        %v2004 = vsel %vm1275, %v1998, -inf
        %2005 = vmax.xlane.f32.xlu0 %v2004
        %v2006 = vpop.xlane.xlu0 %2005
        %v2007 = vsub.f32 %v1995, %v2003
        %v2008 = vsub.f32 %v1998, %v2006
        %v2009 = vmul.f32 %v2007, 1.442695
        %v2010 = vpow.pop %v2009
        %v2011 = vmul.f32 %v2008, 1.442695
        %v2012 = vpow.pop %v2011
        %v2013 = vsel %vm1275, %v2010, 0.0
        %2014 = vadd.xlane.f32.xlu0 %v2013
        %v2015 = vpop.xlane.xlu0 %2014
        %v2016 = vsel %vm1275, %v2012, 0.0
        %2017 = vadd.xlane.f32.xlu0 %v2016
        %v2018 = vpop.xlane.xlu0 %2017
        %v2019 = vrcp.pop %v2015
        %v2020 = vrcp.pop %v2018
        %v2021 = vmul.f32 %v2010, %v2019
        %v2022 = vmul.f32 %v2012, %v2020
        %v2023 = vpack.c.bf16 %v2022, %v2021
        %2026 = vrot.lane.b32.xlu0 %v1266, 96
        %v2027 = vpop.permute.xlu0 %2026
        %2028 = vrot.lane.b32.xlu0 %v1267, 96
        %v2029 = vpop.permute.xlu0 %2028
        %v2033 = vsel %vm1275, %v2023, 0
        %2035 = vmatprep.subr.bf16.mxu0 0
        %2036 = vmatpush1.bf16.msra.mxu0 0
        %2037 = vmatprep.subr.bf16.mxu0 0
        %2038 = vmatpush1.bf16.msra.mxu0 0
        %2039 = vmatprep.subr.bf16.mxu0 0
        %2040 = vmatpush1.bf16.msra.mxu0 0
        %2041 = vmatprep.subr.bf16.mxu0 0
        %2042 = vmatpush1.bf16.msra.mxu0 0
        %2043 = vmatprep.subr.bf16.mxu0 0
        %2044 = vmatpush1.bf16.msra.mxu0 0
        %2045 = vmatprep.subr.bf16.mxu0 0
        %2046 = vmatpush1.bf16.msra.mxu0 0
        %2047 = vmatprep.subr.bf16.mxu0 0
        %2048 = vmatpush1.bf16.msra.mxu0 %v2029
        %2049 = vmatprep.subr.bf16.mxu0 0
        %2050 = vmatpush1.bf16.msra.mxu0 %v2027
        %2051 = vmatprep.subr.bf16.mxu0 0
        %2052 = vmatpush2.bf16.msra.mxu0 0
        %2053 = vmatprep.subr.bf16.mxu0 0
        %2054 = vmatpush2.bf16.msra.mxu0 0
        %2055 = vmatprep.subr.bf16.mxu0 0
        %2056 = vmatpush2.bf16.msra.mxu0 0
        %2057 = vmatprep.subr.bf16.mxu0 0
        %2058 = vmatpush2.bf16.msra.mxu0 0
        %2059 = vmatprep.subr.bf16.mxu0 0
        %2060 = vmatpush2.bf16.msra.mxu0 0
        %2061 = vmatprep.subr.bf16.mxu0 0
        %2062 = vmatpush2.bf16.msra.mxu0 0
        %2063 = vmatprep.subr.bf16.mxu0 0
        %2064 = vmatpush2.bf16.msra.mxu0 0
        %2065 = vmatprep.subr.bf16.mxu0 0
        %2066 = vmatpush2.bf16.msra.mxu0 0
        %2067 = vmatprep.mubr.bf16.mxu0 0
        %2068 = vmatmul.mubr.bf16.gmra.mxu0 %v2033
        %v2069 = vpop.f32.mrf.mxu0
        %v2070 = vadd.f32 0.0, %v2069
        %v2071 = vpop.f32.mrf.mxu0
        %v2072 = vpop.f32.mrf.mxu0
        %v2073 = vadd.f32 0.0, %v2072
        %v2074 = vpop.f32.mrf.mxu0
        %2075 = vdwg.mxu0
        %2076 = vrot.lane.b32.xlu0 %v1259, 64
        %v2077 = vpop.permute.xlu0 %2076
        %2078 = vrot.lane.b32.xlu0 %v1262, 64
        %v2079 = vpop.permute.xlu0 %2078
        %2080 = vrot.lane.b32.xlu0 %v1263, 64
        %v2081 = vpop.permute.xlu0 %2080
        %v2083 = vsel %vm1275, %v2077, 0
        %v2086 = vsel %vm1275, %v2079, 0
        %v2089 = vsel %vm1275, %v2081, 0
        %2091 = vmatprep.subr.bf16.mxu0 0
        %2092 = vmatpush1.bf16.xpose.msra.mxu0 0
        %2093 = vmatprep.subr.bf16.mxu0 0
        %2094 = vmatpush1.bf16.xpose.msra.mxu0 0
        %2095 = vmatprep.subr.bf16.mxu0 0
        %2096 = vmatpush1.bf16.xpose.msra.mxu0 0
        %2097 = vmatprep.subr.bf16.mxu0 0
        %2098 = vmatpush1.bf16.xpose.msra.mxu0 0
        %2099 = vmatprep.subr.bf16.mxu0 0
        %2100 = vmatpush1.bf16.xpose.msra.mxu0 0
        %2101 = vmatprep.subr.bf16.mxu0 0
        %2102 = vmatpush1.bf16.xpose.msra.mxu0 0
        %2103 = vmatprep.subr.bf16.mxu0 0
        %2104 = vmatpush1.bf16.xpose.msra.mxu0 %v2089
        %2105 = vmatprep.subr.bf16.mxu0 0
        %2106 = vmatpush1.bf16.xpose.msra.mxu0 %v2086
        %2107 = vmatprep.subr.bf16.mxu0 0
        %2108 = vmatpush2.bf16.xpose.msra.mxu0 0
        %2109 = vmatprep.subr.bf16.mxu0 0
        %2110 = vmatpush2.bf16.xpose.msra.mxu0 0
        %2111 = vmatprep.subr.bf16.mxu0 0
        %2112 = vmatpush2.bf16.xpose.msra.mxu0 0
        %2113 = vmatprep.subr.bf16.mxu0 0
        %2114 = vmatpush2.bf16.xpose.msra.mxu0 0
        %2115 = vmatprep.subr.bf16.mxu0 0
        %2116 = vmatpush2.bf16.xpose.msra.mxu0 0
        %2117 = vmatprep.subr.bf16.mxu0 0
        %2118 = vmatpush2.bf16.xpose.msra.mxu0 0
        %2119 = vmatprep.subr.bf16.mxu0 0
        %2120 = vmatpush2.bf16.xpose.msra.mxu0 0
        %2121 = vmatprep.subr.bf16.mxu0 0
        %2122 = vmatpush2.bf16.xpose.msra.mxu0 0
        %2123 = vmatprep.mubr.bf16.mxu0 0
        %2124 = vmatmul.mubr.bf16.gmra.mxu0 %v2083
        %v2125 = vpop.f32.mrf.mxu0
        %v2126 = vadd.f32 %v1823, %v2125
        %v2127 = vpop.f32.mrf.mxu0
        %v2128 = vpop.f32.mrf.mxu0
        %v2129 = vadd.f32 %v1823, %v2128
        %v2130 = vpop.f32.mrf.mxu0
        %2131 = vdwg.mxu0
        %v2132 = vsel %vm1275, %v2126, -inf
        %2133 = vmax.xlane.f32.xlu0 %v2132
        %v2134 = vpop.xlane.xlu0 %2133
        %v2135 = vsel %vm1275, %v2129, -inf
        %2136 = vmax.xlane.f32.xlu0 %v2135
        %v2137 = vpop.xlane.xlu0 %2136
        %v2138 = vsub.f32 %v2126, %v2134
        %v2139 = vsub.f32 %v2129, %v2137
        %v2140 = vmul.f32 %v2138, 1.442695
        %v2141 = vpow.pop %v2140
        %v2142 = vmul.f32 %v2139, 1.442695
        %v2143 = vpow.pop %v2142
        %v2144 = vsel %vm1275, %v2141, 0.0
        %2145 = vadd.xlane.f32.xlu0 %v2144
        %v2146 = vpop.xlane.xlu0 %2145
        %v2147 = vsel %vm1275, %v2143, 0.0
        %2148 = vadd.xlane.f32.xlu0 %v2147
        %v2149 = vpop.xlane.xlu0 %2148
        %v2150 = vrcp.pop %v2146
        %v2151 = vrcp.pop %v2149
        %v2152 = vmul.f32 %v2141, %v2150
        %v2153 = vmul.f32 %v2143, %v2151
        %v2154 = vpack.c.bf16 %v2153, %v2152
        %2155 = vrot.lane.b32.xlu0 %v1266, 64
        %v2156 = vpop.permute.xlu0 %2155
        %2157 = vrot.lane.b32.xlu0 %v1267, 64
        %v2158 = vpop.permute.xlu0 %2157
        %v2162 = vsel %vm1275, %v2154, 0
        %2164 = vmatprep.subr.bf16.mxu0 0
        %2165 = vmatpush1.bf16.msra.mxu0 0
        %2166 = vmatprep.subr.bf16.mxu0 0
        %2167 = vmatpush1.bf16.msra.mxu0 0
        %2168 = vmatprep.subr.bf16.mxu0 0
        %2169 = vmatpush1.bf16.msra.mxu0 0
        %2170 = vmatprep.subr.bf16.mxu0 0
        %2171 = vmatpush1.bf16.msra.mxu0 0
        %2172 = vmatprep.subr.bf16.mxu0 0
        %2173 = vmatpush1.bf16.msra.mxu0 0
        %2174 = vmatprep.subr.bf16.mxu0 0
        %2175 = vmatpush1.bf16.msra.mxu0 0
        %2176 = vmatprep.subr.bf16.mxu0 0
        %2177 = vmatpush1.bf16.msra.mxu0 %v2158
        %2178 = vmatprep.subr.bf16.mxu0 0
        %2179 = vmatpush1.bf16.msra.mxu0 %v2156
        %2180 = vmatprep.subr.bf16.mxu0 0
        %2181 = vmatpush2.bf16.msra.mxu0 0
        %2182 = vmatprep.subr.bf16.mxu0 0
        %2183 = vmatpush2.bf16.msra.mxu0 0
        %2184 = vmatprep.subr.bf16.mxu0 0
        %2185 = vmatpush2.bf16.msra.mxu0 0
        %2186 = vmatprep.subr.bf16.mxu0 0
        %2187 = vmatpush2.bf16.msra.mxu0 0
        %2188 = vmatprep.subr.bf16.mxu0 0
        %2189 = vmatpush2.bf16.msra.mxu0 0
        %2190 = vmatprep.subr.bf16.mxu0 0
        %2191 = vmatpush2.bf16.msra.mxu0 0
        %2192 = vmatprep.subr.bf16.mxu0 0
        %2193 = vmatpush2.bf16.msra.mxu0 0
        %2194 = vmatprep.subr.bf16.mxu0 0
        %2195 = vmatpush2.bf16.msra.mxu0 0
        %2196 = vmatprep.mubr.bf16.mxu0 0
        %2197 = vmatmul.mubr.bf16.gmra.mxu0 %v2162
        %v2198 = vpop.f32.mrf.mxu0
        %v2199 = vadd.f32 0.0, %v2198
        %v2200 = vpop.f32.mrf.mxu0
        %v2201 = vpop.f32.mrf.mxu0
        %v2202 = vadd.f32 0.0, %v2201
        %v2203 = vpop.f32.mrf.mxu0
        %2204 = vdwg.mxu0
        %2205 = vrot.lane.b32.xlu0 %v1259, 32
        %v2206 = vpop.permute.xlu0 %2205
        %2207 = vrot.lane.b32.xlu0 %v1262, 32
        %v2208 = vpop.permute.xlu0 %2207
        %2209 = vrot.lane.b32.xlu0 %v1263, 32
        %v2210 = vpop.permute.xlu0 %2209
        %v2212 = vsel %vm1275, %v2206, 0
        %v2215 = vsel %vm1275, %v2208, 0
        %v2218 = vsel %vm1275, %v2210, 0
        %2220 = vmatprep.subr.bf16.mxu0 0
        %2221 = vmatpush1.bf16.xpose.msra.mxu0 0
        %2222 = vmatprep.subr.bf16.mxu0 0
        %2223 = vmatpush1.bf16.xpose.msra.mxu0 0
        %2224 = vmatprep.subr.bf16.mxu0 0
        %2225 = vmatpush1.bf16.xpose.msra.mxu0 0
        %2226 = vmatprep.subr.bf16.mxu0 0
        %2227 = vmatpush1.bf16.xpose.msra.mxu0 0
        %2228 = vmatprep.subr.bf16.mxu0 0
        %2229 = vmatpush1.bf16.xpose.msra.mxu0 0
        %2230 = vmatprep.subr.bf16.mxu0 0
        %2231 = vmatpush1.bf16.xpose.msra.mxu0 0
        %2232 = vmatprep.subr.bf16.mxu0 0
        %2233 = vmatpush1.bf16.xpose.msra.mxu0 %v2218
        %2234 = vmatprep.subr.bf16.mxu0 0
        %2235 = vmatpush1.bf16.xpose.msra.mxu0 %v2215
        %2236 = vmatprep.subr.bf16.mxu0 0
        %2237 = vmatpush2.bf16.xpose.msra.mxu0 0
        %2238 = vmatprep.subr.bf16.mxu0 0
        %2239 = vmatpush2.bf16.xpose.msra.mxu0 0
        %2240 = vmatprep.subr.bf16.mxu0 0
        %2241 = vmatpush2.bf16.xpose.msra.mxu0 0
        %2242 = vmatprep.subr.bf16.mxu0 0
        %2243 = vmatpush2.bf16.xpose.msra.mxu0 0
        %2244 = vmatprep.subr.bf16.mxu0 0
        %2245 = vmatpush2.bf16.xpose.msra.mxu0 0
        %2246 = vmatprep.subr.bf16.mxu0 0
        %2247 = vmatpush2.bf16.xpose.msra.mxu0 0
        %2248 = vmatprep.subr.bf16.mxu0 0
        %2249 = vmatpush2.bf16.xpose.msra.mxu0 0
        %2250 = vmatprep.subr.bf16.mxu0 0
        %2251 = vmatpush2.bf16.xpose.msra.mxu0 0
        %2252 = vmatprep.mubr.bf16.mxu0 0
        %2253 = vmatmul.mubr.bf16.gmra.mxu0 %v2212
        %v2254 = vpop.f32.mrf.mxu0
        %v2255 = vadd.f32 %v1823, %v2254
        %v2256 = vpop.f32.mrf.mxu0
        %v2257 = vpop.f32.mrf.mxu0
        %v2258 = vadd.f32 %v1823, %v2257
        %v2259 = vpop.f32.mrf.mxu0
        %2260 = vdwg.mxu0
        %v2261 = vsel %vm1275, %v2255, -inf
        %2262 = vmax.xlane.f32.xlu0 %v2261
        %v2263 = vpop.xlane.xlu0 %2262
        %v2264 = vsel %vm1275, %v2258, -inf
        %2265 = vmax.xlane.f32.xlu0 %v2264
        %v2266 = vpop.xlane.xlu0 %2265
        %v2267 = vsub.f32 %v2255, %v2263
        %v2268 = vsub.f32 %v2258, %v2266
        %v2269 = vmul.f32 %v2267, 1.442695
        %v2270 = vpow.pop %v2269
        %v2271 = vmul.f32 %v2268, 1.442695
        %v2272 = vpow.pop %v2271
        %v2273 = vsel %vm1275, %v2270, 0.0
        %2274 = vadd.xlane.f32.xlu0 %v2273
        %v2275 = vpop.xlane.xlu0 %2274
        %v2276 = vsel %vm1275, %v2272, 0.0
        %2277 = vadd.xlane.f32.xlu0 %v2276
        %v2278 = vpop.xlane.xlu0 %2277
        %v2279 = vrcp.pop %v2275
        %v2280 = vrcp.pop %v2278
        %v2281 = vmul.f32 %v2270, %v2279
        %v2282 = vmul.f32 %v2272, %v2280
        %v2283 = vpack.c.bf16 %v2282, %v2281
        %2284 = vrot.lane.b32.xlu0 %v1266, 32
        %v2285 = vpop.permute.xlu0 %2284
        %2286 = vrot.lane.b32.xlu0 %v1267, 32
        %v2287 = vpop.permute.xlu0 %2286
        %v2291 = vsel %vm1275, %v2283, 0
        %2293 = vmatprep.subr.bf16.mxu0 0
        %2294 = vmatpush1.bf16.msra.mxu0 0
        %2295 = vmatprep.subr.bf16.mxu0 0
        %2296 = vmatpush1.bf16.msra.mxu0 0
        %2297 = vmatprep.subr.bf16.mxu0 0
        %2298 = vmatpush1.bf16.msra.mxu0 0
        %2299 = vmatprep.subr.bf16.mxu0 0
        %2300 = vmatpush1.bf16.msra.mxu0 0
        %2301 = vmatprep.subr.bf16.mxu0 0
        %2302 = vmatpush1.bf16.msra.mxu0 0
        %2303 = vmatprep.subr.bf16.mxu0 0
        %2304 = vmatpush1.bf16.msra.mxu0 0
        %2305 = vmatprep.subr.bf16.mxu0 0
        %2306 = vmatpush1.bf16.msra.mxu0 %v2287
        %2307 = vmatprep.subr.bf16.mxu0 0
        %2308 = vmatpush1.bf16.msra.mxu0 %v2285
        %2309 = vmatprep.subr.bf16.mxu0 0
        %2310 = vmatpush2.bf16.msra.mxu0 0
        %2311 = vmatprep.subr.bf16.mxu0 0
        %2312 = vmatpush2.bf16.msra.mxu0 0
        %2313 = vmatprep.subr.bf16.mxu0 0
        %2314 = vmatpush2.bf16.msra.mxu0 0
        %2315 = vmatprep.subr.bf16.mxu0 0
        %2316 = vmatpush2.bf16.msra.mxu0 0
        %2317 = vmatprep.subr.bf16.mxu0 0
        %2318 = vmatpush2.bf16.msra.mxu0 0
        %2319 = vmatprep.subr.bf16.mxu0 0
        %2320 = vmatpush2.bf16.msra.mxu0 0
        %2321 = vmatprep.subr.bf16.mxu0 0
        %2322 = vmatpush2.bf16.msra.mxu0 0
        %2323 = vmatprep.subr.bf16.mxu0 0
        %2324 = vmatpush2.bf16.msra.mxu0 0
        %2325 = vmatprep.mubr.bf16.mxu0 0
        %2326 = vmatmul.mubr.bf16.gmra.mxu0 %v2291
        %v2327 = vpop.f32.mrf.mxu0
        %v2328 = vadd.f32 0.0, %v2327
        %v2329 = vpop.f32.mrf.mxu0
        %v2330 = vpop.f32.mrf.mxu0
        %v2331 = vadd.f32 0.0, %v2330
        %v2332 = vpop.f32.mrf.mxu0
        %2333 = vdwg.mxu0
        %2336 = vrot.lane.b32.xlu0 %v2070, 32
        %v2337 = vpop.permute.xlu0 %2336
        %2338 = vrot.lane.b32.xlu0 %v2073, 32
        %v2339 = vpop.permute.xlu0 %2338
        %2344 = vrot.lane.b32.xlu0 %v2199, 64
        %v2345 = vpop.permute.xlu0 %2344
        %2346 = vrot.lane.b32.xlu0 %v2202, 64
        %v2347 = vpop.permute.xlu0 %2346
        %2352 = vrot.lane.b32.xlu0 %v2328, 96
        %v2353 = vpop.permute.xlu0 %2352
        %2354 = vrot.lane.b32.xlu0 %v2331, 96
        %v2355 = vpop.permute.xlu0 %2354
        %v2358 = vsel %vm1275, %v1936, %v2337
        %v2359 = vsel %vm1275, %v1939, %v2339
        %v2360 = vsel %vm1811, %v2358, %v2345
        %v2361 = vsel %vm1811, %v2359, %v2347
        %v2362 = vsel %vm1814, %v2360, %v2353
        %v2363 = vsel %vm1814, %v2361, %v2355
        %v2364 = vpack.c.bf16 %v1816, %v1815
        %v2365 = vpack.c.bf16 %v2363, %v2362
        %v2366 = vld [vmem:[#allocation13] sm:$0xf]
        %v2367 = vld [vmem:[#allocation13 + $0x4] sm:$0xf]
        %v2368 = vld [vmem:[#allocation13 + $0x8] sm:$0xf]
        %v2369 = vld [vmem:[#allocation13 + $0xc] sm:$0xf]
        %v2370 = vld [vmem:[#allocation13 + $0x10] sm:$0xf]
        %v2371 = vld [vmem:[#allocation13 + $0x14] sm:$0xf]
        %v2372 = vld [vmem:[#allocation13 + $0x18] sm:$0xf]
        %v2373 = vld [vmem:[#allocation13 + $0x1c] sm:$0xf]
        %v2374 = vld [vmem:[#allocation13 + $0x20] sm:$0xf]
        %v2375 = vld [vmem:[#allocation13 + $0x24] sm:$0xf]
        %v2376 = vld [vmem:[#allocation13 + $0x28] sm:$0xf]
        %v2377 = vld [vmem:[#allocation13 + $0x2c] sm:$0xf]
        %v2378 = vld [vmem:[#allocation13 + $0x30] sm:$0xf]
        %v2379 = vld [vmem:[#allocation13 + $0x34] sm:$0xf]
        %v2380 = vld [vmem:[#allocation13 + $0x38] sm:$0xf]
        %v2381 = vld [vmem:[#allocation13 + $0x3c] sm:$0xf]
        %v2382 = vld [vmem:[%s11] sm:$0x1]
        %v2384 = vlaneseq
        %v2385 = vshrl.u32 %v2384, 7
        %v2386 = vsub.s32 0, %v2385
        %v2387 = vrot.slane %v2382, %v2386
        %v2405 = vunpack.c.l.b16 %v2366
        %v2406 = vunpack.c.l.b16 %v2367
        %v2407 = vunpack.c.l.b16 %v2368
        %v2408 = vunpack.c.l.b16 %v2369
        %v2409 = vunpack.c.l.b16 %v2370
        %v2410 = vunpack.c.l.b16 %v2371
        %v2411 = vunpack.c.l.b16 %v2372
        %v2412 = vunpack.c.l.b16 %v2373
        %v2413 = vunpack.c.l.b16 %v2374
        %v2414 = vunpack.c.l.b16 %v2375
        %v2415 = vunpack.c.l.b16 %v2376
        %v2416 = vunpack.c.l.b16 %v2377
        %v2417 = vunpack.c.l.b16 %v2378
        %v2418 = vunpack.c.l.b16 %v2379
        %v2419 = vunpack.c.l.b16 %v2380
        %v2420 = vunpack.c.l.b16 %v2381
        %v2421 = vpack.c.b16 %v2406, %v2405
        %v2422 = vpack.c.b16 %v2408, %v2407
        %v2423 = vpack.c.b16 %v2410, %v2409
        %v2424 = vpack.c.b16 %v2412, %v2411
        %v2425 = vpack.c.b16 %v2414, %v2413
        %v2426 = vpack.c.b16 %v2416, %v2415
        %v2427 = vpack.c.b16 %v2418, %v2417
        %v2428 = vpack.c.b16 %v2420, %v2419
        %2437 = vmatprep.subr.bf16.mxu0 0
        %2438 = vmatpush1.bf16.msra.mxu0 %v2428
        %2439 = vmatprep.subr.bf16.mxu0 0
        %2440 = vmatpush1.bf16.msra.mxu0 %v2427
        %2441 = vmatprep.subr.bf16.mxu0 0
        %2442 = vmatpush1.bf16.msra.mxu0 %v2426
        %2443 = vmatprep.subr.bf16.mxu0 0
        %2444 = vmatpush1.bf16.msra.mxu0 %v2425
        %2445 = vmatprep.subr.bf16.mxu0 0
        %2446 = vmatpush1.bf16.msra.mxu0 %v2424
        %2447 = vmatprep.subr.bf16.mxu0 0
        %2448 = vmatpush1.bf16.msra.mxu0 %v2423
        %2449 = vmatprep.subr.bf16.mxu0 0
        %2450 = vmatpush1.bf16.msra.mxu0 %v2422
        %2451 = vmatprep.subr.bf16.mxu0 0
        %2452 = vmatpush1.bf16.msra.mxu0 %v2421
        %2453 = vmatprep.subr.bf16.mxu0 0
        %2454 = vmatpush2.bf16.msra.mxu0 0
        %2455 = vmatprep.subr.bf16.mxu0 0
        %2456 = vmatpush2.bf16.msra.mxu0 0
        %2457 = vmatprep.subr.bf16.mxu0 0
        %2458 = vmatpush2.bf16.msra.mxu0 0
        %2459 = vmatprep.subr.bf16.mxu0 0
        %2460 = vmatpush2.bf16.msra.mxu0 0
        %2461 = vmatprep.subr.bf16.mxu0 0
        %2462 = vmatpush2.bf16.msra.mxu0 0
        %2463 = vmatprep.subr.bf16.mxu0 0
        %2464 = vmatpush2.bf16.msra.mxu0 0
        %2465 = vmatprep.subr.bf16.mxu0 0
        %2466 = vmatpush2.bf16.msra.mxu0 0
        %2467 = vmatprep.subr.bf16.mxu0 0
        %2468 = vmatpush2.bf16.msra.mxu0 0
        %2469 = vmatprep.mubr.bf16.mxu0 0
        %2470 = vmatmul.mubr.bf16.gmra.mxu0 %v2364
        %v2471 = vpop.f32.mrf.mxu0
        %v2472 = vadd.f32 %v2387, %v2471
        %v2473 = vpop.f32.mrf.mxu0
        %v2474 = vpop.f32.mrf.mxu0
        %v2475 = vadd.f32 %v2387, %v2474
        %v2476 = vpop.f32.mrf.mxu0
        %2477 = vmatprep.mubr.bf16.mxu0 0
        %2478 = vmatmul.mubr.bf16.gmra.mxu0 %v2365
        %v2479 = vpop.f32.mrf.mxu0
        %v2480 = vadd.f32 %v2387, %v2479
        %v2481 = vpop.f32.mrf.mxu0
        %v2482 = vpop.f32.mrf.mxu0
        %v2483 = vadd.f32 %v2387, %v2482
        %v2484 = vpop.f32.mrf.mxu0
        %2485 = vdwg.mxu0
        %v2486 = vadd.f32 %v2472, %v836
        %v2487 = vadd.f32 %v2475, %v837
        %v2488 = vadd.f32 %v2480, %v838
        %v2489 = vadd.f32 %v2483, %v839
        %v2490 = vld [vmem:[%s12] sm:$0x1]
        %v2491 = vld [vmem:[%s13] sm:$0x1]
        %2492 = vadd.xlane.f32.xlu0 %v2486
        %v2493 = vpop.xlane.xlu0 %2492
        %2494 = vadd.xlane.f32.xlu0 %v2487
        %v2495 = vpop.xlane.xlu0 %2494
        %2496 = vadd.xlane.f32.xlu0 %v2488
        %v2497 = vpop.xlane.xlu0 %2496
        %2498 = vadd.xlane.f32.xlu0 %v2489
        %v2499 = vpop.xlane.xlu0 %2498
        %v2500 = vrcp.pop 128.0
        %v2501 = vmul.f32 %v2493, %v2500
        %v2502 = vmul.f32 %v2495, %v2500
        %v2503 = vmul.f32 %v2497, %v2500
        %v2504 = vmul.f32 %v2499, %v2500
        %v2505 = vsub.f32 %v2486, %v2501
        %v2506 = vsub.f32 %v2487, %v2502
        %v2507 = vsub.f32 %v2488, %v2503
        %v2508 = vsub.f32 %v2489, %v2504
        %v2509 = vmul.f32 %v2505, %v2505
        %v2510 = vmul.f32 %v2506, %v2506
        %v2511 = vmul.f32 %v2507, %v2507
        %v2512 = vmul.f32 %v2508, %v2508
        %2513 = vadd.xlane.f32.xlu0 %v2509
        %v2514 = vpop.xlane.xlu0 %2513
        %2515 = vadd.xlane.f32.xlu0 %v2510
        %v2516 = vpop.xlane.xlu0 %2515
        %2517 = vadd.xlane.f32.xlu0 %v2511
        %v2518 = vpop.xlane.xlu0 %2517
        %2519 = vadd.xlane.f32.xlu0 %v2512
        %v2520 = vpop.xlane.xlu0 %2519
        %v2521 = vmul.f32 %v2514, %v2500
        %v2522 = vmul.f32 %v2516, %v2500
        %v2523 = vmul.f32 %v2518, %v2500
        %v2524 = vmul.f32 %v2520, %v2500
        %v2525 = vadd.f32 %v2521, 1e-05
        %v2526 = vadd.f32 %v2522, 1e-05
        %v2527 = vadd.f32 %v2523, 1e-05
        %v2528 = vadd.f32 %v2524, 1e-05
        %v2529 = vrsqrt.pop %v2525
        %v2530 = vrsqrt.pop %v2526
        %v2531 = vrsqrt.pop %v2527
        %v2532 = vrsqrt.pop %v2528
        %v2533 = vmul.f32 %v2505, %v2529
        %v2534 = vmul.f32 %v2506, %v2530
        %v2535 = vmul.f32 %v2507, %v2531
        %v2536 = vmul.f32 %v2508, %v2532
        %v2538 = vlaneseq
        %v2539 = vshrl.u32 %v2538, 7
        %v2540 = vsub.s32 0, %v2539
        %v2541 = vrot.slane %v2490, %v2540
        %v2543 = vmul.f32 %v2533, %v2541
        %v2544 = vmul.f32 %v2534, %v2541
        %v2545 = vmul.f32 %v2535, %v2541
        %v2546 = vmul.f32 %v2536, %v2541
        %v2548 = vlaneseq
        %v2549 = vshrl.u32 %v2548, 7
        %v2550 = vsub.s32 0, %v2549
        %v2551 = vrot.slane %v2491, %v2550
        %v2553 = vadd.f32 %v2543, %v2551
        %v2554 = vadd.f32 %v2544, %v2551
        %v2555 = vadd.f32 %v2545, %v2551
        %v2556 = vadd.f32 %v2546, %v2551
        %v2557 = vpack.c.bf16 %v2554, %v2553
        %v2558 = vpack.c.bf16 %v2556, %v2555
        %v2559 = vld [vmem:[#allocation14] sm:$0xff]
        %v2560 = vld [vmem:[#allocation14 + $0x8] sm:$0xff]
        %v2561 = vld [vmem:[#allocation14 + $0x10] sm:$0xff]
        %v2562 = vld [vmem:[#allocation14 + $0x18] sm:$0xff]
        %v2563 = vld [vmem:[#allocation14 + $0x20] sm:$0xff]
        %v2564 = vld [vmem:[#allocation14 + $0x28] sm:$0xff]
        %v2565 = vld [vmem:[#allocation14 + $0x30] sm:$0xff]
        %v2566 = vld [vmem:[#allocation14 + $0x38] sm:$0xff]
        %v2567 = vld [vmem:[#allocation14 + $0x40] sm:$0xff]
        %v2568 = vld [vmem:[#allocation14 + $0x48] sm:$0xff]
        %v2569 = vld [vmem:[#allocation14 + $0x50] sm:$0xff]
        %v2570 = vld [vmem:[#allocation14 + $0x58] sm:$0xff]
        %v2571 = vld [vmem:[#allocation14 + $0x60] sm:$0xff]
        %v2572 = vld [vmem:[#allocation14 + $0x68] sm:$0xff]
        %v2573 = vld [vmem:[#allocation14 + $0x70] sm:$0xff]
        %v2574 = vld [vmem:[#allocation14 + $0x78] sm:$0xff]
        %v2575 = vld [vmem:[%s15] sm:$0x3]
        %v2577 = vlaneseq
        %v2578 = vshrl.u32 %v2577, 7
        %v2579 = vsub.s32 0, %v2578
        %v2580 = vrot.slane %v2575, %v2579
        %v2581 = vlaneseq
        %v2582 = vshrl.u32 %v2581, 7
        %v2583 = vsub.s32 1, %v2582
        %v2584 = vrot.slane %v2575, %v2583
        %v2603 = vunpack.c.l.b16 %v2559
        %v2604 = vunpack.c.h.b16 %v2559
        %v2605 = vunpack.c.l.b16 %v2560
        %v2606 = vunpack.c.h.b16 %v2560
        %v2607 = vunpack.c.l.b16 %v2561
        %v2608 = vunpack.c.h.b16 %v2561
        %v2609 = vunpack.c.l.b16 %v2562
        %v2610 = vunpack.c.h.b16 %v2562
        %v2611 = vunpack.c.l.b16 %v2563
        %v2612 = vunpack.c.h.b16 %v2563
        %v2613 = vunpack.c.l.b16 %v2564
        %v2614 = vunpack.c.h.b16 %v2564
        %v2615 = vunpack.c.l.b16 %v2565
        %v2616 = vunpack.c.h.b16 %v2565
        %v2617 = vunpack.c.l.b16 %v2566
        %v2618 = vunpack.c.h.b16 %v2566
        %v2619 = vunpack.c.l.b16 %v2567
        %v2620 = vunpack.c.h.b16 %v2567
        %v2621 = vunpack.c.l.b16 %v2568
        %v2622 = vunpack.c.h.b16 %v2568
        %v2623 = vunpack.c.l.b16 %v2569
        %v2624 = vunpack.c.h.b16 %v2569
        %v2625 = vunpack.c.l.b16 %v2570
        %v2626 = vunpack.c.h.b16 %v2570
        %v2627 = vunpack.c.l.b16 %v2571
        %v2628 = vunpack.c.h.b16 %v2571
        %v2629 = vunpack.c.l.b16 %v2572
        %v2630 = vunpack.c.h.b16 %v2572
        %v2631 = vunpack.c.l.b16 %v2573
        %v2632 = vunpack.c.h.b16 %v2573
        %v2633 = vunpack.c.l.b16 %v2574
        %v2634 = vunpack.c.h.b16 %v2574
        %v2635 = vpack.c.b16 %v2605, %v2603
        %v2636 = vpack.c.b16 %v2606, %v2604
        %v2637 = vpack.c.b16 %v2609, %v2607
        %v2638 = vpack.c.b16 %v2610, %v2608
        %v2639 = vpack.c.b16 %v2613, %v2611
        %v2640 = vpack.c.b16 %v2614, %v2612
        %v2641 = vpack.c.b16 %v2617, %v2615
        %v2642 = vpack.c.b16 %v2618, %v2616
        %v2643 = vpack.c.b16 %v2621, %v2619
        %v2644 = vpack.c.b16 %v2622, %v2620
        %v2645 = vpack.c.b16 %v2625, %v2623
        %v2646 = vpack.c.b16 %v2626, %v2624
        %v2647 = vpack.c.b16 %v2629, %v2627
        %v2648 = vpack.c.b16 %v2630, %v2628
        %v2649 = vpack.c.b16 %v2633, %v2631
        %v2650 = vpack.c.b16 %v2634, %v2632
        %2667 = vmatprep.subr.bf16.mxu0 %v2650
        %2668 = vmatpush1.bf16.msra.mxu0 %v2649
        %2669 = vmatprep.subr.bf16.mxu0 %v2648
        %2670 = vmatpush1.bf16.msra.mxu0 %v2647
        %2671 = vmatprep.subr.bf16.mxu0 %v2646
        %2672 = vmatpush1.bf16.msra.mxu0 %v2645
        %2673 = vmatprep.subr.bf16.mxu0 %v2644
        %2674 = vmatpush1.bf16.msra.mxu0 %v2643
        %2675 = vmatprep.subr.bf16.mxu0 %v2642
        %2676 = vmatpush1.bf16.msra.mxu0 %v2641
        %2677 = vmatprep.subr.bf16.mxu0 %v2640
        %2678 = vmatpush1.bf16.msra.mxu0 %v2639
        %2679 = vmatprep.subr.bf16.mxu0 %v2638
        %2680 = vmatpush1.bf16.msra.mxu0 %v2637
        %2681 = vmatprep.subr.bf16.mxu0 %v2636
        %2682 = vmatpush1.bf16.msra.mxu0 %v2635
        %2683 = vmatprep.subr.bf16.mxu0 0
        %2684 = vmatpush2.bf16.msra.mxu0 0
        %2685 = vmatprep.subr.bf16.mxu0 0
        %2686 = vmatpush2.bf16.msra.mxu0 0
        %2687 = vmatprep.subr.bf16.mxu0 0
        %2688 = vmatpush2.bf16.msra.mxu0 0
        %2689 = vmatprep.subr.bf16.mxu0 0
        %2690 = vmatpush2.bf16.msra.mxu0 0
        %2691 = vmatprep.subr.bf16.mxu0 0
        %2692 = vmatpush2.bf16.msra.mxu0 0
        %2693 = vmatprep.subr.bf16.mxu0 0
        %2694 = vmatpush2.bf16.msra.mxu0 0
        %2695 = vmatprep.subr.bf16.mxu0 0
        %2696 = vmatpush2.bf16.msra.mxu0 0
        %2697 = vmatprep.subr.bf16.mxu0 0
        %2698 = vmatpush2.bf16.msra.mxu0 0
        %2699 = vmatprep.mubr.bf16.mxu0 0
        %2700 = vmatmul.mubr.bf16.gmra.mxu0 %v2557
        %v2701 = vpop.f32.mrf.mxu0
        %v2702 = vadd.f32 %v2580, %v2701
        %v2703 = vpop.f32.mrf.mxu0
        %v2704 = vadd.f32 %v2584, %v2703
        %v2705 = vpop.f32.mrf.mxu0
        %v2706 = vadd.f32 %v2580, %v2705
        %v2707 = vpop.f32.mrf.mxu0
        %v2708 = vadd.f32 %v2584, %v2707
        %2709 = vmatprep.mubr.bf16.mxu0 0
        %2710 = vmatmul.mubr.bf16.gmra.mxu0 %v2558
        %v2711 = vpop.f32.mrf.mxu0
        %v2712 = vadd.f32 %v2580, %v2711
        %v2713 = vpop.f32.mrf.mxu0
        %v2714 = vadd.f32 %v2584, %v2713
        %v2715 = vpop.f32.mrf.mxu0
        %v2716 = vadd.f32 %v2580, %v2715
        %v2717 = vpop.f32.mrf.mxu0
        %v2718 = vadd.f32 %v2584, %v2717
        %2719 = vdwg.mxu0
        %v2720 = vmax.f32 %v2702, 0.0
        %v2721 = vmax.f32 %v2704, 0.0
        %v2722 = vmax.f32 %v2706, 0.0
        %v2723 = vmax.f32 %v2708, 0.0
        %v2724 = vmax.f32 %v2712, 0.0
        %v2725 = vmax.f32 %v2714, 0.0
        %v2726 = vmax.f32 %v2716, 0.0
        %v2727 = vmax.f32 %v2718, 0.0
        %v2728 = vpack.c.bf16 %v2722, %v2720
        %v2729 = vpack.c.bf16 %v2723, %v2721
        %v2730 = vpack.c.bf16 %v2726, %v2724
        %v2731 = vpack.c.bf16 %v2727, %v2725
        %v2732 = vld [vmem:[#allocation16] sm:$0xf]
        %v2733 = vld [vmem:[#allocation16 + $0x4] sm:$0xf]
        %v2734 = vld [vmem:[#allocation16 + $0x8] sm:$0xf]
        %v2735 = vld [vmem:[#allocation16 + $0xc] sm:$0xf]
        %v2736 = vld [vmem:[#allocation16 + $0x10] sm:$0xf]
        %v2737 = vld [vmem:[#allocation16 + $0x14] sm:$0xf]
        %v2738 = vld [vmem:[#allocation16 + $0x18] sm:$0xf]
        %v2739 = vld [vmem:[#allocation16 + $0x1c] sm:$0xf]
        %v2740 = vld [vmem:[#allocation16 + $0x20] sm:$0xf]
        %v2741 = vld [vmem:[#allocation16 + $0x24] sm:$0xf]
        %v2742 = vld [vmem:[#allocation16 + $0x28] sm:$0xf]
        %v2743 = vld [vmem:[#allocation16 + $0x2c] sm:$0xf]
        %v2744 = vld [vmem:[#allocation16 + $0x30] sm:$0xf]
        %v2745 = vld [vmem:[#allocation16 + $0x34] sm:$0xf]
        %v2746 = vld [vmem:[#allocation16 + $0x38] sm:$0xf]
        %v2747 = vld [vmem:[#allocation16 + $0x3c] sm:$0xf]
        %v2748 = vld [vmem:[#allocation16 + $0x40] sm:$0xf]
        %v2749 = vld [vmem:[#allocation16 + $0x44] sm:$0xf]
        %v2750 = vld [vmem:[#allocation16 + $0x48] sm:$0xf]
        %v2751 = vld [vmem:[#allocation16 + $0x4c] sm:$0xf]
        %v2752 = vld [vmem:[#allocation16 + $0x50] sm:$0xf]
        %v2753 = vld [vmem:[#allocation16 + $0x54] sm:$0xf]
        %v2754 = vld [vmem:[#allocation16 + $0x58] sm:$0xf]
        %v2755 = vld [vmem:[#allocation16 + $0x5c] sm:$0xf]
        %v2756 = vld [vmem:[#allocation16 + $0x60] sm:$0xf]
        %v2757 = vld [vmem:[#allocation16 + $0x64] sm:$0xf]
        %v2758 = vld [vmem:[#allocation16 + $0x68] sm:$0xf]
        %v2759 = vld [vmem:[#allocation16 + $0x6c] sm:$0xf]
        %v2760 = vld [vmem:[#allocation16 + $0x70] sm:$0xf]
        %v2761 = vld [vmem:[#allocation16 + $0x74] sm:$0xf]
        %v2762 = vld [vmem:[#allocation16 + $0x78] sm:$0xf]
        %v2763 = vld [vmem:[#allocation16 + $0x7c] sm:$0xf]
        %v2764 = vld [vmem:[%s17] sm:$0x1]
        %v2766 = vlaneseq
        %v2767 = vshrl.u32 %v2766, 7
        %v2768 = vsub.s32 0, %v2767
        %v2769 = vrot.slane %v2764, %v2768
        %v2803 = vunpack.c.l.b16 %v2732
        %v2804 = vunpack.c.l.b16 %v2733
        %v2805 = vunpack.c.l.b16 %v2734
        %v2806 = vunpack.c.l.b16 %v2735
        %v2807 = vunpack.c.l.b16 %v2736
        %v2808 = vunpack.c.l.b16 %v2737
        %v2809 = vunpack.c.l.b16 %v2738
        %v2810 = vunpack.c.l.b16 %v2739
        %v2811 = vunpack.c.l.b16 %v2740
        %v2812 = vunpack.c.l.b16 %v2741
        %v2813 = vunpack.c.l.b16 %v2742
        %v2814 = vunpack.c.l.b16 %v2743
        %v2815 = vunpack.c.l.b16 %v2744
        %v2816 = vunpack.c.l.b16 %v2745
        %v2817 = vunpack.c.l.b16 %v2746
        %v2818 = vunpack.c.l.b16 %v2747
        %v2819 = vunpack.c.l.b16 %v2748
        %v2820 = vunpack.c.l.b16 %v2749
        %v2821 = vunpack.c.l.b16 %v2750
        %v2822 = vunpack.c.l.b16 %v2751
        %v2823 = vunpack.c.l.b16 %v2752
        %v2824 = vunpack.c.l.b16 %v2753
        %v2825 = vunpack.c.l.b16 %v2754
        %v2826 = vunpack.c.l.b16 %v2755
        %v2827 = vunpack.c.l.b16 %v2756
        %v2828 = vunpack.c.l.b16 %v2757
        %v2829 = vunpack.c.l.b16 %v2758
        %v2830 = vunpack.c.l.b16 %v2759
        %v2831 = vunpack.c.l.b16 %v2760
        %v2832 = vunpack.c.l.b16 %v2761
        %v2833 = vunpack.c.l.b16 %v2762
        %v2834 = vunpack.c.l.b16 %v2763
        %v2835 = vpack.c.b16 %v2804, %v2803
        %v2836 = vpack.c.b16 %v2806, %v2805
        %v2837 = vpack.c.b16 %v2808, %v2807
        %v2838 = vpack.c.b16 %v2810, %v2809
        %v2839 = vpack.c.b16 %v2812, %v2811
        %v2840 = vpack.c.b16 %v2814, %v2813
        %v2841 = vpack.c.b16 %v2816, %v2815
        %v2842 = vpack.c.b16 %v2818, %v2817
        %v2843 = vpack.c.b16 %v2820, %v2819
        %v2844 = vpack.c.b16 %v2822, %v2821
        %v2845 = vpack.c.b16 %v2824, %v2823
        %v2846 = vpack.c.b16 %v2826, %v2825
        %v2847 = vpack.c.b16 %v2828, %v2827
        %v2848 = vpack.c.b16 %v2830, %v2829
        %v2849 = vpack.c.b16 %v2832, %v2831
        %v2850 = vpack.c.b16 %v2834, %v2833
        %2867 = vmatprep.subr.bf16.mxu0 0
        %2868 = vmatpush1.bf16.msra.mxu0 %v2842
        %2869 = vmatprep.subr.bf16.mxu0 0
        %2870 = vmatpush1.bf16.msra.mxu0 %v2841
        %2871 = vmatprep.subr.bf16.mxu0 0
        %2872 = vmatpush1.bf16.msra.mxu0 %v2840
        %2873 = vmatprep.subr.bf16.mxu0 0
        %2874 = vmatpush1.bf16.msra.mxu0 %v2839
        %2875 = vmatprep.subr.bf16.mxu0 0
        %2876 = vmatpush1.bf16.msra.mxu0 %v2838
        %2877 = vmatprep.subr.bf16.mxu0 0
        %2878 = vmatpush1.bf16.msra.mxu0 %v2837
        %2879 = vmatprep.subr.bf16.mxu0 0
        %2880 = vmatpush1.bf16.msra.mxu0 %v2836
        %2881 = vmatprep.subr.bf16.mxu0 0
        %2882 = vmatpush1.bf16.msra.mxu0 %v2835
        %2883 = vmatprep.subr.bf16.mxu0 0
        %2884 = vmatpush2.bf16.msra.mxu0 %v2850
        %2885 = vmatprep.subr.bf16.mxu0 0
        %2886 = vmatpush2.bf16.msra.mxu0 %v2849
        %2887 = vmatprep.subr.bf16.mxu0 0
        %2888 = vmatpush2.bf16.msra.mxu0 %v2848
        %2889 = vmatprep.subr.bf16.mxu0 0
        %2890 = vmatpush2.bf16.msra.mxu0 %v2847
        %2891 = vmatprep.subr.bf16.mxu0 0
        %2892 = vmatpush2.bf16.msra.mxu0 %v2846
        %2893 = vmatprep.subr.bf16.mxu0 0
        %2894 = vmatpush2.bf16.msra.mxu0 %v2845
        %2895 = vmatprep.subr.bf16.mxu0 0
        %2896 = vmatpush2.bf16.msra.mxu0 %v2844
        %2897 = vmatprep.subr.bf16.mxu0 0
        %2898 = vmatpush2.bf16.msra.mxu0 %v2843
        %2899 = vmatprep.mubr.bf16.mxu0 %v2729
        %2900 = vmatmul.mubr.bf16.gmra.mxu0 %v2728
        %v2901 = vpop.f32.mrf.mxu0
        %v2902 = vadd.f32 %v2769, %v2901
        %v2903 = vpop.f32.mrf.mxu0
        %v2904 = vpop.f32.mrf.mxu0
        %v2905 = vadd.f32 %v2769, %v2904
        %v2906 = vpop.f32.mrf.mxu0
        %2907 = vmatprep.mubr.bf16.mxu0 %v2731
        %2908 = vmatmul.mubr.bf16.gmra.mxu0 %v2730
        %v2909 = vpop.f32.mrf.mxu0
        %v2910 = vadd.f32 %v2769, %v2909
        %v2911 = vpop.f32.mrf.mxu0
        %v2912 = vpop.f32.mrf.mxu0
        %v2913 = vadd.f32 %v2769, %v2912
        %v2914 = vpop.f32.mrf.mxu0
        %2915 = vdwg.mxu0
        %v2916 = vadd.f32 %v2553, %v2902
        %v2917 = vadd.f32 %v2554, %v2905
        %v2918 = vadd.f32 %v2555, %v2910
        %v2919 = vadd.f32 %v2556, %v2913
        %v2920 = vld [vmem:[%s18] sm:$0x1]
        %v2921 = vld [vmem:[%s19] sm:$0x1]
        %2922 = vadd.xlane.f32.xlu0 %v2916
        %v2923 = vpop.xlane.xlu0 %2922
        %2924 = vadd.xlane.f32.xlu0 %v2917
        %v2925 = vpop.xlane.xlu0 %2924
        %2926 = vadd.xlane.f32.xlu0 %v2918
        %v2927 = vpop.xlane.xlu0 %2926
        %2928 = vadd.xlane.f32.xlu0 %v2919
        %v2929 = vpop.xlane.xlu0 %2928
        %v2930 = vmul.f32 %v2923, %v2500
        %v2931 = vmul.f32 %v2925, %v2500
        %v2932 = vmul.f32 %v2927, %v2500
        %v2933 = vmul.f32 %v2929, %v2500
        %v2934 = vsub.f32 %v2916, %v2930
        %v2935 = vsub.f32 %v2917, %v2931
        %v2936 = vsub.f32 %v2918, %v2932
        %v2937 = vsub.f32 %v2919, %v2933
        %v2938 = vmul.f32 %v2934, %v2934
        %v2939 = vmul.f32 %v2935, %v2935
        %v2940 = vmul.f32 %v2936, %v2936
        %v2941 = vmul.f32 %v2937, %v2937
        %2942 = vadd.xlane.f32.xlu0 %v2938
        %v2943 = vpop.xlane.xlu0 %2942
        %2944 = vadd.xlane.f32.xlu0 %v2939
        %v2945 = vpop.xlane.xlu0 %2944
        %2946 = vadd.xlane.f32.xlu0 %v2940
        %v2947 = vpop.xlane.xlu0 %2946
        %2948 = vadd.xlane.f32.xlu0 %v2941
        %v2949 = vpop.xlane.xlu0 %2948
        %v2950 = vmul.f32 %v2943, %v2500
        %v2951 = vmul.f32 %v2945, %v2500
        %v2952 = vmul.f32 %v2947, %v2500
        %v2953 = vmul.f32 %v2949, %v2500
        %v2954 = vadd.f32 %v2950, 1e-05
        %v2955 = vadd.f32 %v2951, 1e-05
        %v2956 = vadd.f32 %v2952, 1e-05
        %v2957 = vadd.f32 %v2953, 1e-05
        %v2958 = vrsqrt.pop %v2954
        %v2959 = vrsqrt.pop %v2955
        %v2960 = vrsqrt.pop %v2956
        %v2961 = vrsqrt.pop %v2957
        %v2962 = vmul.f32 %v2934, %v2958
        %v2963 = vmul.f32 %v2935, %v2959
        %v2964 = vmul.f32 %v2936, %v2960
        %v2965 = vmul.f32 %v2937, %v2961
        %v2967 = vlaneseq
        %v2968 = vshrl.u32 %v2967, 7
        %v2969 = vsub.s32 0, %v2968
        %v2970 = vrot.slane %v2920, %v2969
        %v2972 = vmul.f32 %v2962, %v2970
        %v2973 = vmul.f32 %v2963, %v2970
        %v2974 = vmul.f32 %v2964, %v2970
        %v2975 = vmul.f32 %v2965, %v2970
        %v2977 = vlaneseq
        %v2978 = vshrl.u32 %v2977, 7
        %v2979 = vsub.s32 0, %v2978
        %v2980 = vrot.slane %v2921, %v2979
        %v2982 = vadd.f32 %v2972, %v2980
        %v2983 = vadd.f32 %v2973, %v2980
        %v2984 = vadd.f32 %v2974, %v2980
        %v2985 = vadd.f32 %v2975, %v2980
        %2986 = vst [vmem:[%s825] sm:$0xff] %v2982
        %2987 = vst [vmem:[%s825 + $0x8] sm:$0xff] %v2983
        %2988 = vst [vmem:[%s825 + $0x10] sm:$0xff] %v2984
        %2989 = vst [vmem:[%s825 + $0x18] sm:$0xff] %v2985
        %s2990 = sand.u32 %s491, 1
        %s2991 = scalar_lea.sflag [#allocation4], %s2990
        %s2992 = sand.u32 %s491, 1
        %s2993 = smul.addr %s2992, 32
        %s2994 = scalar_lea.vmem [#allocation17], %s2993
        // Predicated region
        $region137: #{tpu_custom_call.1} parent=99 // pred_check
          %p2995 = pneg %p501
        $region138: #{tpu_custom_call.1} parent=99 // pred_check_branch
          %2997 = sbr.rel (%p2995) target = $region140
        $region139: #{tpu_custom_call.1} parent=99 // pred_region
          %s2998 = smul.u32 4, %s43
          %s3000 = ssub.s32 512, 512
          %3001 = vsyncadd %s2991, %s3000
          %s3002 = smul.addr %s2998, 128
          %s3003 = scalar_lea.hbm %s20, %s3002
          %s3004 = sshll.u32 %s2994, 4
          %s3005 = int_to_ptr.vmem [resolvable:$true] %s3004
          %3010 = dma.vmem_to_hbm [thread:$0]  %s3005, 512, %s3003, %s2991, 128, 128, 8
        $region140: #{tpu_custom_call.1} parent=99 // pred_fallthru
          _
      $region100: #{tpu_custom_call.1} parent=5 // pred_fallthru
        _
      %p3011 = scmp.le.s32.totalorder 2, %s38
      // Predicated region
      $region141: #{tpu_custom_call.1} parent=5 // pred_check
        %p3012 = pneg %p3011
      $region142: #{tpu_custom_call.1} parent=5 // pred_check_branch
        %3014 = sbr.rel (%p3012) target = $region144
      $region143: #{tpu_custom_call.1} parent=5 // pred_region
        %s3015 = ssub.s32 %s38, 2
        // Predicated region
        $region145: #{tpu_custom_call.1} parent=143 // pred_check
          %p3016 = pneg %p507
        $region146: #{tpu_custom_call.1} parent=143 // pred_check_branch
          %3018 = sbr.rel (%p3016) target = $region148
        $region147: #{tpu_custom_call.1} parent=143 // pred_region
          %s3019 = sand.u32 %s492, 1
          %s3020 = scalar_lea.sflag [#allocation4], %s3019
          %s3021 = sand.u32 %s492, 1
          %s3022 = smul.addr %s3021, 32
          %s3023 = scalar_lea.vmem [#allocation17], %s3022
          %3024 = dma.done %s3020, 512
        $region148: #{tpu_custom_call.1} parent=143 // pred_fallthru
          _
      $region144: #{tpu_custom_call.1} parent=5 // pred_fallthru
        _
    $region6: #{tpu_custom_call.1} parent=1 // loop_footer
      %s42 = sadd.s32 1, %s38
    $region7: #{tpu_custom_call.1} parent=1 // loop_footer_branch
      %37 = sbr.rel target = $region3
    $region8: #{tpu_custom_call.1} parent=1 // loop_exit
      _
    %3025 = vsyncpa [#allocation3], 1
    %s3026 = scalar_lea.sflag [#allocation3], 1
    %3027 = vsyncpa %s3026, 1
    %3028 = vsyncpa [#allocation6], 1
    %s3029 = scalar_lea.sflag [#allocation6], 1
    %3030 = vsyncpa %s3029, 1
    %3031 = vsyncpa [#allocation9], 1
    %3032 = vsyncpa [#allocation12], 1
    %3033 = vsyncpa [#allocation15], 1
    %3034 = vsyncpa [#allocation4], 1
    %s3035 = scalar_lea.sflag [#allocation4], 1
    %3036 = vsyncpa %s3035, 1

</llo_original>
